<compile_context>
chip_gen: v7x
topology: tpu7x:2x2x1
jax: 0.10.0
libtpu: 0.0.40
codegen_flags: <defaults>
</compile_context>

<pallas_src>
import math
from functools import partial

import jax
import jax.numpy as jnp
from jax.experimental import pallas as pl
from jax.experimental.pallas import tpu as pltpu


# ---------------------------------------------------------------------------
# helpers
# ---------------------------------------------------------------------------
def _layer_norm(x, w, b, eps=1e-5):
    # x: (R, E); w, b broadcastable (1, E) / (E,)
    mu = jnp.mean(x, axis=-1, keepdims=True)
    var = jnp.mean(jnp.square(x - mu), axis=-1, keepdims=True)
    return (x - mu) * jax.lax.rsqrt(var + eps) * w + b


# ---------------------------------------------------------------------------
# fused forward kernel (one grid step == one independent (B, T) window)
# ---------------------------------------------------------------------------
def fused_forward_kernel(raw_ref, emb_ref, cproj_ref, qkvw_ref, qkvb_ref,
                         woh_ref, w1_ref, w2_ref, evec_ref, b1_ref,
                         bias_ref, decw_ref, dsel_ref, rmat_ref, gmat_ref,
                         decb_ref, out_ref, *, T, nhead, n_layers):
    f32 = jnp.float32
    bf16 = jnp.bfloat16

    raw = raw_ref[0]                       # (NS, 9), rows b-major: r = b*T + t
    NS = raw.shape[0]
    K, E = emb_ref.shape                   # K = 25 + T multi-hot classes
    F = w1_ref.shape[2]
    dh = E // nhead
    scale = 1.0 / math.sqrt(dh)

    # per-row t index (float arithmetic only; only needed for positional class)
    r_i = jax.lax.broadcasted_iota(jnp.int32, (NS, 1), 0).astype(f32)
    t_row = r_i - T * jnp.floor(r_i / T)

    # ---- TimeEmbedding + PositionalEmbedding as one multi-hot matmul plus a
    #      continuous-feature projection (no lane-offset concat) ----
    year_c = raw[:, 5:6] - 2017.0                           # rows 0:6 (month table
                                                            # used for year: ref bug)
    m = raw[:, 6:7]
    # month map {9,10,11,12,1,2} -> {0..5}
    # TODO(synk): out-of-range months map arithmetically instead of raising
    # KeyError like the PyTorch dict lookup would.
    month_c = jnp.where(m >= 8.5, m - 9.0, m + 3.0) + 6.0   # rows 6:12
    dow_c = raw[:, 8:9] + 12.0                              # rows 12:17
    hour_c = (raw[:, 7:8] - 9.0) + 17.0                     # rows 17:25
    pos_c = t_row + 25.0                                    # rows 25:25+T
    cls = jax.lax.broadcasted_iota(jnp.int32, (NS, K), 1).astype(f32)
    hot = ((cls == year_c) | (cls == month_c) | (cls == dow_c)
           | (cls == hour_c) | (cls == pos_c)).astype(bf16)             # exact 0/1
    x = (jnp.dot(hot, emb_ref[...], preferred_element_type=f32)
         + jnp.dot(raw.astype(bf16), cproj_ref[...],
                   preferred_element_type=f32))                          # (NS, E) f32

    bias = bias_ref[...]                   # (NS, NS) additive mask, host-built f32

    # ---- encoder stack (post-norm, ReLU FFN), statically unrolled ----
    # TODO(synk): for large n_layers switch to lax.fori_loop / a layer grid axis
    # to bound live ranges (forward-looking; L=2 here).
    for l in range(n_layers):
        xb = x.astype(bf16)
        attn = None
        for h in range(nhead):             # static head loop, lane-0-aligned operands
            base = (l * nhead + h) * 3
            q = jnp.dot(xb, qkvw_ref[base + 0], preferred_element_type=f32) \
                + qkvb_ref[base + 0]
            k = jnp.dot(xb, qkvw_ref[base + 1], preferred_element_type=f32) \
                + qkvb_ref[base + 1]
            v = jnp.dot(xb, qkvw_ref[base + 2], preferred_element_type=f32) \
                + qkvb_ref[base + 2]
            s = jax.lax.dot_general(q.astype(bf16), k.astype(bf16),
                                    (((1,), (1,)), ((), ())),
                                    preferred_element_type=f32) * scale + bias
            s = s - jnp.max(s, axis=-1, keepdims=True)
            p = jnp.exp(s)
            p = p * pl.reciprocal(jnp.sum(p, axis=-1, keepdims=True), approx=False)
            head = jnp.dot(p.astype(bf16), v.astype(bf16),
                           preferred_element_type=f32)                   # (NS, dh)
            contrib = jnp.dot(head.astype(bf16), woh_ref[l * nhead + h],
                              preferred_element_type=f32)                # (NS, E)
            attn = contrib if attn is None else attn + contrib
        attn = attn + evec_ref[l * 6 + 0]                                # + bo
        x = _layer_norm(x + attn, evec_ref[l * 6 + 1], evec_ref[l * 6 + 2])
        h1 = jnp.maximum(jnp.dot(x.astype(bf16), w1_ref[l],
                                 preferred_element_type=f32) + b1_ref[l], 0.0)
        h2 = jnp.dot(h1.astype(bf16), w2_ref[l],
                     preferred_element_type=f32) + evec_ref[l * 6 + 5]   # + b2
        x = _layer_norm(x + h2, evec_ref[l * 6 + 3], evec_ref[l * 6 + 4])

    # ---- decoder Linear(T*E -> O) on view(B, -1) via masked matmuls (all masks
    #      precomputed host-side), avoiding the tile-crossing (B, T*E) reshape ----
    praw = jnp.dot(x.astype(bf16), decw_ref[...],
                   preferred_element_type=f32)                           # (NS, T*O)
    psel = praw * dsel_ref[...]                                          # keep t'==t(r)
    rows = jnp.dot(psel.astype(bf16), rmat_ref[...],
                   preferred_element_type=f32)                           # (NS, O)
    outv = jnp.dot(gmat_ref[...], rows.astype(bf16),
                   preferred_element_type=f32) + decb_ref[...]           # (B, O)
    out_ref[0] = outv.astype(out_ref.dtype)


# ---------------------------------------------------------------------------
# wrapper: one pallas_call, leading "parallel" grid axis over windows
# ---------------------------------------------------------------------------
def transformer_forward(raw, p, *, nhead, n_layers):
    squeeze = False
    if raw.ndim == 3:                      # single window -> add W=1 axis
        raw = raw[None]
        squeeze = True
    W, B, T, C = raw.shape
    NS = B * T
    O = p['dec_b2'].shape[1]
    raw3 = raw.reshape(W, NS, C)           # row-major flatten: free

    # static masks, hoisted out of the kernel (constants of B, T, O)
    tmod = jnp.arange(NS, dtype=jnp.int32) % T
    attn_bias = jnp.where(tmod[:, None] == tmod[None, :], 0.0, -1e30
                          ).astype(jnp.float32)                          # (NS, NS)
    col_t = jnp.arange(T * O, dtype=jnp.int32) // O
    dec_sel = (tmod[:, None] == col_t[None, :]).astype(jnp.float32)      # (NS, T*O)
    rmat = (jnp.arange(T * O, dtype=jnp.int32)[:, None] % O
            == jnp.arange(O, dtype=jnp.int32)[None, :]).astype(jnp.bfloat16)
    gmat = (jnp.arange(NS, dtype=jnp.int32)[None, :] // T
            == jnp.arange(B, dtype=jnp.int32)[:, None]).astype(jnp.bfloat16)

    args = (raw3, p['emb_wide'], p['cont_proj'], p['qkv_w'], p['qkv_b'], p['wo_h'],
            p['w1_t'], p['w2_t'], p['evec'], p['b1v'], attn_bias,
            p['dec_w_exp'], dec_sel, rmat, gmat, p['dec_b2'])

    def _full(a):                          # whole-array block, same for every window
        nd = a.ndim
        return pl.BlockSpec(a.shape, lambda w, _nd=nd: (0,) * _nd)

    in_specs = [pl.BlockSpec((1, NS, C), lambda w: (w, 0, 0))]
    in_specs += [_full(a) for a in args[1:]]

    # TODO(synk): for much larger B*T, switch to t-major block-diagonal attention
    # (and set vmem_limit_bytes) before the (NS,NS) score matrix outgrows VMEM.
    out = pl.pallas_call(
        partial(fused_forward_kernel, T=T, nhead=nhead, n_layers=n_layers),
        grid=(W,),
        in_specs=in_specs,
        out_specs=pl.BlockSpec((1, B, O), lambda w: (w, 0, 0)),
        out_shape=jax.ShapeDtypeStruct((W, B, O), jnp.float32),
        compiler_params=pltpu.CompilerParams(dimension_semantics=("parallel",)),
    )(*args)
    return out[0] if squeeze else out


# ---------------------------------------------------------------------------
# parameter init: unpacked (for the pure-JAX reference) + packed kernel params
# ---------------------------------------------------------------------------
def init_params(key, *, d_embed, d_inputs, d_feed, n_layers, seq_length,
                d_outputs, nhead):
    E, F, L, T, O = d_inputs, d_feed, n_layers, seq_length, d_outputs
    assert E == 5 + 4 * d_embed + 1
    dh = E // nhead
    assert dh * nhead == E
    keys = jax.random.split(key, 16)

    def u(k, shape, s=0.1):
        return jax.random.uniform(k, shape, jnp.float32, minval=-s, maxval=s)

    p = {}
    # embedding tables (year table allocated by the module but unused: reference bug)
    p['month_embed'] = u(keys[1], (6, d_embed))
    p['dow_embed'] = u(keys[2], (5, d_embed))
    p['hour_embed'] = u(keys[3], (8, d_embed))
    p['pos_embed'] = u(keys[4], (T, 1))
    # encoder layers (PyTorch (out, in) layout)
    p['wq'] = u(keys[5], (L, E, E));  p['wk'] = u(keys[6], (L, E, E))
    p['wv'] = u(keys[7], (L, E, E));  p['wo'] = u(keys[8], (L, E, E))
    p['bq'] = jnp.zeros((L, E), jnp.float32)
    p['bk'] = jnp.zeros((L, E), jnp.float32)
    p['bv'] = jnp.zeros((L, E), jnp.float32)
    p['bo'] = jnp.zeros((L, E), jnp.float32)
    p['ln1w'] = jnp.ones((L, E), jnp.float32); p['ln1b'] = jnp.zeros((L, E), jnp.float32)
    p['w1'] = u(keys[9], (L, F, E));  p['b1'] = u(keys[10], (L, F))
    p['w2'] = u(keys[11], (L, E, F)); p['b2'] = u(keys[12], (L, E))
    p['ln2w'] = jnp.ones((L, E), jnp.float32); p['ln2b'] = jnp.zeros((L, E), jnp.float32)
    # decoder Linear(T*E, O)
    p['dec_w'] = u(keys[13], (O, T * E), 0.05)
    p['dec_b'] = jnp.zeros((O,), jnp.float32)

    # ---------------- packed kernel-side params ----------------
    bf16 = jnp.bfloat16
    K = 25 + T
    # widened block-diagonal embedding/positional table: columns 5:E, so
    # x = hot @ emb_wide + raw @ cont_proj needs no lane-shifting concat.
    emb_wide = jnp.zeros((K, E), jnp.float32)
    c0 = 5
    emb_wide = emb_wide.at[0:6, c0:c0 + d_embed].set(p['month_embed'])       # year (bug)
    emb_wide = emb_wide.at[6:12, c0 + d_embed:c0 + 2 * d_embed].set(p['month_embed'])
    emb_wide = emb_wide.at[12:17, c0 + 2 * d_embed:c0 + 3 * d_embed].set(p['dow_embed'])
    emb_wide = emb_wide.at[17:25, c0 + 3 * d_embed:c0 + 4 * d_embed].set(p['hour_embed'])
    emb_wide = emb_wide.at[25:25 + T, E - 1:E].set(p['pos_embed'])
    p['emb_wide'] = emb_wide.astype(bf16)
    cont_proj = jnp.zeros((9, E), jnp.float32)
    cont_proj = cont_proj.at[jnp.arange(5), jnp.arange(5)].set(1.0)
    p['cont_proj'] = cont_proj.astype(bf16)

    # per-head, lane-0-aligned Q/K/V weights & biases
    def head_w(w):      # (L, E_out, E_in) -> (L, nhead, E_in, dh)
        return w.reshape(L, nhead, dh, E).transpose(0, 1, 3, 2)
    qkv_w = jnp.stack([head_w(p['wq']), head_w(p['wk']), head_w(p['wv'])], axis=2)
    p['qkv_w'] = qkv_w.reshape(L * nhead * 3, E, dh).astype(bf16)
    def head_b(b):      # (L, E) -> (L, nhead, dh)
        return b.reshape(L, nhead, dh)
    qkv_b = jnp.stack([head_b(p['bq']), head_b(p['bk']), head_b(p['bv'])], axis=2)
    p['qkv_b'] = qkv_b.reshape(L * nhead * 3, 1, dh)
    # per-head out-projection: head_h @ wo_h, wo_h = wo[:, :, h*dh:(h+1)*dh].T
    wo_h = p['wo'].reshape(L, E, nhead, dh).transpose(0, 2, 3, 1)        # (L,nh,dh,E)
    p['wo_h'] = wo_h.reshape(L * nhead, dh, E).astype(bf16)
    # FFN weights (in, out) layout
    p['w1_t'] = p['w1'].transpose(0, 2, 1).astype(bf16)                  # (L, E, F)
    p['w2_t'] = p['w2'].transpose(0, 2, 1).astype(bf16)                  # (L, F, E)
    # per-layer E-wide vectors, each lane-0-aligned via leading-dim indexing:
    # order per layer = [bo, ln1w, ln1b, ln2w, ln2b, b2]
    evec = jnp.stack([p['bo'], p['ln1w'], p['ln1b'],
                      p['ln2w'], p['ln2b'], p['b2']], axis=1)            # (L, 6, E)
    p['evec'] = evec.reshape(L * 6, 1, E)
    p['b1v'] = p['b1'].reshape(L, 1, F)
    # decoder weight expanded to (E, T*O) with column c = t*O + o
    p['dec_w_exp'] = (p['dec_w'].reshape(O, T, E).transpose(2, 1, 0)
                      .reshape(E, T * O).astype(bf16))
    p['dec_b2'] = p['dec_b'][None, :]
    return p


# ---------------------------------------------------------------------------
# pure-JAX reference (mirrors the PyTorch math) for a correctness check
# ---------------------------------------------------------------------------
_HI = jax.lax.Precision.HIGHEST


def reference_forward(raw, p, *, n_layers, nhead):
    B, T, _ = raw.shape
    cont = raw[:, :, 0:5]
    year_idx = (raw[:, :, 5] - 2017.0).astype(jnp.int32)
    m = raw[:, :, 6]
    month_idx = jnp.where(m >= 9, m - 9.0, m + 3.0).astype(jnp.int32)
    hour_idx = (raw[:, :, 7] - 9.0).astype(jnp.int32)
    dow_idx = raw[:, :, 8].astype(jnp.int32)
    year_e = p['month_embed'][year_idx]               # reference bug reproduced
    month_e = p['month_embed'][month_idx]
    dow_e = p['dow_embed'][dow_idx]
    hour_e = p['hour_embed'][hour_idx]
    pos = jnp.broadcast_to(p['pos_embed'][None, :, :], (B, T, 1))
    x = jnp.concatenate([cont, year_e, month_e, dow_e, hour_e, pos], axis=-1)
    E = x.shape[-1]
    dh = E // nhead
    scale = 1.0 / math.sqrt(dh)

    def lin(v, w, b):
        return jnp.einsum('...i,oi->...o', v, w, precision=_HI) + b

    for l in range(n_layers):
        q = lin(x, p['wq'][l], p['bq'][l])
        k = lin(x, p['wk'][l], p['bk'][l])
        v = lin(x, p['wv'][l], p['bv'][l])
        qh = q.reshape(B, T, nhead, dh)
        kh = k.reshape(B, T, nhead, dh)
        vh = v.reshape(B, T, nhead, dh)
        s = jnp.einsum('bthd,cthd->thbc', qh, kh, precision=_HI) * scale
        a = jax.nn.softmax(s, axis=-1)
        o = jnp.einsum('thbc,cthd->bthd', a, vh, precision=_HI).reshape(B, T, E)
        attn = lin(o, p['wo'][l], p['bo'][l])
        x = _layer_norm(x + attn, p['ln1w'][l], p['ln1b'][l])
        h1 = jax.nn.relu(lin(x, p['w1'][l], p['b1'][l]))
        h2 = lin(h1, p['w2'][l], p['b2'][l])
        x = _layer_norm(x + h2, p['ln2w'][l], p['ln2b'][l])
    flat = x.reshape(B, T * E)
    return jnp.einsum('bi,oi->bo', flat, p['dec_w'], precision=_HI) + p['dec_b']


# ---------------------------------------------------------------------------
if __name__ == "__main__":
    W = 2                             # independent windows -> parallel grid axis
    B, T = 4, 8                       # bt_size, seq_length
    D_EMBED = 6
    D_INPUTS = 5 + 4 * D_EMBED + 1    # = 30 (time-embed concat + positional col)
    NHEAD = 2
    D_FEED = 64
    N_LAYERS = 2
    D_OUTPUTS = 3

    key = jax.random.PRNGKey(0)
    kp, kc, ky, km, kh, kd = jax.random.split(key, 6)

    params = init_params(kp, d_embed=D_EMBED, d_inputs=D_INPUTS, d_feed=D_FEED,
                         n_layers=N_LAYERS, seq_length=T, d_outputs=D_OUTPUTS,
                         nhead=NHEAD)

    # deterministic raw inputs (W, B, T, 9) with valid calendar values
    cont = jax.random.normal(kc, (W, B, T, 5), jnp.float32)
    year_vals = jnp.array([2017., 2018.])[jax.random.randint(ky, (W, B, T), 0, 2)]
    month_vals = jnp.array([9., 10., 11., 12., 1., 2.])[
        jax.random.randint(km, (W, B, T), 0, 6)]
    hour_vals = jax.random.randint(kh, (W, B, T), 9, 17).astype(jnp.float32)
    dow_vals = jax.random.randint(kd, (W, B, T), 0, 5).astype(jnp.float32)
    raw = jnp.concatenate(
        [cont, year_vals[..., None], month_vals[..., None],
         hour_vals[..., None], dow_vals[..., None]], axis=-1)        # (W, B, T, 9)

    fwd = jax.jit(lambda r, p: transformer_forward(r, p, nhead=NHEAD,
                                                   n_layers=N_LAYERS))
    out = jax.block_until_ready(fwd(raw, params))
    assert out.shape == (W, B, D_OUTPUTS), out.shape
    assert bool(jnp.all(jnp.isfinite(out)))

    ref = jnp.stack([reference_forward(raw[w], params,
                                       n_layers=N_LAYERS, nhead=NHEAD)
                     for w in range(W)])
    err = float(jnp.max(jnp.abs(out - ref)))
    # tolerance covers bf16 MXU operands (accumulation and softmax/LN stay f32)
    assert err < 5e-2, f"kernel/reference mismatch: max|diff|={err}"
    # TODO(synk): train-mode dropout is not modeled (forward is eval-mode identity).
    print("KERNEL_OK")
</pallas_src>

<mosaic_0001>
module attributes {stable_mosaic.version = 11 : i64} {
  func.func @fused_forward_kernel(%arg0: i32, %arg1: memref<1x32x9xf32, #tpu.memory_space<vmem>>, %arg2: memref<33x30xbf16, #tpu.memory_space<vmem>>, %arg3: memref<9x30xbf16, #tpu.memory_space<vmem>>, %arg4: memref<12x30x15xbf16, #tpu.memory_space<vmem>>, %arg5: memref<12x1x15xf32, #tpu.memory_space<vmem>>, %arg6: memref<4x15x30xbf16, #tpu.memory_space<vmem>>, %arg7: memref<2x30x64xbf16, #tpu.memory_space<vmem>>, %arg8: memref<2x64x30xbf16, #tpu.memory_space<vmem>>, %arg9: memref<12x1x30xf32, #tpu.memory_space<vmem>>, %arg10: memref<2x1x64xf32, #tpu.memory_space<vmem>>, %arg11: memref<32x32xf32, #tpu.memory_space<vmem>>, %arg12: memref<30x24xbf16, #tpu.memory_space<vmem>>, %arg13: memref<32x24xf32, #tpu.memory_space<vmem>>, %arg14: memref<24x3xbf16, #tpu.memory_space<vmem>>, %arg15: memref<4x32xbf16, #tpu.memory_space<vmem>>, %arg16: memref<1x3xf32, #tpu.memory_space<vmem>>, %arg17: memref<1x4x3xf32, #tpu.memory_space<vmem>>) attributes {dimension_semantics = [#tpu.dimension_semantics<parallel>], iteration_bounds = array<i64: 2>, scalar_prefetch = 0 : i64, scratch_operands = 0 : i64, tpu.core_type = #tpu.core_type<tc>, window_params = [{transform_indices = @transform_0, window_bounds = array<i64: 1, 32, 9>}, {pipeline_mode = #tpu.pipeline_mode<synchronous>, transform_indices = @transform_1, window_bounds = array<i64: 33, 30>}, {pipeline_mode = #tpu.pipeline_mode<synchronous>, transform_indices = @transform_2, window_bounds = array<i64: 9, 30>}, {pipeline_mode = #tpu.pipeline_mode<synchronous>, transform_indices = @transform_3, window_bounds = array<i64: 12, 30, 15>}, {pipeline_mode = #tpu.pipeline_mode<synchronous>, transform_indices = @transform_4, window_bounds = array<i64: 12, 1, 15>}, {pipeline_mode = #tpu.pipeline_mode<synchronous>, transform_indices = @transform_5, window_bounds = array<i64: 4, 15, 30>}, {pipeline_mode = #tpu.pipeline_mode<synchronous>, transform_indices = @transform_6, window_bounds = array<i64: 2, 30, 64>}, {pipeline_mode = #tpu.pipeline_mode<synchronous>, transform_indices = @transform_7, window_bounds = array<i64: 2, 64, 30>}, {pipeline_mode = #tpu.pipeline_mode<synchronous>, transform_indices = @transform_8, window_bounds = array<i64: 12, 1, 30>}, {pipeline_mode = #tpu.pipeline_mode<synchronous>, transform_indices = @transform_9, window_bounds = array<i64: 2, 1, 64>}, {pipeline_mode = #tpu.pipeline_mode<synchronous>, transform_indices = @transform_10, window_bounds = array<i64: 32, 32>}, {pipeline_mode = #tpu.pipeline_mode<synchronous>, transform_indices = @transform_11, window_bounds = array<i64: 30, 24>}, {pipeline_mode = #tpu.pipeline_mode<synchronous>, transform_indices = @transform_12, window_bounds = array<i64: 32, 24>}, {pipeline_mode = #tpu.pipeline_mode<synchronous>, transform_indices = @transform_13, window_bounds = array<i64: 24, 3>}, {pipeline_mode = #tpu.pipeline_mode<synchronous>, transform_indices = @transform_14, window_bounds = array<i64: 4, 32>}, {pipeline_mode = #tpu.pipeline_mode<synchronous>, transform_indices = @transform_15, window_bounds = array<i64: 1, 3>}, {transform_indices = @transform_16, window_bounds = array<i64: 1, 4, 3>}]} {
    %c0 = arith.constant 0 : index
    %c0_0 = arith.constant 0 : index
    %c0_1 = arith.constant 0 : index
    %0 = vector.load %arg1[%c0, %c0_0, %c0_1] : memref<1x32x9xf32, #tpu.memory_space<vmem>>, vector<1x32x9xf32>
    %1 = vector.shape_cast %0 : vector<1x32x9xf32> to vector<32x9xf32>
    %2 = tpu.iota {dimensions = array<i32: 0>} : vector<32x1xi32>
    %3 = arith.sitofp %2 : vector<32x1xi32> to vector<32x1xf32>
    %cst = arith.constant 8.000000e+00 : f32
    %4 = vector.broadcast %cst : f32 to vector<32x1xf32>
    %5 = arith.divf %3, %4 : vector<32x1xf32>
    %6 = math.floor %5 : vector<32x1xf32>
    %cst_2 = arith.constant 8.000000e+00 : f32
    %7 = vector.broadcast %cst_2 : f32 to vector<32x1xf32>
    %8 = arith.mulf %7, %6 : vector<32x1xf32>
    %9 = arith.subf %3, %8 : vector<32x1xf32>
    %10 = vector.extract_strided_slice %1 {offsets = [0, 5], sizes = [32, 1], strides = [1, 1]} : vector<32x9xf32> to vector<32x1xf32>
    %cst_3 = arith.constant 2.017000e+03 : f32
    %11 = vector.broadcast %cst_3 : f32 to vector<32x1xf32>
    %12 = arith.subf %10, %11 : vector<32x1xf32>
    %13 = vector.extract_strided_slice %1 {offsets = [0, 6], sizes = [32, 1], strides = [1, 1]} : vector<32x9xf32> to vector<32x1xf32>
    %cst_4 = arith.constant 8.500000e+00 : f32
    %14 = vector.broadcast %cst_4 : f32 to vector<32x1xf32>
    %15 = arith.cmpf oge, %13, %14 : vector<32x1xf32>
    %cst_5 = arith.constant 9.000000e+00 : f32
    %16 = vector.broadcast %cst_5 : f32 to vector<32x1xf32>
    %17 = arith.subf %13, %16 : vector<32x1xf32>
    %cst_6 = arith.constant 3.000000e+00 : f32
    %18 = vector.broadcast %cst_6 : f32 to vector<32x1xf32>
    %19 = arith.addf %13, %18 : vector<32x1xf32>
    %20 = arith.select %15, %17, %19 : vector<32x1xi1>, vector<32x1xf32>
    %cst_7 = arith.constant 6.000000e+00 : f32
    %21 = vector.broadcast %cst_7 : f32 to vector<32x1xf32>
    %22 = arith.addf %20, %21 : vector<32x1xf32>
    %23 = vector.extract_strided_slice %1 {offsets = [0, 8], sizes = [32, 1], strides = [1, 1]} : vector<32x9xf32> to vector<32x1xf32>
    %cst_8 = arith.constant 1.200000e+01 : f32
    %24 = vector.broadcast %cst_8 : f32 to vector<32x1xf32>
    %25 = arith.addf %23, %24 : vector<32x1xf32>
    %26 = vector.extract_strided_slice %1 {offsets = [0, 7], sizes = [32, 1], strides = [1, 1]} : vector<32x9xf32> to vector<32x1xf32>
    %cst_9 = arith.constant 9.000000e+00 : f32
    %27 = vector.broadcast %cst_9 : f32 to vector<32x1xf32>
    %28 = arith.subf %26, %27 : vector<32x1xf32>
    %cst_10 = arith.constant 1.700000e+01 : f32
    %29 = vector.broadcast %cst_10 : f32 to vector<32x1xf32>
    %30 = arith.addf %28, %29 : vector<32x1xf32>
    %cst_11 = arith.constant 2.500000e+01 : f32
    %31 = vector.broadcast %cst_11 : f32 to vector<32x1xf32>
    %32 = arith.addf %9, %31 : vector<32x1xf32>
    %33 = tpu.iota {dimensions = array<i32: 1>} : vector<32x33xi32>
    %34 = arith.sitofp %33 : vector<32x33xi32> to vector<32x33xf32>
    %35 = vector.broadcast %12 : vector<32x1xf32> to vector<32x33xf32>
    %36 = arith.cmpf oeq, %34, %35 : vector<32x33xf32>
    %37 = vector.broadcast %22 : vector<32x1xf32> to vector<32x33xf32>
    %38 = arith.cmpf oeq, %34, %37 : vector<32x33xf32>
    %39 = arith.ori %36, %38 : vector<32x33xi1>
    %40 = vector.broadcast %25 : vector<32x1xf32> to vector<32x33xf32>
    %41 = arith.cmpf oeq, %34, %40 : vector<32x33xf32>
    %42 = arith.ori %39, %41 : vector<32x33xi1>
    %43 = vector.broadcast %30 : vector<32x1xf32> to vector<32x33xf32>
    %44 = arith.cmpf oeq, %34, %43 : vector<32x33xf32>
    %45 = arith.ori %42, %44 : vector<32x33xi1>
    %46 = vector.broadcast %32 : vector<32x1xf32> to vector<32x33xf32>
    %47 = arith.cmpf oeq, %34, %46 : vector<32x33xf32>
    %48 = arith.ori %45, %47 : vector<32x33xi1>
    %49 = arith.extui %48 : vector<32x33xi1> to vector<32x33xi32>
    %50 = arith.sitofp %49 : vector<32x33xi32> to vector<32x33xf32>
    %51 = arith.truncf %50 : vector<32x33xf32> to vector<32x33xbf16>
    %c0_12 = arith.constant 0 : index
    %c0_13 = arith.constant 0 : index
    %52 = vector.load %arg2[%c0_12, %c0_13] : memref<33x30xbf16, #tpu.memory_space<vmem>>, vector<33x30xbf16>
    %cst_14 = arith.constant dense<0.000000e+00> : vector<32x30xf32>
    %53 = tpu.matmul %51, %52, %cst_14 {dimension_numbers = #tpu.dot_dimension_numbers<[1], [0], [0], [1], [0, 0, 1, 1], [], []>} : vector<32x33xbf16>, vector<33x30xbf16>, vector<32x30xf32> -> vector<32x30xf32>
    %54 = arith.truncf %1 : vector<32x9xf32> to vector<32x9xbf16>
    %c0_15 = arith.constant 0 : index
    %c0_16 = arith.constant 0 : index
    %55 = vector.load %arg3[%c0_15, %c0_16] : memref<9x30xbf16, #tpu.memory_space<vmem>>, vector<9x30xbf16>
    %cst_17 = arith.constant dense<0.000000e+00> : vector<32x30xf32>
    %56 = tpu.matmul %54, %55, %cst_17 {dimension_numbers = #tpu.dot_dimension_numbers<[1], [0], [0], [1], [0, 0, 1, 1], [], []>} : vector<32x9xbf16>, vector<9x30xbf16>, vector<32x30xf32> -> vector<32x30xf32>
    %57 = arith.addf %53, %56 : vector<32x30xf32>
    %c0_18 = arith.constant 0 : index
    %c0_19 = arith.constant 0 : index
    %58 = vector.load %arg11[%c0_18, %c0_19] : memref<32x32xf32, #tpu.memory_space<vmem>>, vector<32x32xf32>
    %59 = arith.truncf %57 : vector<32x30xf32> to vector<32x30xbf16>
    %c0_20 = arith.constant 0 : index
    %c0_21 = arith.constant 0 : index
    %c0_22 = arith.constant 0 : index
    %60 = vector.load %arg4[%c0_20, %c0_21, %c0_22] : memref<12x30x15xbf16, #tpu.memory_space<vmem>>, vector<1x30x15xbf16>
    %61 = vector.shape_cast %60 : vector<1x30x15xbf16> to vector<30x15xbf16>
    %cst_23 = arith.constant dense<0.000000e+00> : vector<32x15xf32>
    %62 = tpu.matmul %59, %61, %cst_23 {dimension_numbers = #tpu.dot_dimension_numbers<[1], [0], [0], [1], [0, 0, 1, 1], [], []>} : vector<32x30xbf16>, vector<30x15xbf16>, vector<32x15xf32> -> vector<32x15xf32>
    %c0_24 = arith.constant 0 : index
    %c0_25 = arith.constant 0 : index
    %c0_26 = arith.constant 0 : index
    %63 = vector.load %arg5[%c0_24, %c0_25, %c0_26] : memref<12x1x15xf32, #tpu.memory_space<vmem>>, vector<1x1x15xf32>
    %64 = vector.shape_cast %63 : vector<1x1x15xf32> to vector<1x15xf32>
    %65 = vector.broadcast %64 : vector<1x15xf32> to vector<32x15xf32>
    %66 = arith.addf %62, %65 : vector<32x15xf32>
    %c1 = arith.constant 1 : index
    %c0_27 = arith.constant 0 : index
    %c0_28 = arith.constant 0 : index
    %67 = vector.load %arg4[%c1, %c0_27, %c0_28] : memref<12x30x15xbf16, #tpu.memory_space<vmem>>, vector<1x30x15xbf16>
    %68 = vector.shape_cast %67 : vector<1x30x15xbf16> to vector<30x15xbf16>
    %cst_29 = arith.constant dense<0.000000e+00> : vector<32x15xf32>
    %69 = tpu.matmul %59, %68, %cst_29 {dimension_numbers = #tpu.dot_dimension_numbers<[1], [0], [0], [1], [0, 0, 1, 1], [], []>} : vector<32x30xbf16>, vector<30x15xbf16>, vector<32x15xf32> -> vector<32x15xf32>
    %c1_30 = arith.constant 1 : index
    %c0_31 = arith.constant 0 : index
    %c0_32 = arith.constant 0 : index
    %70 = vector.load %arg5[%c1_30, %c0_31, %c0_32] : memref<12x1x15xf32, #tpu.memory_space<vmem>>, vector<1x1x15xf32>
    %71 = vector.shape_cast %70 : vector<1x1x15xf32> to vector<1x15xf32>
    %72 = vector.broadcast %71 : vector<1x15xf32> to vector<32x15xf32>
    %73 = arith.addf %69, %72 : vector<32x15xf32>
    %c2 = arith.constant 2 : index
    %c0_33 = arith.constant 0 : index
    %c0_34 = arith.constant 0 : index
    %74 = vector.load %arg4[%c2, %c0_33, %c0_34] : memref<12x30x15xbf16, #tpu.memory_space<vmem>>, vector<1x30x15xbf16>
    %75 = vector.shape_cast %74 : vector<1x30x15xbf16> to vector<30x15xbf16>
    %cst_35 = arith.constant dense<0.000000e+00> : vector<32x15xf32>
    %76 = tpu.matmul %59, %75, %cst_35 {dimension_numbers = #tpu.dot_dimension_numbers<[1], [0], [0], [1], [0, 0, 1, 1], [], []>} : vector<32x30xbf16>, vector<30x15xbf16>, vector<32x15xf32> -> vector<32x15xf32>
    %c2_36 = arith.constant 2 : index
    %c0_37 = arith.constant 0 : index
    %c0_38 = arith.constant 0 : index
    %77 = vector.load %arg5[%c2_36, %c0_37, %c0_38] : memref<12x1x15xf32, #tpu.memory_space<vmem>>, vector<1x1x15xf32>
    %78 = vector.shape_cast %77 : vector<1x1x15xf32> to vector<1x15xf32>
    %79 = vector.broadcast %78 : vector<1x15xf32> to vector<32x15xf32>
    %80 = arith.addf %76, %79 : vector<32x15xf32>
    %81 = arith.truncf %66 : vector<32x15xf32> to vector<32x15xbf16>
    %82 = arith.truncf %73 : vector<32x15xf32> to vector<32x15xbf16>
    %cst_39 = arith.constant dense<0.000000e+00> : vector<32x32xf32>
    %83 = tpu.matmul %81, %82, %cst_39 {dimension_numbers = #tpu.dot_dimension_numbers<[1], [1], [0], [0], [0, 0, 1, 0], [], []>} : vector<32x15xbf16>, vector<32x15xbf16>, vector<32x32xf32> -> vector<32x32xf32>
    %cst_40 = arith.constant 0.258198887 : f32
    %84 = vector.broadcast %cst_40 : f32 to vector<32x32xf32>
    %85 = arith.mulf %83, %84 : vector<32x32xf32>
    %86 = arith.addf %85, %58 : vector<32x32xf32>
    %cst_41 = arith.constant dense<0xFF800000> : vector<32xf32>
    %87 = vector.multi_reduction <maximumf>, %86, %cst_41 [1] : vector<32x32xf32> to vector<32xf32>
    %88 = vector.shape_cast %87 : vector<32xf32> to vector<32x1xf32>
    %89 = vector.broadcast %88 : vector<32x1xf32> to vector<32x32xf32>
    %90 = arith.subf %86, %89 : vector<32x32xf32>
    %91 = math.exp %90 : vector<32x32xf32>
    %cst_42 = arith.constant dense<0.000000e+00> : vector<32xf32>
    %92 = vector.multi_reduction <add>, %91, %cst_42 [1] : vector<32x32xf32> to vector<32xf32>
    %93 = vector.shape_cast %92 : vector<32xf32> to vector<32x1xf32>
    %94 = tpu.reciprocal %93 : vector<32x1xf32> -> vector<32x1xf32>
    %95 = vector.broadcast %94 : vector<32x1xf32> to vector<32x32xf32>
    %96 = arith.mulf %91, %95 : vector<32x32xf32>
    %97 = arith.truncf %96 : vector<32x32xf32> to vector<32x32xbf16>
    %98 = arith.truncf %80 : vector<32x15xf32> to vector<32x15xbf16>
    %cst_43 = arith.constant dense<0.000000e+00> : vector<32x15xf32>
    %99 = tpu.matmul %97, %98, %cst_43 {dimension_numbers = #tpu.dot_dimension_numbers<[1], [0], [0], [1], [0, 0, 1, 1], [], []>} : vector<32x32xbf16>, vector<32x15xbf16>, vector<32x15xf32> -> vector<32x15xf32>
    %100 = arith.truncf %99 : vector<32x15xf32> to vector<32x15xbf16>
    %c0_44 = arith.constant 0 : index
    %c0_45 = arith.constant 0 : index
    %c0_46 = arith.constant 0 : index
    %101 = vector.load %arg6[%c0_44, %c0_45, %c0_46] : memref<4x15x30xbf16, #tpu.memory_space<vmem>>, vector<1x15x30xbf16>
    %102 = vector.shape_cast %101 : vector<1x15x30xbf16> to vector<15x30xbf16>
    %cst_47 = arith.constant dense<0.000000e+00> : vector<32x30xf32>
    %103 = tpu.matmul %100, %102, %cst_47 {dimension_numbers = #tpu.dot_dimension_numbers<[1], [0], [0], [1], [0, 0, 1, 1], [], []>} : vector<32x15xbf16>, vector<15x30xbf16>, vector<32x30xf32> -> vector<32x30xf32>
    %c3 = arith.constant 3 : index
    %c0_48 = arith.constant 0 : index
    %c0_49 = arith.constant 0 : index
    %104 = vector.load %arg4[%c3, %c0_48, %c0_49] : memref<12x30x15xbf16, #tpu.memory_space<vmem>>, vector<1x30x15xbf16>
    %105 = vector.shape_cast %104 : vector<1x30x15xbf16> to vector<30x15xbf16>
    %cst_50 = arith.constant dense<0.000000e+00> : vector<32x15xf32>
    %106 = tpu.matmul %59, %105, %cst_50 {dimension_numbers = #tpu.dot_dimension_numbers<[1], [0], [0], [1], [0, 0, 1, 1], [], []>} : vector<32x30xbf16>, vector<30x15xbf16>, vector<32x15xf32> -> vector<32x15xf32>
    %c3_51 = arith.constant 3 : index
    %c0_52 = arith.constant 0 : index
    %c0_53 = arith.constant 0 : index
    %107 = vector.load %arg5[%c3_51, %c0_52, %c0_53] : memref<12x1x15xf32, #tpu.memory_space<vmem>>, vector<1x1x15xf32>
    %108 = vector.shape_cast %107 : vector<1x1x15xf32> to vector<1x15xf32>
    %109 = vector.broadcast %108 : vector<1x15xf32> to vector<32x15xf32>
    %110 = arith.addf %106, %109 : vector<32x15xf32>
    %c4 = arith.constant 4 : index
    %c0_54 = arith.constant 0 : index
    %c0_55 = arith.constant 0 : index
    %111 = vector.load %arg4[%c4, %c0_54, %c0_55] : memref<12x30x15xbf16, #tpu.memory_space<vmem>>, vector<1x30x15xbf16>
    %112 = vector.shape_cast %111 : vector<1x30x15xbf16> to vector<30x15xbf16>
    %cst_56 = arith.constant dense<0.000000e+00> : vector<32x15xf32>
    %113 = tpu.matmul %59, %112, %cst_56 {dimension_numbers = #tpu.dot_dimension_numbers<[1], [0], [0], [1], [0, 0, 1, 1], [], []>} : vector<32x30xbf16>, vector<30x15xbf16>, vector<32x15xf32> -> vector<32x15xf32>
    %c4_57 = arith.constant 4 : index
    %c0_58 = arith.constant 0 : index
    %c0_59 = arith.constant 0 : index
    %114 = vector.load %arg5[%c4_57, %c0_58, %c0_59] : memref<12x1x15xf32, #tpu.memory_space<vmem>>, vector<1x1x15xf32>
    %115 = vector.shape_cast %114 : vector<1x1x15xf32> to vector<1x15xf32>
    %116 = vector.broadcast %115 : vector<1x15xf32> to vector<32x15xf32>
    %117 = arith.addf %113, %116 : vector<32x15xf32>
    %c5 = arith.constant 5 : index
    %c0_60 = arith.constant 0 : index
    %c0_61 = arith.constant 0 : index
    %118 = vector.load %arg4[%c5, %c0_60, %c0_61] : memref<12x30x15xbf16, #tpu.memory_space<vmem>>, vector<1x30x15xbf16>
    %119 = vector.shape_cast %118 : vector<1x30x15xbf16> to vector<30x15xbf16>
    %cst_62 = arith.constant dense<0.000000e+00> : vector<32x15xf32>
    %120 = tpu.matmul %59, %119, %cst_62 {dimension_numbers = #tpu.dot_dimension_numbers<[1], [0], [0], [1], [0, 0, 1, 1], [], []>} : vector<32x30xbf16>, vector<30x15xbf16>, vector<32x15xf32> -> vector<32x15xf32>
    %c5_63 = arith.constant 5 : index
    %c0_64 = arith.constant 0 : index
    %c0_65 = arith.constant 0 : index
    %121 = vector.load %arg5[%c5_63, %c0_64, %c0_65] : memref<12x1x15xf32, #tpu.memory_space<vmem>>, vector<1x1x15xf32>
    %122 = vector.shape_cast %121 : vector<1x1x15xf32> to vector<1x15xf32>
    %123 = vector.broadcast %122 : vector<1x15xf32> to vector<32x15xf32>
    %124 = arith.addf %120, %123 : vector<32x15xf32>
    %125 = arith.truncf %110 : vector<32x15xf32> to vector<32x15xbf16>
    %126 = arith.truncf %117 : vector<32x15xf32> to vector<32x15xbf16>
    %cst_66 = arith.constant dense<0.000000e+00> : vector<32x32xf32>
    %127 = tpu.matmul %125, %126, %cst_66 {dimension_numbers = #tpu.dot_dimension_numbers<[1], [1], [0], [0], [0, 0, 1, 0], [], []>} : vector<32x15xbf16>, vector<32x15xbf16>, vector<32x32xf32> -> vector<32x32xf32>
    %cst_67 = arith.constant 0.258198887 : f32
    %128 = vector.broadcast %cst_67 : f32 to vector<32x32xf32>
    %129 = arith.mulf %127, %128 : vector<32x32xf32>
    %130 = arith.addf %129, %58 : vector<32x32xf32>
    %cst_68 = arith.constant dense<0xFF800000> : vector<32xf32>
    %131 = vector.multi_reduction <maximumf>, %130, %cst_68 [1] : vector<32x32xf32> to vector<32xf32>
    %132 = vector.shape_cast %131 : vector<32xf32> to vector<32x1xf32>
    %133 = vector.broadcast %132 : vector<32x1xf32> to vector<32x32xf32>
    %134 = arith.subf %130, %133 : vector<32x32xf32>
    %135 = math.exp %134 : vector<32x32xf32>
    %cst_69 = arith.constant dense<0.000000e+00> : vector<32xf32>
    %136 = vector.multi_reduction <add>, %135, %cst_69 [1] : vector<32x32xf32> to vector<32xf32>
    %137 = vector.shape_cast %136 : vector<32xf32> to vector<32x1xf32>
    %138 = tpu.reciprocal %137 : vector<32x1xf32> -> vector<32x1xf32>
    %139 = vector.broadcast %138 : vector<32x1xf32> to vector<32x32xf32>
    %140 = arith.mulf %135, %139 : vector<32x32xf32>
    %141 = arith.truncf %140 : vector<32x32xf32> to vector<32x32xbf16>
    %142 = arith.truncf %124 : vector<32x15xf32> to vector<32x15xbf16>
    %cst_70 = arith.constant dense<0.000000e+00> : vector<32x15xf32>
    %143 = tpu.matmul %141, %142, %cst_70 {dimension_numbers = #tpu.dot_dimension_numbers<[1], [0], [0], [1], [0, 0, 1, 1], [], []>} : vector<32x32xbf16>, vector<32x15xbf16>, vector<32x15xf32> -> vector<32x15xf32>
    %144 = arith.truncf %143 : vector<32x15xf32> to vector<32x15xbf16>
    %c1_71 = arith.constant 1 : index
    %c0_72 = arith.constant 0 : index
    %c0_73 = arith.constant 0 : index
    %145 = vector.load %arg6[%c1_71, %c0_72, %c0_73] : memref<4x15x30xbf16, #tpu.memory_space<vmem>>, vector<1x15x30xbf16>
    %146 = vector.shape_cast %145 : vector<1x15x30xbf16> to vector<15x30xbf16>
    %cst_74 = arith.constant dense<0.000000e+00> : vector<32x30xf32>
    %147 = tpu.matmul %144, %146, %cst_74 {dimension_numbers = #tpu.dot_dimension_numbers<[1], [0], [0], [1], [0, 0, 1, 1], [], []>} : vector<32x15xbf16>, vector<15x30xbf16>, vector<32x30xf32> -> vector<32x30xf32>
    %148 = arith.addf %103, %147 : vector<32x30xf32>
    %c0_75 = arith.constant 0 : index
    %c0_76 = arith.constant 0 : index
    %c0_77 = arith.constant 0 : index
    %149 = vector.load %arg9[%c0_75, %c0_76, %c0_77] : memref<12x1x30xf32, #tpu.memory_space<vmem>>, vector<1x1x30xf32>
    %150 = vector.shape_cast %149 : vector<1x1x30xf32> to vector<1x30xf32>
    %151 = vector.broadcast %150 : vector<1x30xf32> to vector<32x30xf32>
    %152 = arith.addf %148, %151 : vector<32x30xf32>
    %153 = arith.addf %57, %152 : vector<32x30xf32>
    %c1_78 = arith.constant 1 : index
    %c0_79 = arith.constant 0 : index
    %c0_80 = arith.constant 0 : index
    %154 = vector.load %arg9[%c1_78, %c0_79, %c0_80] : memref<12x1x30xf32, #tpu.memory_space<vmem>>, vector<1x1x30xf32>
    %155 = vector.shape_cast %154 : vector<1x1x30xf32> to vector<1x30xf32>
    %c2_81 = arith.constant 2 : index
    %c0_82 = arith.constant 0 : index
    %c0_83 = arith.constant 0 : index
    %156 = vector.load %arg9[%c2_81, %c0_82, %c0_83] : memref<12x1x30xf32, #tpu.memory_space<vmem>>, vector<1x1x30xf32>
    %157 = vector.shape_cast %156 : vector<1x1x30xf32> to vector<1x30xf32>
    %cst_84 = arith.constant dense<0.000000e+00> : vector<32xf32>
    %158 = vector.multi_reduction <add>, %153, %cst_84 [1] : vector<32x30xf32> to vector<32xf32>
    %159 = vector.shape_cast %158 : vector<32xf32> to vector<32x1xf32>
    %cst_85 = arith.constant 3.000000e+01 : f32
    %160 = vector.broadcast %cst_85 : f32 to vector<32x1xf32>
    %161 = arith.divf %159, %160 : vector<32x1xf32>
    %162 = vector.broadcast %161 : vector<32x1xf32> to vector<32x30xf32>
    %163 = arith.subf %153, %162 : vector<32x30xf32>
    %164 = arith.mulf %163, %163 : vector<32x30xf32>
    %cst_86 = arith.constant dense<0.000000e+00> : vector<32xf32>
    %165 = vector.multi_reduction <add>, %164, %cst_86 [1] : vector<32x30xf32> to vector<32xf32>
    %166 = vector.shape_cast %165 : vector<32xf32> to vector<32x1xf32>
    %cst_87 = arith.constant 3.000000e+01 : f32
    %167 = vector.broadcast %cst_87 : f32 to vector<32x1xf32>
    %168 = arith.divf %166, %167 : vector<32x1xf32>
    %169 = vector.broadcast %161 : vector<32x1xf32> to vector<32x30xf32>
    %170 = arith.subf %153, %169 : vector<32x30xf32>
    %cst_88 = arith.constant 9.99999974E-6 : f32
    %171 = vector.broadcast %cst_88 : f32 to vector<32x1xf32>
    %172 = arith.addf %168, %171 : vector<32x1xf32>
    %173 = math.rsqrt %172 : vector<32x1xf32>
    %174 = vector.broadcast %173 : vector<32x1xf32> to vector<32x30xf32>
    %175 = arith.mulf %170, %174 : vector<32x30xf32>
    %176 = vector.broadcast %155 : vector<1x30xf32> to vector<32x30xf32>
    %177 = arith.mulf %175, %176 : vector<32x30xf32>
    %178 = vector.broadcast %157 : vector<1x30xf32> to vector<32x30xf32>
    %179 = arith.addf %177, %178 : vector<32x30xf32>
    %180 = arith.truncf %179 : vector<32x30xf32> to vector<32x30xbf16>
    %c0_89 = arith.constant 0 : index
    %c0_90 = arith.constant 0 : index
    %c0_91 = arith.constant 0 : index
    %181 = vector.load %arg7[%c0_89, %c0_90, %c0_91] : memref<2x30x64xbf16, #tpu.memory_space<vmem>>, vector<1x30x64xbf16>
    %182 = vector.shape_cast %181 : vector<1x30x64xbf16> to vector<30x64xbf16>
    %cst_92 = arith.constant dense<0.000000e+00> : vector<32x64xf32>
    %183 = tpu.matmul %180, %182, %cst_92 {dimension_numbers = #tpu.dot_dimension_numbers<[1], [0], [0], [1], [0, 0, 1, 1], [], []>} : vector<32x30xbf16>, vector<30x64xbf16>, vector<32x64xf32> -> vector<32x64xf32>
    %c0_93 = arith.constant 0 : index
    %c0_94 = arith.constant 0 : index
    %c0_95 = arith.constant 0 : index
    %184 = vector.load %arg10[%c0_93, %c0_94, %c0_95] : memref<2x1x64xf32, #tpu.memory_space<vmem>>, vector<1x1x64xf32>
    %185 = vector.shape_cast %184 : vector<1x1x64xf32> to vector<1x64xf32>
    %186 = vector.broadcast %185 : vector<1x64xf32> to vector<32x64xf32>
    %187 = arith.addf %183, %186 : vector<32x64xf32>
    %cst_96 = arith.constant 0.000000e+00 : f32
    %188 = vector.broadcast %cst_96 : f32 to vector<32x64xf32>
    %189 = arith.maximumf %187, %188 : vector<32x64xf32>
    %190 = arith.truncf %189 : vector<32x64xf32> to vector<32x64xbf16>
    %c0_97 = arith.constant 0 : index
    %c0_98 = arith.constant 0 : index
    %c0_99 = arith.constant 0 : index
    %191 = vector.load %arg8[%c0_97, %c0_98, %c0_99] : memref<2x64x30xbf16, #tpu.memory_space<vmem>>, vector<1x64x30xbf16>
    %192 = vector.shape_cast %191 : vector<1x64x30xbf16> to vector<64x30xbf16>
    %cst_100 = arith.constant dense<0.000000e+00> : vector<32x30xf32>
    %193 = tpu.matmul %190, %192, %cst_100 {dimension_numbers = #tpu.dot_dimension_numbers<[1], [0], [0], [1], [0, 0, 1, 1], [], []>} : vector<32x64xbf16>, vector<64x30xbf16>, vector<32x30xf32> -> vector<32x30xf32>
    %c5_101 = arith.constant 5 : index
    %c0_102 = arith.constant 0 : index
    %c0_103 = arith.constant 0 : index
    %194 = vector.load %arg9[%c5_101, %c0_102, %c0_103] : memref<12x1x30xf32, #tpu.memory_space<vmem>>, vector<1x1x30xf32>
    %195 = vector.shape_cast %194 : vector<1x1x30xf32> to vector<1x30xf32>
    %196 = vector.broadcast %195 : vector<1x30xf32> to vector<32x30xf32>
    %197 = arith.addf %193, %196 : vector<32x30xf32>
    %198 = arith.addf %179, %197 : vector<32x30xf32>
    %c3_104 = arith.constant 3 : index
    %c0_105 = arith.constant 0 : index
    %c0_106 = arith.constant 0 : index
    %199 = vector.load %arg9[%c3_104, %c0_105, %c0_106] : memref<12x1x30xf32, #tpu.memory_space<vmem>>, vector<1x1x30xf32>
    %200 = vector.shape_cast %199 : vector<1x1x30xf32> to vector<1x30xf32>
    %c4_107 = arith.constant 4 : index
    %c0_108 = arith.constant 0 : index
    %c0_109 = arith.constant 0 : index
    %201 = vector.load %arg9[%c4_107, %c0_108, %c0_109] : memref<12x1x30xf32, #tpu.memory_space<vmem>>, vector<1x1x30xf32>
    %202 = vector.shape_cast %201 : vector<1x1x30xf32> to vector<1x30xf32>
    %cst_110 = arith.constant dense<0.000000e+00> : vector<32xf32>
    %203 = vector.multi_reduction <add>, %198, %cst_110 [1] : vector<32x30xf32> to vector<32xf32>
    %204 = vector.shape_cast %203 : vector<32xf32> to vector<32x1xf32>
    %cst_111 = arith.constant 3.000000e+01 : f32
    %205 = vector.broadcast %cst_111 : f32 to vector<32x1xf32>
    %206 = arith.divf %204, %205 : vector<32x1xf32>
    %207 = vector.broadcast %206 : vector<32x1xf32> to vector<32x30xf32>
    %208 = arith.subf %198, %207 : vector<32x30xf32>
    %209 = arith.mulf %208, %208 : vector<32x30xf32>
    %cst_112 = arith.constant dense<0.000000e+00> : vector<32xf32>
    %210 = vector.multi_reduction <add>, %209, %cst_112 [1] : vector<32x30xf32> to vector<32xf32>
    %211 = vector.shape_cast %210 : vector<32xf32> to vector<32x1xf32>
    %cst_113 = arith.constant 3.000000e+01 : f32
    %212 = vector.broadcast %cst_113 : f32 to vector<32x1xf32>
    %213 = arith.divf %211, %212 : vector<32x1xf32>
    %214 = vector.broadcast %206 : vector<32x1xf32> to vector<32x30xf32>
    %215 = arith.subf %198, %214 : vector<32x30xf32>
    %cst_114 = arith.constant 9.99999974E-6 : f32
    %216 = vector.broadcast %cst_114 : f32 to vector<32x1xf32>
    %217 = arith.addf %213, %216 : vector<32x1xf32>
    %218 = math.rsqrt %217 : vector<32x1xf32>
    %219 = vector.broadcast %218 : vector<32x1xf32> to vector<32x30xf32>
    %220 = arith.mulf %215, %219 : vector<32x30xf32>
    %221 = vector.broadcast %200 : vector<1x30xf32> to vector<32x30xf32>
    %222 = arith.mulf %220, %221 : vector<32x30xf32>
    %223 = vector.broadcast %202 : vector<1x30xf32> to vector<32x30xf32>
    %224 = arith.addf %222, %223 : vector<32x30xf32>
    %225 = arith.truncf %224 : vector<32x30xf32> to vector<32x30xbf16>
    %c6 = arith.constant 6 : index
    %c0_115 = arith.constant 0 : index
    %c0_116 = arith.constant 0 : index
    %226 = vector.load %arg4[%c6, %c0_115, %c0_116] : memref<12x30x15xbf16, #tpu.memory_space<vmem>>, vector<1x30x15xbf16>
    %227 = vector.shape_cast %226 : vector<1x30x15xbf16> to vector<30x15xbf16>
    %cst_117 = arith.constant dense<0.000000e+00> : vector<32x15xf32>
    %228 = tpu.matmul %225, %227, %cst_117 {dimension_numbers = #tpu.dot_dimension_numbers<[1], [0], [0], [1], [0, 0, 1, 1], [], []>} : vector<32x30xbf16>, vector<30x15xbf16>, vector<32x15xf32> -> vector<32x15xf32>
    %c6_118 = arith.constant 6 : index
    %c0_119 = arith.constant 0 : index
    %c0_120 = arith.constant 0 : index
    %229 = vector.load %arg5[%c6_118, %c0_119, %c0_120] : memref<12x1x15xf32, #tpu.memory_space<vmem>>, vector<1x1x15xf32>
    %230 = vector.shape_cast %229 : vector<1x1x15xf32> to vector<1x15xf32>
    %231 = vector.broadcast %230 : vector<1x15xf32> to vector<32x15xf32>
    %232 = arith.addf %228, %231 : vector<32x15xf32>
    %c7 = arith.constant 7 : index
    %c0_121 = arith.constant 0 : index
    %c0_122 = arith.constant 0 : index
    %233 = vector.load %arg4[%c7, %c0_121, %c0_122] : memref<12x30x15xbf16, #tpu.memory_space<vmem>>, vector<1x30x15xbf16>
    %234 = vector.shape_cast %233 : vector<1x30x15xbf16> to vector<30x15xbf16>
    %cst_123 = arith.constant dense<0.000000e+00> : vector<32x15xf32>
    %235 = tpu.matmul %225, %234, %cst_123 {dimension_numbers = #tpu.dot_dimension_numbers<[1], [0], [0], [1], [0, 0, 1, 1], [], []>} : vector<32x30xbf16>, vector<30x15xbf16>, vector<32x15xf32> -> vector<32x15xf32>
    %c7_124 = arith.constant 7 : index
    %c0_125 = arith.constant 0 : index
    %c0_126 = arith.constant 0 : index
    %236 = vector.load %arg5[%c7_124, %c0_125, %c0_126] : memref<12x1x15xf32, #tpu.memory_space<vmem>>, vector<1x1x15xf32>
    %237 = vector.shape_cast %236 : vector<1x1x15xf32> to vector<1x15xf32>
    %238 = vector.broadcast %237 : vector<1x15xf32> to vector<32x15xf32>
    %239 = arith.addf %235, %238 : vector<32x15xf32>
    %c8 = arith.constant 8 : index
    %c0_127 = arith.constant 0 : index
    %c0_128 = arith.constant 0 : index
    %240 = vector.load %arg4[%c8, %c0_127, %c0_128] : memref<12x30x15xbf16, #tpu.memory_space<vmem>>, vector<1x30x15xbf16>
    %241 = vector.shape_cast %240 : vector<1x30x15xbf16> to vector<30x15xbf16>
    %cst_129 = arith.constant dense<0.000000e+00> : vector<32x15xf32>
    %242 = tpu.matmul %225, %241, %cst_129 {dimension_numbers = #tpu.dot_dimension_numbers<[1], [0], [0], [1], [0, 0, 1, 1], [], []>} : vector<32x30xbf16>, vector<30x15xbf16>, vector<32x15xf32> -> vector<32x15xf32>
    %c8_130 = arith.constant 8 : index
    %c0_131 = arith.constant 0 : index
    %c0_132 = arith.constant 0 : index
    %243 = vector.load %arg5[%c8_130, %c0_131, %c0_132] : memref<12x1x15xf32, #tpu.memory_space<vmem>>, vector<1x1x15xf32>
    %244 = vector.shape_cast %243 : vector<1x1x15xf32> to vector<1x15xf32>
    %245 = vector.broadcast %244 : vector<1x15xf32> to vector<32x15xf32>
    %246 = arith.addf %242, %245 : vector<32x15xf32>
    %247 = arith.truncf %232 : vector<32x15xf32> to vector<32x15xbf16>
    %248 = arith.truncf %239 : vector<32x15xf32> to vector<32x15xbf16>
    %cst_133 = arith.constant dense<0.000000e+00> : vector<32x32xf32>
    %249 = tpu.matmul %247, %248, %cst_133 {dimension_numbers = #tpu.dot_dimension_numbers<[1], [1], [0], [0], [0, 0, 1, 0], [], []>} : vector<32x15xbf16>, vector<32x15xbf16>, vector<32x32xf32> -> vector<32x32xf32>
    %cst_134 = arith.constant 0.258198887 : f32
    %250 = vector.broadcast %cst_134 : f32 to vector<32x32xf32>
    %251 = arith.mulf %249, %250 : vector<32x32xf32>
    %252 = arith.addf %251, %58 : vector<32x32xf32>
    %cst_135 = arith.constant dense<0xFF800000> : vector<32xf32>
    %253 = vector.multi_reduction <maximumf>, %252, %cst_135 [1] : vector<32x32xf32> to vector<32xf32>
    %254 = vector.shape_cast %253 : vector<32xf32> to vector<32x1xf32>
    %255 = vector.broadcast %254 : vector<32x1xf32> to vector<32x32xf32>
    %256 = arith.subf %252, %255 : vector<32x32xf32>
    %257 = math.exp %256 : vector<32x32xf32>
    %cst_136 = arith.constant dense<0.000000e+00> : vector<32xf32>
    %258 = vector.multi_reduction <add>, %257, %cst_136 [1] : vector<32x32xf32> to vector<32xf32>
    %259 = vector.shape_cast %258 : vector<32xf32> to vector<32x1xf32>
    %260 = tpu.reciprocal %259 : vector<32x1xf32> -> vector<32x1xf32>
    %261 = vector.broadcast %260 : vector<32x1xf32> to vector<32x32xf32>
    %262 = arith.mulf %257, %261 : vector<32x32xf32>
    %263 = arith.truncf %262 : vector<32x32xf32> to vector<32x32xbf16>
    %264 = arith.truncf %246 : vector<32x15xf32> to vector<32x15xbf16>
    %cst_137 = arith.constant dense<0.000000e+00> : vector<32x15xf32>
    %265 = tpu.matmul %263, %264, %cst_137 {dimension_numbers = #tpu.dot_dimension_numbers<[1], [0], [0], [1], [0, 0, 1, 1], [], []>} : vector<32x32xbf16>, vector<32x15xbf16>, vector<32x15xf32> -> vector<32x15xf32>
    %266 = arith.truncf %265 : vector<32x15xf32> to vector<32x15xbf16>
    %c2_138 = arith.constant 2 : index
    %c0_139 = arith.constant 0 : index
    %c0_140 = arith.constant 0 : index
    %267 = vector.load %arg6[%c2_138, %c0_139, %c0_140] : memref<4x15x30xbf16, #tpu.memory_space<vmem>>, vector<1x15x30xbf16>
    %268 = vector.shape_cast %267 : vector<1x15x30xbf16> to vector<15x30xbf16>
    %cst_141 = arith.constant dense<0.000000e+00> : vector<32x30xf32>
    %269 = tpu.matmul %266, %268, %cst_141 {dimension_numbers = #tpu.dot_dimension_numbers<[1], [0], [0], [1], [0, 0, 1, 1], [], []>} : vector<32x15xbf16>, vector<15x30xbf16>, vector<32x30xf32> -> vector<32x30xf32>
    %c9 = arith.constant 9 : index
    %c0_142 = arith.constant 0 : index
    %c0_143 = arith.constant 0 : index
    %270 = vector.load %arg4[%c9, %c0_142, %c0_143] : memref<12x30x15xbf16, #tpu.memory_space<vmem>>, vector<1x30x15xbf16>
    %271 = vector.shape_cast %270 : vector<1x30x15xbf16> to vector<30x15xbf16>
    %cst_144 = arith.constant dense<0.000000e+00> : vector<32x15xf32>
    %272 = tpu.matmul %225, %271, %cst_144 {dimension_numbers = #tpu.dot_dimension_numbers<[1], [0], [0], [1], [0, 0, 1, 1], [], []>} : vector<32x30xbf16>, vector<30x15xbf16>, vector<32x15xf32> -> vector<32x15xf32>
    %c9_145 = arith.constant 9 : index
    %c0_146 = arith.constant 0 : index
    %c0_147 = arith.constant 0 : index
    %273 = vector.load %arg5[%c9_145, %c0_146, %c0_147] : memref<12x1x15xf32, #tpu.memory_space<vmem>>, vector<1x1x15xf32>
    %274 = vector.shape_cast %273 : vector<1x1x15xf32> to vector<1x15xf32>
    %275 = vector.broadcast %274 : vector<1x15xf32> to vector<32x15xf32>
    %276 = arith.addf %272, %275 : vector<32x15xf32>
    %c10 = arith.constant 10 : index
    %c0_148 = arith.constant 0 : index
    %c0_149 = arith.constant 0 : index
    %277 = vector.load %arg4[%c10, %c0_148, %c0_149] : memref<12x30x15xbf16, #tpu.memory_space<vmem>>, vector<1x30x15xbf16>
    %278 = vector.shape_cast %277 : vector<1x30x15xbf16> to vector<30x15xbf16>
    %cst_150 = arith.constant dense<0.000000e+00> : vector<32x15xf32>
    %279 = tpu.matmul %225, %278, %cst_150 {dimension_numbers = #tpu.dot_dimension_numbers<[1], [0], [0], [1], [0, 0, 1, 1], [], []>} : vector<32x30xbf16>, vector<30x15xbf16>, vector<32x15xf32> -> vector<32x15xf32>
    %c10_151 = arith.constant 10 : index
    %c0_152 = arith.constant 0 : index
    %c0_153 = arith.constant 0 : index
    %280 = vector.load %arg5[%c10_151, %c0_152, %c0_153] : memref<12x1x15xf32, #tpu.memory_space<vmem>>, vector<1x1x15xf32>
    %281 = vector.shape_cast %280 : vector<1x1x15xf32> to vector<1x15xf32>
    %282 = vector.broadcast %281 : vector<1x15xf32> to vector<32x15xf32>
    %283 = arith.addf %279, %282 : vector<32x15xf32>
    %c11 = arith.constant 11 : index
    %c0_154 = arith.constant 0 : index
    %c0_155 = arith.constant 0 : index
    %284 = vector.load %arg4[%c11, %c0_154, %c0_155] : memref<12x30x15xbf16, #tpu.memory_space<vmem>>, vector<1x30x15xbf16>
    %285 = vector.shape_cast %284 : vector<1x30x15xbf16> to vector<30x15xbf16>
    %cst_156 = arith.constant dense<0.000000e+00> : vector<32x15xf32>
    %286 = tpu.matmul %225, %285, %cst_156 {dimension_numbers = #tpu.dot_dimension_numbers<[1], [0], [0], [1], [0, 0, 1, 1], [], []>} : vector<32x30xbf16>, vector<30x15xbf16>, vector<32x15xf32> -> vector<32x15xf32>
    %c11_157 = arith.constant 11 : index
    %c0_158 = arith.constant 0 : index
    %c0_159 = arith.constant 0 : index
    %287 = vector.load %arg5[%c11_157, %c0_158, %c0_159] : memref<12x1x15xf32, #tpu.memory_space<vmem>>, vector<1x1x15xf32>
    %288 = vector.shape_cast %287 : vector<1x1x15xf32> to vector<1x15xf32>
    %289 = vector.broadcast %288 : vector<1x15xf32> to vector<32x15xf32>
    %290 = arith.addf %286, %289 : vector<32x15xf32>
    %291 = arith.truncf %276 : vector<32x15xf32> to vector<32x15xbf16>
    %292 = arith.truncf %283 : vector<32x15xf32> to vector<32x15xbf16>
    %cst_160 = arith.constant dense<0.000000e+00> : vector<32x32xf32>
    %293 = tpu.matmul %291, %292, %cst_160 {dimension_numbers = #tpu.dot_dimension_numbers<[1], [1], [0], [0], [0, 0, 1, 0], [], []>} : vector<32x15xbf16>, vector<32x15xbf16>, vector<32x32xf32> -> vector<32x32xf32>
    %cst_161 = arith.constant 0.258198887 : f32
    %294 = vector.broadcast %cst_161 : f32 to vector<32x32xf32>
    %295 = arith.mulf %293, %294 : vector<32x32xf32>
    %296 = arith.addf %295, %58 : vector<32x32xf32>
    %cst_162 = arith.constant dense<0xFF800000> : vector<32xf32>
    %297 = vector.multi_reduction <maximumf>, %296, %cst_162 [1] : vector<32x32xf32> to vector<32xf32>
    %298 = vector.shape_cast %297 : vector<32xf32> to vector<32x1xf32>
    %299 = vector.broadcast %298 : vector<32x1xf32> to vector<32x32xf32>
    %300 = arith.subf %296, %299 : vector<32x32xf32>
    %301 = math.exp %300 : vector<32x32xf32>
    %cst_163 = arith.constant dense<0.000000e+00> : vector<32xf32>
    %302 = vector.multi_reduction <add>, %301, %cst_163 [1] : vector<32x32xf32> to vector<32xf32>
    %303 = vector.shape_cast %302 : vector<32xf32> to vector<32x1xf32>
    %304 = tpu.reciprocal %303 : vector<32x1xf32> -> vector<32x1xf32>
    %305 = vector.broadcast %304 : vector<32x1xf32> to vector<32x32xf32>
    %306 = arith.mulf %301, %305 : vector<32x32xf32>
    %307 = arith.truncf %306 : vector<32x32xf32> to vector<32x32xbf16>
    %308 = arith.truncf %290 : vector<32x15xf32> to vector<32x15xbf16>
    %cst_164 = arith.constant dense<0.000000e+00> : vector<32x15xf32>
    %309 = tpu.matmul %307, %308, %cst_164 {dimension_numbers = #tpu.dot_dimension_numbers<[1], [0], [0], [1], [0, 0, 1, 1], [], []>} : vector<32x32xbf16>, vector<32x15xbf16>, vector<32x15xf32> -> vector<32x15xf32>
    %310 = arith.truncf %309 : vector<32x15xf32> to vector<32x15xbf16>
    %c3_165 = arith.constant 3 : index
    %c0_166 = arith.constant 0 : index
    %c0_167 = arith.constant 0 : index
    %311 = vector.load %arg6[%c3_165, %c0_166, %c0_167] : memref<4x15x30xbf16, #tpu.memory_space<vmem>>, vector<1x15x30xbf16>
    %312 = vector.shape_cast %311 : vector<1x15x30xbf16> to vector<15x30xbf16>
    %cst_168 = arith.constant dense<0.000000e+00> : vector<32x30xf32>
    %313 = tpu.matmul %310, %312, %cst_168 {dimension_numbers = #tpu.dot_dimension_numbers<[1], [0], [0], [1], [0, 0, 1, 1], [], []>} : vector<32x15xbf16>, vector<15x30xbf16>, vector<32x30xf32> -> vector<32x30xf32>
    %314 = arith.addf %269, %313 : vector<32x30xf32>
    %c6_169 = arith.constant 6 : index
    %c0_170 = arith.constant 0 : index
    %c0_171 = arith.constant 0 : index
    %315 = vector.load %arg9[%c6_169, %c0_170, %c0_171] : memref<12x1x30xf32, #tpu.memory_space<vmem>>, vector<1x1x30xf32>
    %316 = vector.shape_cast %315 : vector<1x1x30xf32> to vector<1x30xf32>
    %317 = vector.broadcast %316 : vector<1x30xf32> to vector<32x30xf32>
    %318 = arith.addf %314, %317 : vector<32x30xf32>
    %319 = arith.addf %224, %318 : vector<32x30xf32>
    %c7_172 = arith.constant 7 : index
    %c0_173 = arith.constant 0 : index
    %c0_174 = arith.constant 0 : index
    %320 = vector.load %arg9[%c7_172, %c0_173, %c0_174] : memref<12x1x30xf32, #tpu.memory_space<vmem>>, vector<1x1x30xf32>
    %321 = vector.shape_cast %320 : vector<1x1x30xf32> to vector<1x30xf32>
    %c8_175 = arith.constant 8 : index
    %c0_176 = arith.constant 0 : index
    %c0_177 = arith.constant 0 : index
    %322 = vector.load %arg9[%c8_175, %c0_176, %c0_177] : memref<12x1x30xf32, #tpu.memory_space<vmem>>, vector<1x1x30xf32>
    %323 = vector.shape_cast %322 : vector<1x1x30xf32> to vector<1x30xf32>
    %cst_178 = arith.constant dense<0.000000e+00> : vector<32xf32>
    %324 = vector.multi_reduction <add>, %319, %cst_178 [1] : vector<32x30xf32> to vector<32xf32>
    %325 = vector.shape_cast %324 : vector<32xf32> to vector<32x1xf32>
    %cst_179 = arith.constant 3.000000e+01 : f32
    %326 = vector.broadcast %cst_179 : f32 to vector<32x1xf32>
    %327 = arith.divf %325, %326 : vector<32x1xf32>
    %328 = vector.broadcast %327 : vector<32x1xf32> to vector<32x30xf32>
    %329 = arith.subf %319, %328 : vector<32x30xf32>
    %330 = arith.mulf %329, %329 : vector<32x30xf32>
    %cst_180 = arith.constant dense<0.000000e+00> : vector<32xf32>
    %331 = vector.multi_reduction <add>, %330, %cst_180 [1] : vector<32x30xf32> to vector<32xf32>
    %332 = vector.shape_cast %331 : vector<32xf32> to vector<32x1xf32>
    %cst_181 = arith.constant 3.000000e+01 : f32
    %333 = vector.broadcast %cst_181 : f32 to vector<32x1xf32>
    %334 = arith.divf %332, %333 : vector<32x1xf32>
    %335 = vector.broadcast %327 : vector<32x1xf32> to vector<32x30xf32>
    %336 = arith.subf %319, %335 : vector<32x30xf32>
    %cst_182 = arith.constant 9.99999974E-6 : f32
    %337 = vector.broadcast %cst_182 : f32 to vector<32x1xf32>
    %338 = arith.addf %334, %337 : vector<32x1xf32>
    %339 = math.rsqrt %338 : vector<32x1xf32>
    %340 = vector.broadcast %339 : vector<32x1xf32> to vector<32x30xf32>
    %341 = arith.mulf %336, %340 : vector<32x30xf32>
    %342 = vector.broadcast %321 : vector<1x30xf32> to vector<32x30xf32>
    %343 = arith.mulf %341, %342 : vector<32x30xf32>
    %344 = vector.broadcast %323 : vector<1x30xf32> to vector<32x30xf32>
    %345 = arith.addf %343, %344 : vector<32x30xf32>
    %346 = arith.truncf %345 : vector<32x30xf32> to vector<32x30xbf16>
    %c1_183 = arith.constant 1 : index
    %c0_184 = arith.constant 0 : index
    %c0_185 = arith.constant 0 : index
    %347 = vector.load %arg7[%c1_183, %c0_184, %c0_185] : memref<2x30x64xbf16, #tpu.memory_space<vmem>>, vector<1x30x64xbf16>
    %348 = vector.shape_cast %347 : vector<1x30x64xbf16> to vector<30x64xbf16>
    %cst_186 = arith.constant dense<0.000000e+00> : vector<32x64xf32>
    %349 = tpu.matmul %346, %348, %cst_186 {dimension_numbers = #tpu.dot_dimension_numbers<[1], [0], [0], [1], [0, 0, 1, 1], [], []>} : vector<32x30xbf16>, vector<30x64xbf16>, vector<32x64xf32> -> vector<32x64xf32>
    %c1_187 = arith.constant 1 : index
    %c0_188 = arith.constant 0 : index
    %c0_189 = arith.constant 0 : index
    %350 = vector.load %arg10[%c1_187, %c0_188, %c0_189] : memref<2x1x64xf32, #tpu.memory_space<vmem>>, vector<1x1x64xf32>
    %351 = vector.shape_cast %350 : vector<1x1x64xf32> to vector<1x64xf32>
    %352 = vector.broadcast %351 : vector<1x64xf32> to vector<32x64xf32>
    %353 = arith.addf %349, %352 : vector<32x64xf32>
    %cst_190 = arith.constant 0.000000e+00 : f32
    %354 = vector.broadcast %cst_190 : f32 to vector<32x64xf32>
    %355 = arith.maximumf %353, %354 : vector<32x64xf32>
    %356 = arith.truncf %355 : vector<32x64xf32> to vector<32x64xbf16>
    %c1_191 = arith.constant 1 : index
    %c0_192 = arith.constant 0 : index
    %c0_193 = arith.constant 0 : index
    %357 = vector.load %arg8[%c1_191, %c0_192, %c0_193] : memref<2x64x30xbf16, #tpu.memory_space<vmem>>, vector<1x64x30xbf16>
    %358 = vector.shape_cast %357 : vector<1x64x30xbf16> to vector<64x30xbf16>
    %cst_194 = arith.constant dense<0.000000e+00> : vector<32x30xf32>
    %359 = tpu.matmul %356, %358, %cst_194 {dimension_numbers = #tpu.dot_dimension_numbers<[1], [0], [0], [1], [0, 0, 1, 1], [], []>} : vector<32x64xbf16>, vector<64x30xbf16>, vector<32x30xf32> -> vector<32x30xf32>
    %c11_195 = arith.constant 11 : index
    %c0_196 = arith.constant 0 : index
    %c0_197 = arith.constant 0 : index
    %360 = vector.load %arg9[%c11_195, %c0_196, %c0_197] : memref<12x1x30xf32, #tpu.memory_space<vmem>>, vector<1x1x30xf32>
    %361 = vector.shape_cast %360 : vector<1x1x30xf32> to vector<1x30xf32>
    %362 = vector.broadcast %361 : vector<1x30xf32> to vector<32x30xf32>
    %363 = arith.addf %359, %362 : vector<32x30xf32>
    %364 = arith.addf %345, %363 : vector<32x30xf32>
    %c9_198 = arith.constant 9 : index
    %c0_199 = arith.constant 0 : index
    %c0_200 = arith.constant 0 : index
    %365 = vector.load %arg9[%c9_198, %c0_199, %c0_200] : memref<12x1x30xf32, #tpu.memory_space<vmem>>, vector<1x1x30xf32>
    %366 = vector.shape_cast %365 : vector<1x1x30xf32> to vector<1x30xf32>
    %c10_201 = arith.constant 10 : index
    %c0_202 = arith.constant 0 : index
    %c0_203 = arith.constant 0 : index
    %367 = vector.load %arg9[%c10_201, %c0_202, %c0_203] : memref<12x1x30xf32, #tpu.memory_space<vmem>>, vector<1x1x30xf32>
    %368 = vector.shape_cast %367 : vector<1x1x30xf32> to vector<1x30xf32>
    %cst_204 = arith.constant dense<0.000000e+00> : vector<32xf32>
    %369 = vector.multi_reduction <add>, %364, %cst_204 [1] : vector<32x30xf32> to vector<32xf32>
    %370 = vector.shape_cast %369 : vector<32xf32> to vector<32x1xf32>
    %cst_205 = arith.constant 3.000000e+01 : f32
    %371 = vector.broadcast %cst_205 : f32 to vector<32x1xf32>
    %372 = arith.divf %370, %371 : vector<32x1xf32>
    %373 = vector.broadcast %372 : vector<32x1xf32> to vector<32x30xf32>
    %374 = arith.subf %364, %373 : vector<32x30xf32>
    %375 = arith.mulf %374, %374 : vector<32x30xf32>
    %cst_206 = arith.constant dense<0.000000e+00> : vector<32xf32>
    %376 = vector.multi_reduction <add>, %375, %cst_206 [1] : vector<32x30xf32> to vector<32xf32>
    %377 = vector.shape_cast %376 : vector<32xf32> to vector<32x1xf32>
    %cst_207 = arith.constant 3.000000e+01 : f32
    %378 = vector.broadcast %cst_207 : f32 to vector<32x1xf32>
    %379 = arith.divf %377, %378 : vector<32x1xf32>
    %380 = vector.broadcast %372 : vector<32x1xf32> to vector<32x30xf32>
    %381 = arith.subf %364, %380 : vector<32x30xf32>
    %cst_208 = arith.constant 9.99999974E-6 : f32
    %382 = vector.broadcast %cst_208 : f32 to vector<32x1xf32>
    %383 = arith.addf %379, %382 : vector<32x1xf32>
    %384 = math.rsqrt %383 : vector<32x1xf32>
    %385 = vector.broadcast %384 : vector<32x1xf32> to vector<32x30xf32>
    %386 = arith.mulf %381, %385 : vector<32x30xf32>
    %387 = vector.broadcast %366 : vector<1x30xf32> to vector<32x30xf32>
    %388 = arith.mulf %386, %387 : vector<32x30xf32>
    %389 = vector.broadcast %368 : vector<1x30xf32> to vector<32x30xf32>
    %390 = arith.addf %388, %389 : vector<32x30xf32>
    %391 = arith.truncf %390 : vector<32x30xf32> to vector<32x30xbf16>
    %c0_209 = arith.constant 0 : index
    %c0_210 = arith.constant 0 : index
    %392 = vector.load %arg12[%c0_209, %c0_210] : memref<30x24xbf16, #tpu.memory_space<vmem>>, vector<30x24xbf16>
    %cst_211 = arith.constant dense<0.000000e+00> : vector<32x24xf32>
    %393 = tpu.matmul %391, %392, %cst_211 {dimension_numbers = #tpu.dot_dimension_numbers<[1], [0], [0], [1], [0, 0, 1, 1], [], []>} : vector<32x30xbf16>, vector<30x24xbf16>, vector<32x24xf32> -> vector<32x24xf32>
    %c0_212 = arith.constant 0 : index
    %c0_213 = arith.constant 0 : index
    %394 = vector.load %arg13[%c0_212, %c0_213] : memref<32x24xf32, #tpu.memory_space<vmem>>, vector<32x24xf32>
    %395 = arith.mulf %393, %394 : vector<32x24xf32>
    %396 = arith.truncf %395 : vector<32x24xf32> to vector<32x24xbf16>
    %c0_214 = arith.constant 0 : index
    %c0_215 = arith.constant 0 : index
    %397 = vector.load %arg14[%c0_214, %c0_215] : memref<24x3xbf16, #tpu.memory_space<vmem>>, vector<24x3xbf16>
    %cst_216 = arith.constant dense<0.000000e+00> : vector<32x3xf32>
    %398 = tpu.matmul %396, %397, %cst_216 {dimension_numbers = #tpu.dot_dimension_numbers<[1], [0], [0], [1], [0, 0, 1, 1], [], []>} : vector<32x24xbf16>, vector<24x3xbf16>, vector<32x3xf32> -> vector<32x3xf32>
    %c0_217 = arith.constant 0 : index
    %c0_218 = arith.constant 0 : index
    %399 = vector.load %arg15[%c0_217, %c0_218] : memref<4x32xbf16, #tpu.memory_space<vmem>>, vector<4x32xbf16>
    %400 = arith.truncf %398 : vector<32x3xf32> to vector<32x3xbf16>
    %cst_219 = arith.constant dense<0.000000e+00> : vector<4x3xf32>
    %401 = tpu.matmul %399, %400, %cst_219 {dimension_numbers = #tpu.dot_dimension_numbers<[1], [0], [0], [1], [0, 0, 1, 1], [], []>} : vector<4x32xbf16>, vector<32x3xbf16>, vector<4x3xf32> -> vector<4x3xf32>
    %c0_220 = arith.constant 0 : index
    %c0_221 = arith.constant 0 : index
    %402 = vector.load %arg16[%c0_220, %c0_221] : memref<1x3xf32, #tpu.memory_space<vmem>>, vector<1x3xf32>
    %403 = vector.broadcast %402 : vector<1x3xf32> to vector<4x3xf32>
    %404 = arith.addf %401, %403 : vector<4x3xf32>
    %c0_222 = arith.constant 0 : index
    %c0_223 = arith.constant 0 : index
    %c0_224 = arith.constant 0 : index
    %405 = vector.load %arg17[%c0_222, %c0_223, %c0_224] : memref<1x4x3xf32, #tpu.memory_space<vmem>>, vector<1x4x3xf32>
    %406 = vector.shape_cast %405 : vector<1x4x3xf32> to vector<4x3xf32>
    %407 = vector.shape_cast %404 : vector<4x3xf32> to vector<1x4x3xf32>
    tpu.vector_store %arg17[%c0_222, %c0_223, %c0_224], %407 {strides = array<i32>} : memref<1x4x3xf32, #tpu.memory_space<vmem>>, vector<1x4x3xf32>,
    return
  }
  func.func @transform_0(%arg0: i32) -> (i32, i32, i32) {
    %c0_i32 = arith.constant 0 : i32
    %c0_i32_0 = arith.constant 0 : i32
    %c0_i32_1 = arith.constant 0 : i32
    return %arg0, %c0_i32, %c0_i32_0 : i32, i32, i32
  }
  func.func @transform_1(%arg0: i32) -> (i32, i32) {
    %c0_i32 = arith.constant 0 : i32
    %c0_i32_0 = arith.constant 0 : i32
    %c0_i32_1 = arith.constant 0 : i32
    return %c0_i32, %c0_i32_0 : i32, i32
  }
  func.func @transform_2(%arg0: i32) -> (i32, i32) {
    %c0_i32 = arith.constant 0 : i32
    %c0_i32_0 = arith.constant 0 : i32
    %c0_i32_1 = arith.constant 0 : i32
    return %c0_i32, %c0_i32_0 : i32, i32
  }
  func.func @transform_3(%arg0: i32) -> (i32, i32, i32) {
    %c0_i32 = arith.constant 0 : i32
    %c0_i32_0 = arith.constant 0 : i32
    %c0_i32_1 = arith.constant 0 : i32
    %c0_i32_2 = arith.constant 0 : i32
    return %c0_i32, %c0_i32_0, %c0_i32_1 : i32, i32, i32
  }
  func.func @transform_4(%arg0: i32) -> (i32, i32, i32) {
    %c0_i32 = arith.constant 0 : i32
    %c0_i32_0 = arith.constant 0 : i32
    %c0_i32_1 = arith.constant 0 : i32
    %c0_i32_2 = arith.constant 0 : i32
    return %c0_i32, %c0_i32_0, %c0_i32_1 : i32, i32, i32
  }
  func.func @transform_5(%arg0: i32) -> (i32, i32, i32) {
    %c0_i32 = arith.constant 0 : i32
    %c0_i32_0 = arith.constant 0 : i32
    %c0_i32_1 = arith.constant 0 : i32
    %c0_i32_2 = arith.constant 0 : i32
    return %c0_i32, %c0_i32_0, %c0_i32_1 : i32, i32, i32
  }
  func.func @transform_6(%arg0: i32) -> (i32, i32, i32) {
    %c0_i32 = arith.constant 0 : i32
    %c0_i32_0 = arith.constant 0 : i32
    %c0_i32_1 = arith.constant 0 : i32
    %c0_i32_2 = arith.constant 0 : i32
    return %c0_i32, %c0_i32_0, %c0_i32_1 : i32, i32, i32
  }
  func.func @transform_7(%arg0: i32) -> (i32, i32, i32) {
    %c0_i32 = arith.constant 0 : i32
    %c0_i32_0 = arith.constant 0 : i32
    %c0_i32_1 = arith.constant 0 : i32
    %c0_i32_2 = arith.constant 0 : i32
    return %c0_i32, %c0_i32_0, %c0_i32_1 : i32, i32, i32
  }
  func.func @transform_8(%arg0: i32) -> (i32, i32, i32) {
    %c0_i32 = arith.constant 0 : i32
    %c0_i32_0 = arith.constant 0 : i32
    %c0_i32_1 = arith.constant 0 : i32
    %c0_i32_2 = arith.constant 0 : i32
    return %c0_i32, %c0_i32_0, %c0_i32_1 : i32, i32, i32
  }
  func.func @transform_9(%arg0: i32) -> (i32, i32, i32) {
    %c0_i32 = arith.constant 0 : i32
    %c0_i32_0 = arith.constant 0 : i32
    %c0_i32_1 = arith.constant 0 : i32
    %c0_i32_2 = arith.constant 0 : i32
    return %c0_i32, %c0_i32_0, %c0_i32_1 : i32, i32, i32
  }
  func.func @transform_10(%arg0: i32) -> (i32, i32) {
    %c0_i32 = arith.constant 0 : i32
    %c0_i32_0 = arith.constant 0 : i32
    %c0_i32_1 = arith.constant 0 : i32
    return %c0_i32, %c0_i32_0 : i32, i32
  }
  func.func @transform_11(%arg0: i32) -> (i32, i32) {
    %c0_i32 = arith.constant 0 : i32
    %c0_i32_0 = arith.constant 0 : i32
    %c0_i32_1 = arith.constant 0 : i32
    return %c0_i32, %c0_i32_0 : i32, i32
  }
  func.func @transform_12(%arg0: i32) -> (i32, i32) {
    %c0_i32 = arith.constant 0 : i32
    %c0_i32_0 = arith.constant 0 : i32
    %c0_i32_1 = arith.constant 0 : i32
    return %c0_i32, %c0_i32_0 : i32, i32
  }
  func.func @transform_13(%arg0: i32) -> (i32, i32) {
    %c0_i32 = arith.constant 0 : i32
    %c0_i32_0 = arith.constant 0 : i32
    %c0_i32_1 = arith.constant 0 : i32
    return %c0_i32, %c0_i32_0 : i32, i32
  }
  func.func @transform_14(%arg0: i32) -> (i32, i32) {
    %c0_i32 = arith.constant 0 : i32
    %c0_i32_0 = arith.constant 0 : i32
    %c0_i32_1 = arith.constant 0 : i32
    return %c0_i32, %c0_i32_0 : i32, i32
  }
  func.func @transform_15(%arg0: i32) -> (i32, i32) {
    %c0_i32 = arith.constant 0 : i32
    %c0_i32_0 = arith.constant 0 : i32
    %c0_i32_1 = arith.constant 0 : i32
    return %c0_i32, %c0_i32_0 : i32, i32
  }
  func.func @transform_16(%arg0: i32) -> (i32, i32, i32) {
    %c0_i32 = arith.constant 0 : i32
    %c0_i32_0 = arith.constant 0 : i32
    %c0_i32_1 = arith.constant 0 : i32
    return %arg0, %c0_i32, %c0_i32_0 : i32, i32, i32
  }
}

</mosaic_0001>

<llo_original>
// kernel: _lambda_.1
$region0: #{_lambda_.1}
  #allocation0 [shape = 'u32[]', space=smem, size = 0x4, offset = 0x4, fixed_abs, tag = 'smem constant byte address 0x4 - core index']
  #allocation1 [shape = 'u32[144,128]{1,0:T(1,128)}', space=vmem, size = 0x12000, scoped, tag = 'internal scratch']
  %s0 = inlined_call_operand.vmem [shape: f32[2,32,9], index: 0, kind: input, shape index: {}]
  %s1 = inlined_call_operand.vmem [shape: bf16[33,30], index: 1, kind: input, shape index: {}]
  %s2 = inlined_call_operand.vmem [shape: bf16[9,30], index: 2, kind: input, shape index: {}]
  %s3 = inlined_call_operand.vmem [shape: bf16[12,30,15], index: 3, kind: input, shape index: {}]
  %s4 = inlined_call_operand.vmem [shape: f32[12,1,15], index: 4, kind: input, shape index: {}]
  %s5 = inlined_call_operand.vmem [shape: bf16[4,15,30], index: 5, kind: input, shape index: {}]
  %s6 = inlined_call_operand.vmem [shape: bf16[2,30,64], index: 6, kind: input, shape index: {}]
  %s7 = inlined_call_operand.vmem [shape: bf16[2,64,30], index: 7, kind: input, shape index: {}]
  %s8 = inlined_call_operand.vmem [shape: f32[12,1,30], index: 8, kind: input, shape index: {}]
  %s9 = inlined_call_operand.vmem [shape: f32[2,1,64], index: 9, kind: input, shape index: {}]
  %s10 = inlined_call_operand.vmem [shape: f32[32,32], index: 10, kind: input, shape index: {}]
  %s11 = inlined_call_operand.vmem [shape: bf16[30,24], index: 11, kind: input, shape index: {}]
  %s12 = inlined_call_operand.vmem [shape: f32[32,24], index: 12, kind: input, shape index: {}]
  %s13 = inlined_call_operand.vmem [shape: bf16[24,3], index: 13, kind: input, shape index: {}]
  %s14 = inlined_call_operand.vmem [shape: bf16[4,32], index: 14, kind: input, shape index: {}]
  %s15 = inlined_call_operand.vmem [shape: f32[1,3], index: 15, kind: input, shape index: {}]
  %s16 = inlined_call_operand.vmem [shape: f32[2,4,3], index: 16, kind: output, shape index: {}]
  %s17 = sld [smem:[#allocation0]]
  $region97: #{_lambda_.1} parent=0
    _
  %s19 = ssub.s32 1, %s17
  %s20 = scalar_select 0, %s19, %s17
  loop: start=0, step=1, limit=4
  $region2: #{_lambda_.1} parent=0 // loop_pre_header
    _
  $region3: #{_lambda_.1} parent=0 // loop_header
    %s22 = sphi 0, %s26
    %p23 = scmp.ge.s32.totalorder %s22, 4
    %s32 = sphi 0, %s34
    %s35 = sphi 0, %s32
    %s36 = sphi 0, %s35
    %s52 = sphi 0, %s36
    %s56 = sphi 0, %s56
    %s58 = sphi 0, %s56
    %s59 = sphi 0, %s58
    %s73 = sphi 0, %s59
    %s77 = sphi 0, %s77
    %s79 = sphi 0, %s77
    %s80 = sphi 0, %s79
    %s94 = sphi 0, %s80
    %s98 = sphi 0, %s98
    %s100 = sphi 0, %s98
    %s101 = sphi 0, %s100
    %s115 = sphi 0, %s101
    %s119 = sphi 0, %s119
    %s121 = sphi 0, %s119
    %s122 = sphi 0, %s121
    %s136 = sphi 0, %s122
    %s140 = sphi 0, %s140
    %s142 = sphi 0, %s140
    %s143 = sphi 0, %s142
    %s157 = sphi 0, %s143
    %s161 = sphi 0, %s161
    %s163 = sphi 0, %s161
    %s164 = sphi 0, %s163
    %s178 = sphi 0, %s164
    %s182 = sphi 0, %s182
    %s184 = sphi 0, %s182
    %s185 = sphi 0, %s184
    %s199 = sphi 0, %s185
    %s203 = sphi 0, %s203
    %s205 = sphi 0, %s203
    %s206 = sphi 0, %s205
    %s220 = sphi 0, %s206
    %s224 = sphi 0, %s224
    %s226 = sphi 0, %s224
    %s227 = sphi 0, %s226
    %s241 = sphi 0, %s227
    %s245 = sphi 0, %s245
    %s247 = sphi 0, %s245
    %s248 = sphi 0, %s247
    %s262 = sphi 0, %s248
    %s266 = sphi 0, %s266
    %s268 = sphi 0, %s266
    %s269 = sphi 0, %s268
    %s283 = sphi 0, %s269
    %s287 = sphi 0, %s287
    %s289 = sphi 0, %s287
    %s290 = sphi 0, %s289
    %s304 = sphi 0, %s290
    %s308 = sphi 0, %s308
    %s310 = sphi 0, %s308
    %s311 = sphi 0, %s310
    %s325 = sphi 0, %s311
    %s329 = sphi 0, %s329
    %s331 = sphi 0, %s329
    %s332 = sphi 0, %s331
    %s346 = sphi 0, %s332
    %s350 = sphi 0, %s350
    %s352 = sphi 0, %s350
    %s353 = sphi 0, %s352
    %s367 = sphi 0, %s353
    %s373 = sphi 0, %s375
    %s376 = sphi 0, %s373
    %s377 = sphi 0, %s376
    %s393 = sphi 0, %s377
  $region4: #{_lambda_.1} parent=0 // loop_header_branch
    %25 = sbr.rel (%p23) target = $region8
  $region5: #{_lambda_.1} parent=0 // loop_body
    %s27 = ssub.s32 %s22, 1
    %s28 = ssub.s32 %s22, 2
    %s29 = sadd.s32 %s22, 1
    %s30 = ssub.s32 %s22, %s29
    %p31 = scmp.eq.s32.totalorder %s30, 0
    %s33 = sadd.s32 %s32, 1
    %s34 = scalar_select %p31, %s32, %s33
    %p37 = pneg %p31
    %p38 = scmp.eq.s32.totalorder %s22, 1
    %p39 = por %p37, %p38
    %p40 = scmp.ne.s32.totalorder %s32, %s35
    %p41 = scmp.eq.s32.totalorder %s22, 0
    %p42 = por %p40, %p41
    %p43 = scmp.ne.s32.totalorder %s32, %s35
    %p44 = scmp.eq.s32.totalorder %s27, 1
    %p45 = por %p43, %p44
    %p46 = scmp.ne.s32.totalorder %s35, %s36
    %p47 = scmp.eq.s32.totalorder %s27, 0
    %p48 = por %p46, %p47
    %p49 = scmp.ne.s32.totalorder %s35, %s36
    %p50 = scmp.eq.s32.totalorder %s28, 1
    %p51 = por %p49, %p50
    %p53 = scmp.ne.s32.totalorder %s36, %s52
    %p54 = scmp.eq.s32.totalorder %s28, 0
    %p55 = por %p53, %p54
    %s57 = sadd.s32 %s56, 1
    %p60 = scmp.eq.s32.totalorder %s22, 1
    %p61 = scmp.ne.s32.totalorder %s56, %s58
    %p62 = scmp.eq.s32.totalorder %s22, 0
    %p63 = por %p61, %p62
    %p64 = scmp.ne.s32.totalorder %s56, %s58
    %p65 = scmp.eq.s32.totalorder %s27, 1
    %p66 = por %p64, %p65
    %p67 = scmp.ne.s32.totalorder %s58, %s59
    %p68 = scmp.eq.s32.totalorder %s27, 0
    %p69 = por %p67, %p68
    %p70 = scmp.ne.s32.totalorder %s58, %s59
    %p71 = scmp.eq.s32.totalorder %s28, 1
    %p72 = por %p70, %p71
    %p74 = scmp.ne.s32.totalorder %s59, %s73
    %p75 = scmp.eq.s32.totalorder %s28, 0
    %p76 = por %p74, %p75
    %s78 = sadd.s32 %s77, 1
    %p81 = scmp.eq.s32.totalorder %s22, 1
    %p82 = scmp.ne.s32.totalorder %s77, %s79
    %p83 = scmp.eq.s32.totalorder %s22, 0
    %p84 = por %p82, %p83
    %p85 = scmp.ne.s32.totalorder %s77, %s79
    %p86 = scmp.eq.s32.totalorder %s27, 1
    %p87 = por %p85, %p86
    %p88 = scmp.ne.s32.totalorder %s79, %s80
    %p89 = scmp.eq.s32.totalorder %s27, 0
    %p90 = por %p88, %p89
    %p91 = scmp.ne.s32.totalorder %s79, %s80
    %p92 = scmp.eq.s32.totalorder %s28, 1
    %p93 = por %p91, %p92
    %p95 = scmp.ne.s32.totalorder %s80, %s94
    %p96 = scmp.eq.s32.totalorder %s28, 0
    %p97 = por %p95, %p96
    %s99 = sadd.s32 %s98, 1
    %p102 = scmp.eq.s32.totalorder %s22, 1
    %p103 = scmp.ne.s32.totalorder %s98, %s100
    %p104 = scmp.eq.s32.totalorder %s22, 0
    %p105 = por %p103, %p104
    %p106 = scmp.ne.s32.totalorder %s98, %s100
    %p107 = scmp.eq.s32.totalorder %s27, 1
    %p108 = por %p106, %p107
    %p109 = scmp.ne.s32.totalorder %s100, %s101
    %p110 = scmp.eq.s32.totalorder %s27, 0
    %p111 = por %p109, %p110
    %p112 = scmp.ne.s32.totalorder %s100, %s101
    %p113 = scmp.eq.s32.totalorder %s28, 1
    %p114 = por %p112, %p113
    %p116 = scmp.ne.s32.totalorder %s101, %s115
    %p117 = scmp.eq.s32.totalorder %s28, 0
    %p118 = por %p116, %p117
    %s120 = sadd.s32 %s119, 1
    %p123 = scmp.eq.s32.totalorder %s22, 1
    %p124 = scmp.ne.s32.totalorder %s119, %s121
    %p125 = scmp.eq.s32.totalorder %s22, 0
    %p126 = por %p124, %p125
    %p127 = scmp.ne.s32.totalorder %s119, %s121
    %p128 = scmp.eq.s32.totalorder %s27, 1
    %p129 = por %p127, %p128
    %p130 = scmp.ne.s32.totalorder %s121, %s122
    %p131 = scmp.eq.s32.totalorder %s27, 0
    %p132 = por %p130, %p131
    %p133 = scmp.ne.s32.totalorder %s121, %s122
    %p134 = scmp.eq.s32.totalorder %s28, 1
    %p135 = por %p133, %p134
    %p137 = scmp.ne.s32.totalorder %s122, %s136
    %p138 = scmp.eq.s32.totalorder %s28, 0
    %p139 = por %p137, %p138
    %s141 = sadd.s32 %s140, 1
    %p144 = scmp.eq.s32.totalorder %s22, 1
    %p145 = scmp.ne.s32.totalorder %s140, %s142
    %p146 = scmp.eq.s32.totalorder %s22, 0
    %p147 = por %p145, %p146
    %p148 = scmp.ne.s32.totalorder %s140, %s142
    %p149 = scmp.eq.s32.totalorder %s27, 1
    %p150 = por %p148, %p149
    %p151 = scmp.ne.s32.totalorder %s142, %s143
    %p152 = scmp.eq.s32.totalorder %s27, 0
    %p153 = por %p151, %p152
    %p154 = scmp.ne.s32.totalorder %s142, %s143
    %p155 = scmp.eq.s32.totalorder %s28, 1
    %p156 = por %p154, %p155
    %p158 = scmp.ne.s32.totalorder %s143, %s157
    %p159 = scmp.eq.s32.totalorder %s28, 0
    %p160 = por %p158, %p159
    %s162 = sadd.s32 %s161, 1
    %p165 = scmp.eq.s32.totalorder %s22, 1
    %p166 = scmp.ne.s32.totalorder %s161, %s163
    %p167 = scmp.eq.s32.totalorder %s22, 0
    %p168 = por %p166, %p167
    %p169 = scmp.ne.s32.totalorder %s161, %s163
    %p170 = scmp.eq.s32.totalorder %s27, 1
    %p171 = por %p169, %p170
    %p172 = scmp.ne.s32.totalorder %s163, %s164
    %p173 = scmp.eq.s32.totalorder %s27, 0
    %p174 = por %p172, %p173
    %p175 = scmp.ne.s32.totalorder %s163, %s164
    %p176 = scmp.eq.s32.totalorder %s28, 1
    %p177 = por %p175, %p176
    %p179 = scmp.ne.s32.totalorder %s164, %s178
    %p180 = scmp.eq.s32.totalorder %s28, 0
    %p181 = por %p179, %p180
    %s183 = sadd.s32 %s182, 1
    %p186 = scmp.eq.s32.totalorder %s22, 1
    %p187 = scmp.ne.s32.totalorder %s182, %s184
    %p188 = scmp.eq.s32.totalorder %s22, 0
    %p189 = por %p187, %p188
    %p190 = scmp.ne.s32.totalorder %s182, %s184
    %p191 = scmp.eq.s32.totalorder %s27, 1
    %p192 = por %p190, %p191
    %p193 = scmp.ne.s32.totalorder %s184, %s185
    %p194 = scmp.eq.s32.totalorder %s27, 0
    %p195 = por %p193, %p194
    %p196 = scmp.ne.s32.totalorder %s184, %s185
    %p197 = scmp.eq.s32.totalorder %s28, 1
    %p198 = por %p196, %p197
    %p200 = scmp.ne.s32.totalorder %s185, %s199
    %p201 = scmp.eq.s32.totalorder %s28, 0
    %p202 = por %p200, %p201
    %s204 = sadd.s32 %s203, 1
    %p207 = scmp.eq.s32.totalorder %s22, 1
    %p208 = scmp.ne.s32.totalorder %s203, %s205
    %p209 = scmp.eq.s32.totalorder %s22, 0
    %p210 = por %p208, %p209
    %p211 = scmp.ne.s32.totalorder %s203, %s205
    %p212 = scmp.eq.s32.totalorder %s27, 1
    %p213 = por %p211, %p212
    %p214 = scmp.ne.s32.totalorder %s205, %s206
    %p215 = scmp.eq.s32.totalorder %s27, 0
    %p216 = por %p214, %p215
    %p217 = scmp.ne.s32.totalorder %s205, %s206
    %p218 = scmp.eq.s32.totalorder %s28, 1
    %p219 = por %p217, %p218
    %p221 = scmp.ne.s32.totalorder %s206, %s220
    %p222 = scmp.eq.s32.totalorder %s28, 0
    %p223 = por %p221, %p222
    %s225 = sadd.s32 %s224, 1
    %p228 = scmp.eq.s32.totalorder %s22, 1
    %p229 = scmp.ne.s32.totalorder %s224, %s226
    %p230 = scmp.eq.s32.totalorder %s22, 0
    %p231 = por %p229, %p230
    %p232 = scmp.ne.s32.totalorder %s224, %s226
    %p233 = scmp.eq.s32.totalorder %s27, 1
    %p234 = por %p232, %p233
    %p235 = scmp.ne.s32.totalorder %s226, %s227
    %p236 = scmp.eq.s32.totalorder %s27, 0
    %p237 = por %p235, %p236
    %p238 = scmp.ne.s32.totalorder %s226, %s227
    %p239 = scmp.eq.s32.totalorder %s28, 1
    %p240 = por %p238, %p239
    %p242 = scmp.ne.s32.totalorder %s227, %s241
    %p243 = scmp.eq.s32.totalorder %s28, 0
    %p244 = por %p242, %p243
    %s246 = sadd.s32 %s245, 1
    %p249 = scmp.eq.s32.totalorder %s22, 1
    %p250 = scmp.ne.s32.totalorder %s245, %s247
    %p251 = scmp.eq.s32.totalorder %s22, 0
    %p252 = por %p250, %p251
    %p253 = scmp.ne.s32.totalorder %s245, %s247
    %p254 = scmp.eq.s32.totalorder %s27, 1
    %p255 = por %p253, %p254
    %p256 = scmp.ne.s32.totalorder %s247, %s248
    %p257 = scmp.eq.s32.totalorder %s27, 0
    %p258 = por %p256, %p257
    %p259 = scmp.ne.s32.totalorder %s247, %s248
    %p260 = scmp.eq.s32.totalorder %s28, 1
    %p261 = por %p259, %p260
    %p263 = scmp.ne.s32.totalorder %s248, %s262
    %p264 = scmp.eq.s32.totalorder %s28, 0
    %p265 = por %p263, %p264
    %s267 = sadd.s32 %s266, 1
    %p270 = scmp.eq.s32.totalorder %s22, 1
    %p271 = scmp.ne.s32.totalorder %s266, %s268
    %p272 = scmp.eq.s32.totalorder %s22, 0
    %p273 = por %p271, %p272
    %p274 = scmp.ne.s32.totalorder %s266, %s268
    %p275 = scmp.eq.s32.totalorder %s27, 1
    %p276 = por %p274, %p275
    %p277 = scmp.ne.s32.totalorder %s268, %s269
    %p278 = scmp.eq.s32.totalorder %s27, 0
    %p279 = por %p277, %p278
    %p280 = scmp.ne.s32.totalorder %s268, %s269
    %p281 = scmp.eq.s32.totalorder %s28, 1
    %p282 = por %p280, %p281
    %p284 = scmp.ne.s32.totalorder %s269, %s283
    %p285 = scmp.eq.s32.totalorder %s28, 0
    %p286 = por %p284, %p285
    %s288 = sadd.s32 %s287, 1
    %p291 = scmp.eq.s32.totalorder %s22, 1
    %p292 = scmp.ne.s32.totalorder %s287, %s289
    %p293 = scmp.eq.s32.totalorder %s22, 0
    %p294 = por %p292, %p293
    %p295 = scmp.ne.s32.totalorder %s287, %s289
    %p296 = scmp.eq.s32.totalorder %s27, 1
    %p297 = por %p295, %p296
    %p298 = scmp.ne.s32.totalorder %s289, %s290
    %p299 = scmp.eq.s32.totalorder %s27, 0
    %p300 = por %p298, %p299
    %p301 = scmp.ne.s32.totalorder %s289, %s290
    %p302 = scmp.eq.s32.totalorder %s28, 1
    %p303 = por %p301, %p302
    %p305 = scmp.ne.s32.totalorder %s290, %s304
    %p306 = scmp.eq.s32.totalorder %s28, 0
    %p307 = por %p305, %p306
    %s309 = sadd.s32 %s308, 1
    %p312 = scmp.eq.s32.totalorder %s22, 1
    %p313 = scmp.ne.s32.totalorder %s308, %s310
    %p314 = scmp.eq.s32.totalorder %s22, 0
    %p315 = por %p313, %p314
    %p316 = scmp.ne.s32.totalorder %s308, %s310
    %p317 = scmp.eq.s32.totalorder %s27, 1
    %p318 = por %p316, %p317
    %p319 = scmp.ne.s32.totalorder %s310, %s311
    %p320 = scmp.eq.s32.totalorder %s27, 0
    %p321 = por %p319, %p320
    %p322 = scmp.ne.s32.totalorder %s310, %s311
    %p323 = scmp.eq.s32.totalorder %s28, 1
    %p324 = por %p322, %p323
    %p326 = scmp.ne.s32.totalorder %s311, %s325
    %p327 = scmp.eq.s32.totalorder %s28, 0
    %p328 = por %p326, %p327
    %s330 = sadd.s32 %s329, 1
    %p333 = scmp.eq.s32.totalorder %s22, 1
    %p334 = scmp.ne.s32.totalorder %s329, %s331
    %p335 = scmp.eq.s32.totalorder %s22, 0
    %p336 = por %p334, %p335
    %p337 = scmp.ne.s32.totalorder %s329, %s331
    %p338 = scmp.eq.s32.totalorder %s27, 1
    %p339 = por %p337, %p338
    %p340 = scmp.ne.s32.totalorder %s331, %s332
    %p341 = scmp.eq.s32.totalorder %s27, 0
    %p342 = por %p340, %p341
    %p343 = scmp.ne.s32.totalorder %s331, %s332
    %p344 = scmp.eq.s32.totalorder %s28, 1
    %p345 = por %p343, %p344
    %p347 = scmp.ne.s32.totalorder %s332, %s346
    %p348 = scmp.eq.s32.totalorder %s28, 0
    %p349 = por %p347, %p348
    %s351 = sadd.s32 %s350, 1
    %p354 = scmp.eq.s32.totalorder %s22, 1
    %p355 = scmp.ne.s32.totalorder %s350, %s352
    %p356 = scmp.eq.s32.totalorder %s22, 0
    %p357 = por %p355, %p356
    %p358 = scmp.ne.s32.totalorder %s350, %s352
    %p359 = scmp.eq.s32.totalorder %s27, 1
    %p360 = por %p358, %p359
    %p361 = scmp.ne.s32.totalorder %s352, %s353
    %p362 = scmp.eq.s32.totalorder %s27, 0
    %p363 = por %p361, %p362
    %p364 = scmp.ne.s32.totalorder %s352, %s353
    %p365 = scmp.eq.s32.totalorder %s28, 1
    %p366 = por %p364, %p365
    %p368 = scmp.ne.s32.totalorder %s353, %s367
    %p369 = scmp.eq.s32.totalorder %s28, 0
    %p370 = por %p368, %p369
    %s371 = ssub.s32 %s22, %s29
    %p372 = scmp.eq.s32.totalorder %s371, 0
    %s374 = sadd.s32 %s373, 1
    %s375 = scalar_select %p372, %s373, %s374
    %p378 = pneg %p372
    %p379 = scmp.eq.s32.totalorder %s22, 1
    %p380 = por %p378, %p379
    %p381 = scmp.ne.s32.totalorder %s373, %s376
    %p382 = scmp.eq.s32.totalorder %s22, 0
    %p383 = por %p381, %p382
    %p384 = scmp.ne.s32.totalorder %s373, %s376
    %p385 = scmp.eq.s32.totalorder %s27, 1
    %p386 = por %p384, %p385
    %p387 = scmp.ne.s32.totalorder %s376, %s377
    %p388 = scmp.eq.s32.totalorder %s27, 0
    %p389 = por %p387, %p388
    %p390 = scmp.ne.s32.totalorder %s376, %s377
    %p391 = scmp.eq.s32.totalorder %s28, 1
    %p392 = por %p390, %p391
    %p394 = scmp.ne.s32.totalorder %s377, %s393
    %p395 = scmp.eq.s32.totalorder %s28, 0
    %p396 = por %p394, %p395
    %p397 = scmp.le.s32.totalorder 1, %s22
    %p398 = scmp.lt.s32.totalorder %s22, 3
    %p399 = pnand %p397, %p398
    %p400 = pneg %p399
    // Predicated region
    $region9: #{_lambda_.1} parent=5 // pred_check
      _
    $region10: #{_lambda_.1} parent=5 // pred_check_branch
      %402 = sbr.rel (%p399) target = $region12
    $region11: #{_lambda_.1} parent=5 // pred_region
      %s403 = ssub.s32 %s22, 1
      // Predicated region
      $region13: #{_lambda_.1} parent=11 // pred_check
        %p404 = pneg %p69
      $region14: #{_lambda_.1} parent=11 // pred_check_branch
        %406 = sbr.rel (%p404) target = $region16
      $region15: #{_lambda_.1} parent=11 // pred_region
        _
      $region16: #{_lambda_.1} parent=11 // pred_fallthru
        _
      // Predicated region
      $region17: #{_lambda_.1} parent=11 // pred_check
        %p407 = pneg %p90
      $region18: #{_lambda_.1} parent=11 // pred_check_branch
        %409 = sbr.rel (%p407) target = $region20
      $region19: #{_lambda_.1} parent=11 // pred_region
        _
      $region20: #{_lambda_.1} parent=11 // pred_fallthru
        _
      // Predicated region
      $region21: #{_lambda_.1} parent=11 // pred_check
        %p410 = pneg %p111
      $region22: #{_lambda_.1} parent=11 // pred_check_branch
        %412 = sbr.rel (%p410) target = $region24
      $region23: #{_lambda_.1} parent=11 // pred_region
        _
      $region24: #{_lambda_.1} parent=11 // pred_fallthru
        _
      // Predicated region
      $region25: #{_lambda_.1} parent=11 // pred_check
        %p413 = pneg %p132
      $region26: #{_lambda_.1} parent=11 // pred_check_branch
        %415 = sbr.rel (%p413) target = $region28
      $region27: #{_lambda_.1} parent=11 // pred_region
        _
      $region28: #{_lambda_.1} parent=11 // pred_fallthru
        _
      // Predicated region
      $region29: #{_lambda_.1} parent=11 // pred_check
        %p416 = pneg %p153
      $region30: #{_lambda_.1} parent=11 // pred_check_branch
        %418 = sbr.rel (%p416) target = $region32
      $region31: #{_lambda_.1} parent=11 // pred_region
        _
      $region32: #{_lambda_.1} parent=11 // pred_fallthru
        _
      // Predicated region
      $region33: #{_lambda_.1} parent=11 // pred_check
        %p419 = pneg %p174
      $region34: #{_lambda_.1} parent=11 // pred_check_branch
        %421 = sbr.rel (%p419) target = $region36
      $region35: #{_lambda_.1} parent=11 // pred_region
        _
      $region36: #{_lambda_.1} parent=11 // pred_fallthru
        _
      // Predicated region
      $region37: #{_lambda_.1} parent=11 // pred_check
        %p422 = pneg %p195
      $region38: #{_lambda_.1} parent=11 // pred_check_branch
        %424 = sbr.rel (%p422) target = $region40
      $region39: #{_lambda_.1} parent=11 // pred_region
        _
      $region40: #{_lambda_.1} parent=11 // pred_fallthru
        _
      // Predicated region
      $region41: #{_lambda_.1} parent=11 // pred_check
        %p425 = pneg %p216
      $region42: #{_lambda_.1} parent=11 // pred_check_branch
        %427 = sbr.rel (%p425) target = $region44
      $region43: #{_lambda_.1} parent=11 // pred_region
        _
      $region44: #{_lambda_.1} parent=11 // pred_fallthru
        _
      // Predicated region
      $region45: #{_lambda_.1} parent=11 // pred_check
        %p428 = pneg %p237
      $region46: #{_lambda_.1} parent=11 // pred_check_branch
        %430 = sbr.rel (%p428) target = $region48
      $region47: #{_lambda_.1} parent=11 // pred_region
        _
      $region48: #{_lambda_.1} parent=11 // pred_fallthru
        _
      // Predicated region
      $region49: #{_lambda_.1} parent=11 // pred_check
        %p431 = pneg %p258
      $region50: #{_lambda_.1} parent=11 // pred_check_branch
        %433 = sbr.rel (%p431) target = $region52
      $region51: #{_lambda_.1} parent=11 // pred_region
        _
      $region52: #{_lambda_.1} parent=11 // pred_fallthru
        _
      // Predicated region
      $region53: #{_lambda_.1} parent=11 // pred_check
        %p434 = pneg %p279
      $region54: #{_lambda_.1} parent=11 // pred_check_branch
        %436 = sbr.rel (%p434) target = $region56
      $region55: #{_lambda_.1} parent=11 // pred_region
        _
      $region56: #{_lambda_.1} parent=11 // pred_fallthru
        _
      // Predicated region
      $region57: #{_lambda_.1} parent=11 // pred_check
        %p437 = pneg %p300
      $region58: #{_lambda_.1} parent=11 // pred_check_branch
        %439 = sbr.rel (%p437) target = $region60
      $region59: #{_lambda_.1} parent=11 // pred_region
        _
      $region60: #{_lambda_.1} parent=11 // pred_fallthru
        _
      // Predicated region
      $region61: #{_lambda_.1} parent=11 // pred_check
        %p440 = pneg %p321
      $region62: #{_lambda_.1} parent=11 // pred_check_branch
        %442 = sbr.rel (%p440) target = $region64
      $region63: #{_lambda_.1} parent=11 // pred_region
        _
      $region64: #{_lambda_.1} parent=11 // pred_fallthru
        _
      // Predicated region
      $region65: #{_lambda_.1} parent=11 // pred_check
        %p443 = pneg %p342
      $region66: #{_lambda_.1} parent=11 // pred_check_branch
        %445 = sbr.rel (%p443) target = $region68
      $region67: #{_lambda_.1} parent=11 // pred_region
        _
      $region68: #{_lambda_.1} parent=11 // pred_fallthru
        _
      // Predicated region
      $region69: #{_lambda_.1} parent=11 // pred_check
        %p446 = pneg %p363
      $region70: #{_lambda_.1} parent=11 // pred_check_branch
        %448 = sbr.rel (%p446) target = $region72
      $region71: #{_lambda_.1} parent=11 // pred_region
        _
      $region72: #{_lambda_.1} parent=11 // pred_fallthru
        _
    $region12: #{_lambda_.1} parent=5 // pred_fallthru
      _
    %p449 = scmp.lt.s32.totalorder %s22, 2
    // Predicated region
    $region73: #{_lambda_.1} parent=5 // pred_check
      %p450 = pneg %p449
    $region74: #{_lambda_.1} parent=5 // pred_check_branch
      %452 = sbr.rel (%p450) target = $region76
    $region75: #{_lambda_.1} parent=5 // pred_region
      // Predicated region
      $region77: #{_lambda_.1} parent=75 // pred_check
        %p453 = pneg %p42
      $region78: #{_lambda_.1} parent=75 // pred_check_branch
        %455 = sbr.rel (%p453) target = $region80
      $region79: #{_lambda_.1} parent=75 // pred_region
        %p456 = scmp.lt.s32.totalorder %s22, 1
        %s457 = scalar_select %p456, %s22, 1
        %s458 = smul.addr %s457, 4
        %s459 = smul.addr %s458, 8
        %s460 = scalar_lea.vmem %s0, %s459
      $region80: #{_lambda_.1} parent=75 // pred_fallthru
        _
    $region76: #{_lambda_.1} parent=5 // pred_fallthru
      _
    %p461 = scmp.le.s32.totalorder 1, %s22
    %p462 = scmp.lt.s32.totalorder %s22, 3
    %p463 = pnand %p461, %p462
    %p464 = pneg %p463
    // Predicated region
    $region81: #{_lambda_.1} parent=5 // pred_check
      _
    $region82: #{_lambda_.1} parent=5 // pred_check_branch
      %466 = sbr.rel (%p463) target = $region84
    $region83: #{_lambda_.1} parent=5 // pred_region
      %s467 = ssub.s32 %s22, 1
      %p468 = scmp.lt.s32.totalorder %s27, 1
      %s469 = scalar_select %p468, %s27, 1
      %s470 = smul.addr %s469, 4
      %s471 = smul.addr %s470, 8
      %s472 = scalar_lea.vmem %s0, %s471
      %p473 = pneg %p48
      %p474 = pneg %p45
      %p475 = pneg %p69
      %p476 = pneg %p66
      %p477 = pneg %p90
      %p478 = pneg %p87
      %p479 = pneg %p111
      %p480 = pneg %p108
      %p481 = pneg %p132
      %p482 = pneg %p129
      %p483 = pneg %p153
      %p484 = pneg %p150
      %p485 = pneg %p174
      %p486 = pneg %p171
      %p487 = pneg %p195
      %p488 = pneg %p192
      %p489 = pneg %p216
      %p490 = pneg %p213
      %p491 = pneg %p237
      %p492 = pneg %p234
      %p493 = pneg %p258
      %p494 = pneg %p255
      %p495 = pneg %p279
      %p496 = pneg %p276
      %p497 = pneg %p300
      %p498 = pneg %p297
      %p499 = pneg %p321
      %p500 = pneg %p318
      %p501 = pneg %p342
      %p502 = pneg %p339
      %p503 = pneg %p363
      %p504 = pneg %p360
      %p505 = pneg %p389
      %p506 = pneg %p386
      %p507 = scmp.lt.s32.totalorder %s27, 1
      %s508 = scalar_select %p507, %s27, 1
      %s509 = smul.addr %s508, 4
      %s510 = scalar_lea.vmem %s16, %s509
      %p511 = scmp.lt.s32.totalorder %s27, 1
      %s512 = scalar_select %p511, %s27, 1
      %s513 = smul.addr %s512, 4
      %s514 = smul.addr %s513, 8
      %s515 = scalar_lea.vmem %s0, %s514
      %p516 = scmp.lt.s32.totalorder %s27, 1
      %s517 = scalar_select %p516, %s27, 1
      %s518 = smul.addr %s517, 4
      %s519 = scalar_lea.vmem %s16, %s518
      %v521 = vld [vmem:[%s515] sm:$0xff]
      %v522 = vld [vmem:[%s515 + $0x8] sm:$0xff]
      %v523 = vld [vmem:[%s515 + $0x10] sm:$0xff]
      %v524 = vld [vmem:[%s515 + $0x18] sm:$0xff]
      %v525 = vlaneseq
      %v526 = vshrl.u32 %v525, 7
      %v527 = vadd.s32 %v526, 8
      %v528 = vadd.s32 %v526, 16
      %v529 = vadd.s32 %v526, 24
      %v530 = vcvt.s32.f32 %v526
      %v531 = vcvt.s32.f32 %v527
      %v532 = vcvt.s32.f32 %v528
      %v533 = vcvt.s32.f32 %v529
      %v534 = vrcp.pop 8.0
      %v535 = vmul.f32 %v530, %v534
      %v536 = vmul.f32 %v531, %v534
      %v537 = vmul.f32 %v532, %v534
      %v538 = vmul.f32 %v533, %v534
      %v539 = vfloor.f32 %v535
      %v540 = vfloor.f32 %v536
      %v541 = vfloor.f32 %v537
      %v542 = vfloor.f32 %v538
      %v543 = vmul.f32 %v539, 8.0
      %v544 = vmul.f32 %v540, 8.0
      %v545 = vmul.f32 %v541, 8.0
      %v546 = vmul.f32 %v542, 8.0
      %v547 = vsub.f32 %v530, %v543
      %v548 = vsub.f32 %v531, %v544
      %v549 = vsub.f32 %v532, %v545
      %v550 = vsub.f32 %v533, %v546
      %v551 = vsub.f32 %v521, 2017.0
      %v552 = vsub.f32 %v522, 2017.0
      %v553 = vsub.f32 %v523, 2017.0
      %v554 = vsub.f32 %v524, 2017.0
      %vm555 = vcmp.ge.f32.partialorder %v521, 8.5
      %vm556 = vcmp.ge.f32.partialorder %v522, 8.5
      %vm557 = vcmp.ge.f32.partialorder %v523, 8.5
      %vm558 = vcmp.ge.f32.partialorder %v524, 8.5
      %v559 = vsub.f32 %v521, 9.0
      %v560 = vsub.f32 %v522, 9.0
      %v561 = vsub.f32 %v523, 9.0
      %v562 = vsub.f32 %v524, 9.0
      %v563 = vadd.f32 %v521, 3.0
      %v564 = vadd.f32 %v522, 3.0
      %v565 = vadd.f32 %v523, 3.0
      %v566 = vadd.f32 %v524, 3.0
      %v567 = vsel %vm555, %v559, %v563
      %v568 = vsel %vm556, %v560, %v564
      %v569 = vsel %vm557, %v561, %v565
      %v570 = vsel %vm558, %v562, %v566
      %v571 = vadd.f32 %v567, 6.0
      %v572 = vadd.f32 %v568, 6.0
      %v573 = vadd.f32 %v569, 6.0
      %v574 = vadd.f32 %v570, 6.0
      %v575 = vadd.f32 %v521, 12.0
      %v576 = vadd.f32 %v522, 12.0
      %v577 = vadd.f32 %v523, 12.0
      %v578 = vadd.f32 %v524, 12.0
      %v579 = vadd.f32 %v559, 17.0
      %v580 = vadd.f32 %v560, 17.0
      %v581 = vadd.f32 %v561, 17.0
      %v582 = vadd.f32 %v562, 17.0
      %v583 = vadd.f32 %v547, 25.0
      %v584 = vadd.f32 %v548, 25.0
      %v585 = vadd.f32 %v549, 25.0
      %v586 = vadd.f32 %v550, 25.0
      %v587 = vlaneseq
      %v588 = vand.u32 %v587, 127
      %v589 = vcvt.s32.f32 %v588
      %591 = vset.pattern.permute.xlu0 5
      %592 = vperm.xlu0 %591, %v551
      %v593 = vpop.permute.xlu0 %592
      %596 = vset.pattern.permute.xlu0 5
      %597 = vperm.xlu0 %596, %v552
      %v598 = vpop.permute.xlu0 %597
      %601 = vset.pattern.permute.xlu0 5
      %602 = vperm.xlu0 %601, %v553
      %v603 = vpop.permute.xlu0 %602
      %606 = vset.pattern.permute.xlu0 5
      %607 = vperm.xlu0 %606, %v554
      %v608 = vpop.permute.xlu0 %607
      %vm610 = vcmp.eq.f32.partialorder %v589, %v593
      %vm611 = vcmp.eq.f32.partialorder %v589, %v598
      %vm612 = vcmp.eq.f32.partialorder %v589, %v603
      %vm613 = vcmp.eq.f32.partialorder %v589, %v608
      %615 = vset.pattern.permute.xlu0 6
      %616 = vperm.xlu0 %615, %v571
      %v617 = vpop.permute.xlu0 %616
      %620 = vset.pattern.permute.xlu0 6
      %621 = vperm.xlu0 %620, %v572
      %v622 = vpop.permute.xlu0 %621
      %625 = vset.pattern.permute.xlu0 6
      %626 = vperm.xlu0 %625, %v573
      %v627 = vpop.permute.xlu0 %626
      %630 = vset.pattern.permute.xlu0 6
      %631 = vperm.xlu0 %630, %v574
      %v632 = vpop.permute.xlu0 %631
      %vm634 = vcmp.eq.f32.partialorder %v589, %v617
      %vm635 = vcmp.eq.f32.partialorder %v589, %v622
      %vm636 = vcmp.eq.f32.partialorder %v589, %v627
      %vm637 = vcmp.eq.f32.partialorder %v589, %v632
      %vm638 = vmor %vm610, %vm634
      %vm639 = vmor %vm611, %vm635
      %vm640 = vmor %vm612, %vm636
      %vm641 = vmor %vm613, %vm637
      %643 = vset.pattern.permute.xlu0 8
      %644 = vperm.xlu0 %643, %v575
      %v645 = vpop.permute.xlu0 %644
      %648 = vset.pattern.permute.xlu0 8
      %649 = vperm.xlu0 %648, %v576
      %v650 = vpop.permute.xlu0 %649
      %653 = vset.pattern.permute.xlu0 8
      %654 = vperm.xlu0 %653, %v577
      %v655 = vpop.permute.xlu0 %654
      %658 = vset.pattern.permute.xlu0 8
      %659 = vperm.xlu0 %658, %v578
      %v660 = vpop.permute.xlu0 %659
      %vm662 = vcmp.eq.f32.partialorder %v589, %v645
      %vm663 = vcmp.eq.f32.partialorder %v589, %v650
      %vm664 = vcmp.eq.f32.partialorder %v589, %v655
      %vm665 = vcmp.eq.f32.partialorder %v589, %v660
      %vm666 = vmor %vm638, %vm662
      %vm667 = vmor %vm639, %vm663
      %vm668 = vmor %vm640, %vm664
      %vm669 = vmor %vm641, %vm665
      %671 = vset.pattern.permute.xlu0 7
      %672 = vperm.xlu0 %671, %v579
      %v673 = vpop.permute.xlu0 %672
      %676 = vset.pattern.permute.xlu0 7
      %677 = vperm.xlu0 %676, %v580
      %v678 = vpop.permute.xlu0 %677
      %681 = vset.pattern.permute.xlu0 7
      %682 = vperm.xlu0 %681, %v581
      %v683 = vpop.permute.xlu0 %682
      %686 = vset.pattern.permute.xlu0 7
      %687 = vperm.xlu0 %686, %v582
      %v688 = vpop.permute.xlu0 %687
      %vm690 = vcmp.eq.f32.partialorder %v589, %v673
      %vm691 = vcmp.eq.f32.partialorder %v589, %v678
      %vm692 = vcmp.eq.f32.partialorder %v589, %v683
      %vm693 = vcmp.eq.f32.partialorder %v589, %v688
      %vm694 = vmor %vm666, %vm690
      %vm695 = vmor %vm667, %vm691
      %vm696 = vmor %vm668, %vm692
      %vm697 = vmor %vm669, %vm693
      %vm698 = vcmp.eq.f32.partialorder %v589, %v583
      %vm699 = vcmp.eq.f32.partialorder %v589, %v584
      %vm700 = vcmp.eq.f32.partialorder %v589, %v585
      %vm701 = vcmp.eq.f32.partialorder %v589, %v586
      %vm702 = vmor %vm694, %vm698
      %vm703 = vmor %vm695, %vm699
      %vm704 = vmor %vm696, %vm700
      %vm705 = vmor %vm697, %vm701
      %v706 = vsel %vm702, 1, 0
      %v707 = vsel %vm703, 1, 0
      %v708 = vsel %vm704, 1, 0
      %v709 = vsel %vm705, 1, 0
      %v710 = vcvt.s32.f32 %v706
      %v711 = vcvt.s32.f32 %v707
      %v712 = vcvt.s32.f32 %v708
      %v713 = vcvt.s32.f32 %v709
      %v714 = vpack.c.bf16 %v711, %v710
      %v715 = vpack.c.bf16 %v713, %v712
      %v716 = vld [vmem:[%s1] sm:$0xf]
      %v717 = vld [vmem:[%s1 + $0x4] sm:$0xf]
      %v718 = vld [vmem:[%s1 + $0x8] sm:$0xf]
      %v719 = vld [vmem:[%s1 + $0xc] sm:$0xf]
      %v720 = vld [vmem:[%s1 + $0x10] sm:$0x1]
      %v721 = vpack.c.bf16 %v522, %v521
      %v722 = vpack.c.bf16 %v524, %v523
      %v723 = vld [vmem:[%s2] sm:$0xf]
      %v724 = vld [vmem:[%s2 + $0x4] sm:$0x1]
      %v727 = vunpack.c.l.b16 %v723
      %v728 = vunpack.c.l.b16 %v724
      %v729 = vpack.c.b16 %v728, %v727
      %vm730 = vcmask 72704
      %v732 = vsel %vm730, %v721, 0
      %v735 = vsel %vm730, %v722, 0
      %vm737 = vcmask 1043456
      %vm738 = vcmask 1044480
      %v739 = vsel %vm737, 4294967295, 65535
      %v740 = vsel %vm738, %v739, 0
      %v742 = vand.u32 %v729, %v740
      %744 = vmatprep.subr.bf16.mxu0 0
      %745 = vmatpush1.bf16.msra.mxu0 %v742
      %746 = vmatprep.subr.bf16.mxu0 0
      %747 = vmatpush1.bf16.msra.mxu0 0
      %748 = vmatprep.subr.bf16.mxu0 0
      %749 = vmatpush1.bf16.msra.mxu0 0
      %750 = vmatprep.subr.bf16.mxu0 0
      %751 = vmatpush1.bf16.msra.mxu0 0
      %752 = vmatprep.subr.bf16.mxu0 0
      %753 = vmatpush1.bf16.msra.mxu0 0
      %754 = vmatprep.subr.bf16.mxu0 0
      %755 = vmatpush1.bf16.msra.mxu0 0
      %756 = vmatprep.subr.bf16.mxu0 0
      %757 = vmatpush1.bf16.msra.mxu0 0
      %758 = vmatprep.subr.bf16.mxu0 0
      %759 = vmatpush1.bf16.msra.mxu0 0
      %760 = vmatprep.subr.bf16.mxu0 0
      %761 = vmatpush1.bf16.msra.mxu0 0
      %762 = vmatprep.subr.bf16.mxu0 0
      %763 = vmatpush1.bf16.msra.mxu0 0
      %764 = vmatprep.subr.bf16.mxu0 0
      %765 = vmatpush1.bf16.msra.mxu0 0
      %766 = vmatprep.subr.bf16.mxu0 0
      %767 = vmatpush1.bf16.msra.mxu0 0
      %768 = vmatprep.subr.bf16.mxu0 0
      %769 = vmatpush1.bf16.msra.mxu0 0
      %770 = vmatprep.subr.bf16.mxu0 0
      %771 = vmatpush1.bf16.msra.mxu0 0
      %772 = vmatprep.subr.bf16.mxu0 0
      %773 = vmatpush1.bf16.msra.mxu0 0
      %774 = vmatprep.subr.bf16.mxu0 0
      %775 = vmatpush1.bf16.msra.mxu0 0
      %776 = vmatprep.mubr.bf16.mxu0 0
      %777 = vmatmul.mubr.bf16.gmra.mrb[0].mxu0 %v732
      %v778 = vpop.f32.mrb[0].mxu0
      %v779 = vadd.f32 0.0, %v778
      %v780 = vpop.f32.mrb[0].mxu0
      %v781 = vpop.f32.mrb[0].mxu0
      %v782 = vadd.f32 0.0, %v781
      %v783 = vpop.f32.mrb[0].mxu0
      %784 = vmatprep.mubr.bf16.mxu0 0
      %785 = vmatmul.mubr.bf16.gmra.mrb[0].mxu0 %v735
      %v786 = vpop.f32.mrb[0].mxu0
      %v787 = vadd.f32 0.0, %v786
      %v788 = vpop.f32.mrb[0].mxu0
      %v789 = vpop.f32.mrb[0].mxu0
      %v790 = vadd.f32 0.0, %v789
      %v791 = vpop.f32.mrb[0].mxu0
      %792 = vdwg.mxu0
      %v798 = vunpack.c.l.b16 %v716
      %v799 = vunpack.c.l.b16 %v717
      %v800 = vunpack.c.l.b16 %v718
      %v801 = vunpack.c.l.b16 %v719
      %v802 = vunpack.c.l.b16 %v720
      %v803 = vpack.c.b16 %v799, %v798
      %v804 = vpack.c.b16 %v801, %v800
      %v805 = vpack.c.b16 %v802, %v802
      %vm808 = vcmask 269312
      %v810 = vsel %vm808, %v714, 0
      %v813 = vsel %vm808, %v715, 0
      %vm815 = vcmask 1040384
      %v816 = vsel 0, 4294967295, 65535
      %v817 = vsel %vm815, %v816, 0
      %v819 = vand.u32 %v805, %v817
      %821 = vmatprep.subr.bf16.mxu0 0
      %822 = vmatpush1.bf16.msra.mxu0 %v803
      %823 = vmatprep.subr.bf16.mxu0 0
      %824 = vmatpush1.bf16.msra.mxu0 %v804
      %825 = vmatprep.subr.bf16.mxu0 0
      %826 = vmatpush1.bf16.msra.mxu0 %v819
      %827 = vmatprep.subr.bf16.mxu0 0
      %828 = vmatpush1.bf16.msra.mxu0 0
      %829 = vmatprep.subr.bf16.mxu0 0
      %830 = vmatpush1.bf16.msra.mxu0 0
      %831 = vmatprep.subr.bf16.mxu0 0
      %832 = vmatpush1.bf16.msra.mxu0 0
      %833 = vmatprep.subr.bf16.mxu0 0
      %834 = vmatpush1.bf16.msra.mxu0 0
      %835 = vmatprep.subr.bf16.mxu0 0
      %836 = vmatpush1.bf16.msra.mxu0 0
      %837 = vmatprep.subr.bf16.mxu0 0
      %838 = vmatpush1.bf16.msra.mxu0 0
      %839 = vmatprep.subr.bf16.mxu0 0
      %840 = vmatpush1.bf16.msra.mxu0 0
      %841 = vmatprep.subr.bf16.mxu0 0
      %842 = vmatpush1.bf16.msra.mxu0 0
      %843 = vmatprep.subr.bf16.mxu0 0
      %844 = vmatpush1.bf16.msra.mxu0 0
      %845 = vmatprep.subr.bf16.mxu0 0
      %846 = vmatpush1.bf16.msra.mxu0 0
      %847 = vmatprep.subr.bf16.mxu0 0
      %848 = vmatpush1.bf16.msra.mxu0 0
      %849 = vmatprep.subr.bf16.mxu0 0
      %850 = vmatpush1.bf16.msra.mxu0 0
      %851 = vmatprep.subr.bf16.mxu0 0
      %852 = vmatpush1.bf16.msra.mxu0 0
      %853 = vmatprep.mubr.bf16.mxu0 0
      %854 = vmatmul.mubr.bf16.gmra.mrb[0].mxu0 %v810
      %v855 = vpop.f32.mrb[0].mxu0
      %v856 = vadd.f32 %v779, %v855
      %v857 = vpop.f32.mrb[0].mxu0
      %v858 = vpop.f32.mrb[0].mxu0
      %v859 = vadd.f32 %v782, %v858
      %v860 = vpop.f32.mrb[0].mxu0
      %861 = vmatprep.mubr.bf16.mxu0 0
      %862 = vmatmul.mubr.bf16.gmra.mrb[0].mxu0 %v813
      %v863 = vpop.f32.mrb[0].mxu0
      %v864 = vadd.f32 %v787, %v863
      %v865 = vpop.f32.mrb[0].mxu0
      %v866 = vpop.f32.mrb[0].mxu0
      %v867 = vadd.f32 %v790, %v866
      %v868 = vpop.f32.mrb[0].mxu0
      %869 = vdwg.mxu0
      %v870 = vld [vmem:[%s10] sm:$0xff]
      %v871 = vld [vmem:[%s10 + $0x8] sm:$0xff]
      %v872 = vld [vmem:[%s10 + $0x10] sm:$0xff]
      %v873 = vld [vmem:[%s10 + $0x18] sm:$0xff]
      %v874 = vpack.c.bf16 %v859, %v856
      %v875 = vpack.c.bf16 %v867, %v864
      %v876 = vld [vmem:[%s3] sm:$0xf]
      %v877 = vld [vmem:[%s3 + $0x4] sm:$0xf]
      %v878 = vld [vmem:[%s3 + $0x8] sm:$0xf]
      %v879 = vld [vmem:[%s3 + $0xc] sm:$0x7]
      %v880 = vld [vmem:[%s4] sm:$0x1]
      %v882 = vlaneseq
      %v883 = vshrl.u32 %v882, 7
      %v884 = vsub.s32 0, %v883
      %v885 = vrot.slane %v880, %v884
      %v891 = vunpack.c.l.b16 %v876
      %v892 = vunpack.c.l.b16 %v877
      %v893 = vunpack.c.l.b16 %v878
      %v894 = vunpack.c.l.b16 %v879
      %v895 = vpack.c.b16 %v892, %v891
      %v896 = vpack.c.b16 %v894, %v893
      %vm898 = vcmask 244736
      %v900 = vsel %vm898, %v874, 0
      %v903 = vsel %vm898, %v875, 0
      %vm905 = vcmask 1046528
      %v907 = vsel %vm905, %v896, 0
      %909 = vmatprep.subr.bf16.mxu0 0
      %910 = vmatpush1.bf16.msra.mxu0 %v895
      %911 = vmatprep.subr.bf16.mxu0 0
      %912 = vmatpush1.bf16.msra.mxu0 %v907
      %913 = vmatprep.subr.bf16.mxu0 0
      %914 = vmatpush1.bf16.msra.mxu0 0
      %915 = vmatprep.subr.bf16.mxu0 0
      %916 = vmatpush1.bf16.msra.mxu0 0
      %917 = vmatprep.subr.bf16.mxu0 0
      %918 = vmatpush1.bf16.msra.mxu0 0
      %919 = vmatprep.subr.bf16.mxu0 0
      %920 = vmatpush1.bf16.msra.mxu0 0
      %921 = vmatprep.subr.bf16.mxu0 0
      %922 = vmatpush1.bf16.msra.mxu0 0
      %923 = vmatprep.subr.bf16.mxu0 0
      %924 = vmatpush1.bf16.msra.mxu0 0
      %925 = vmatprep.subr.bf16.mxu0 0
      %926 = vmatpush1.bf16.msra.mxu0 0
      %927 = vmatprep.subr.bf16.mxu0 0
      %928 = vmatpush1.bf16.msra.mxu0 0
      %929 = vmatprep.subr.bf16.mxu0 0
      %930 = vmatpush1.bf16.msra.mxu0 0
      %931 = vmatprep.subr.bf16.mxu0 0
      %932 = vmatpush1.bf16.msra.mxu0 0
      %933 = vmatprep.subr.bf16.mxu0 0
      %934 = vmatpush1.bf16.msra.mxu0 0
      %935 = vmatprep.subr.bf16.mxu0 0
      %936 = vmatpush1.bf16.msra.mxu0 0
      %937 = vmatprep.subr.bf16.mxu0 0
      %938 = vmatpush1.bf16.msra.mxu0 0
      %939 = vmatprep.subr.bf16.mxu0 0
      %940 = vmatpush1.bf16.msra.mxu0 0
      %941 = vmatprep.mubr.bf16.mxu0 0
      %942 = vmatmul.mubr.bf16.gmra.mrb[0].mxu0 %v900
      %v943 = vpop.f32.mrb[0].mxu0
      %v944 = vadd.f32 %v885, %v943
      %v945 = vpop.f32.mrb[0].mxu0
      %v946 = vpop.f32.mrb[0].mxu0
      %v947 = vadd.f32 %v885, %v946
      %v948 = vpop.f32.mrb[0].mxu0
      %949 = vmatprep.mubr.bf16.mxu0 0
      %950 = vmatmul.mubr.bf16.gmra.mrb[0].mxu0 %v903
      %v951 = vpop.f32.mrb[0].mxu0
      %v952 = vadd.f32 %v885, %v951
      %v953 = vpop.f32.mrb[0].mxu0
      %v954 = vpop.f32.mrb[0].mxu0
      %v955 = vadd.f32 %v885, %v954
      %v956 = vpop.f32.mrb[0].mxu0
      %957 = vdwg.mxu0
      %s958 = scalar_lea.vmem %s3, 16
      %v959 = vld [vmem:[%s958] sm:$0xf]
      %v960 = vld [vmem:[%s958 + $0x4] sm:$0xf]
      %v961 = vld [vmem:[%s958 + $0x8] sm:$0xf]
      %v962 = vld [vmem:[%s958 + $0xc] sm:$0x7]
      %s963 = scalar_lea.vmem %s4, 1
      %v964 = vld [vmem:[%s963] sm:$0x1]
      %v966 = vlaneseq
      %v967 = vshrl.u32 %v966, 7
      %v968 = vsub.s32 0, %v967
      %v969 = vrot.slane %v964, %v968
      %v975 = vunpack.c.l.b16 %v959
      %v976 = vunpack.c.l.b16 %v960
      %v977 = vunpack.c.l.b16 %v961
      %v978 = vunpack.c.l.b16 %v962
      %v979 = vpack.c.b16 %v976, %v975
      %v980 = vpack.c.b16 %v978, %v977
      %v983 = vsel %vm905, %v980, 0
      %985 = vmatprep.subr.bf16.mxu0 0
      %986 = vmatpush1.bf16.msra.mxu0 %v979
      %987 = vmatprep.subr.bf16.mxu0 0
      %988 = vmatpush1.bf16.msra.mxu0 %v983
      %989 = vmatprep.subr.bf16.mxu0 0
      %990 = vmatpush1.bf16.msra.mxu0 0
      %991 = vmatprep.subr.bf16.mxu0 0
      %992 = vmatpush1.bf16.msra.mxu0 0
      %993 = vmatprep.subr.bf16.mxu0 0
      %994 = vmatpush1.bf16.msra.mxu0 0
      %995 = vmatprep.subr.bf16.mxu0 0
      %996 = vmatpush1.bf16.msra.mxu0 0
      %997 = vmatprep.subr.bf16.mxu0 0
      %998 = vmatpush1.bf16.msra.mxu0 0
      %999 = vmatprep.subr.bf16.mxu0 0
      %1000 = vmatpush1.bf16.msra.mxu0 0
      %1001 = vmatprep.subr.bf16.mxu0 0
      %1002 = vmatpush1.bf16.msra.mxu0 0
      %1003 = vmatprep.subr.bf16.mxu0 0
      %1004 = vmatpush1.bf16.msra.mxu0 0
      %1005 = vmatprep.subr.bf16.mxu0 0
      %1006 = vmatpush1.bf16.msra.mxu0 0
      %1007 = vmatprep.subr.bf16.mxu0 0
      %1008 = vmatpush1.bf16.msra.mxu0 0
      %1009 = vmatprep.subr.bf16.mxu0 0
      %1010 = vmatpush1.bf16.msra.mxu0 0
      %1011 = vmatprep.subr.bf16.mxu0 0
      %1012 = vmatpush1.bf16.msra.mxu0 0
      %1013 = vmatprep.subr.bf16.mxu0 0
      %1014 = vmatpush1.bf16.msra.mxu0 0
      %1015 = vmatprep.subr.bf16.mxu0 0
      %1016 = vmatpush1.bf16.msra.mxu0 0
      %1017 = vmatprep.mubr.bf16.mxu0 0
      %1018 = vmatmul.mubr.bf16.gmra.mrb[0].mxu0 %v900
      %v1019 = vpop.f32.mrb[0].mxu0
      %v1020 = vadd.f32 %v969, %v1019
      %v1021 = vpop.f32.mrb[0].mxu0
      %v1022 = vpop.f32.mrb[0].mxu0
      %v1023 = vadd.f32 %v969, %v1022
      %v1024 = vpop.f32.mrb[0].mxu0
      %1025 = vmatprep.mubr.bf16.mxu0 0
      %1026 = vmatmul.mubr.bf16.gmra.mrb[0].mxu0 %v903
      %v1027 = vpop.f32.mrb[0].mxu0
      %v1028 = vadd.f32 %v969, %v1027
      %v1029 = vpop.f32.mrb[0].mxu0
      %v1030 = vpop.f32.mrb[0].mxu0
      %v1031 = vadd.f32 %v969, %v1030
      %v1032 = vpop.f32.mrb[0].mxu0
      %1033 = vdwg.mxu0
      %s1034 = scalar_lea.vmem %s3, 32
      %v1035 = vld [vmem:[%s1034] sm:$0xf]
      %v1036 = vld [vmem:[%s1034 + $0x4] sm:$0xf]
      %v1037 = vld [vmem:[%s1034 + $0x8] sm:$0xf]
      %v1038 = vld [vmem:[%s1034 + $0xc] sm:$0x7]
      %s1039 = scalar_lea.vmem %s4, 2
      %v1040 = vld [vmem:[%s1039] sm:$0x1]
      %v1042 = vlaneseq
      %v1043 = vshrl.u32 %v1042, 7
      %v1044 = vsub.s32 0, %v1043
      %v1045 = vrot.slane %v1040, %v1044
      %v1051 = vunpack.c.l.b16 %v1035
      %v1052 = vunpack.c.l.b16 %v1036
      %v1053 = vunpack.c.l.b16 %v1037
      %v1054 = vunpack.c.l.b16 %v1038
      %v1055 = vpack.c.b16 %v1052, %v1051
      %v1056 = vpack.c.b16 %v1054, %v1053
      %v1059 = vsel %vm905, %v1056, 0
      %1061 = vmatprep.subr.bf16.mxu0 0
      %1062 = vmatpush1.bf16.msra.mxu0 %v1055
      %1063 = vmatprep.subr.bf16.mxu0 0
      %1064 = vmatpush1.bf16.msra.mxu0 %v1059
      %1065 = vmatprep.subr.bf16.mxu0 0
      %1066 = vmatpush1.bf16.msra.mxu0 0
      %1067 = vmatprep.subr.bf16.mxu0 0
      %1068 = vmatpush1.bf16.msra.mxu0 0
      %1069 = vmatprep.subr.bf16.mxu0 0
      %1070 = vmatpush1.bf16.msra.mxu0 0
      %1071 = vmatprep.subr.bf16.mxu0 0
      %1072 = vmatpush1.bf16.msra.mxu0 0
      %1073 = vmatprep.subr.bf16.mxu0 0
      %1074 = vmatpush1.bf16.msra.mxu0 0
      %1075 = vmatprep.subr.bf16.mxu0 0
      %1076 = vmatpush1.bf16.msra.mxu0 0
      %1077 = vmatprep.subr.bf16.mxu0 0
      %1078 = vmatpush1.bf16.msra.mxu0 0
      %1079 = vmatprep.subr.bf16.mxu0 0
      %1080 = vmatpush1.bf16.msra.mxu0 0
      %1081 = vmatprep.subr.bf16.mxu0 0
      %1082 = vmatpush1.bf16.msra.mxu0 0
      %1083 = vmatprep.subr.bf16.mxu0 0
      %1084 = vmatpush1.bf16.msra.mxu0 0
      %1085 = vmatprep.subr.bf16.mxu0 0
      %1086 = vmatpush1.bf16.msra.mxu0 0
      %1087 = vmatprep.subr.bf16.mxu0 0
      %1088 = vmatpush1.bf16.msra.mxu0 0
      %1089 = vmatprep.subr.bf16.mxu0 0
      %1090 = vmatpush1.bf16.msra.mxu0 0
      %1091 = vmatprep.subr.bf16.mxu0 0
      %1092 = vmatpush1.bf16.msra.mxu0 0
      %1093 = vmatprep.mubr.bf16.mxu0 0
      %1094 = vmatmul.mubr.bf16.gmra.mrb[0].mxu0 %v900
      %v1095 = vpop.f32.mrb[0].mxu0
      %v1096 = vadd.f32 %v1045, %v1095
      %v1097 = vpop.f32.mrb[0].mxu0
      %v1098 = vpop.f32.mrb[0].mxu0
      %v1099 = vadd.f32 %v1045, %v1098
      %v1100 = vpop.f32.mrb[0].mxu0
      %1101 = vmatprep.mubr.bf16.mxu0 0
      %1102 = vmatmul.mubr.bf16.gmra.mrb[0].mxu0 %v903
      %v1103 = vpop.f32.mrb[0].mxu0
      %v1104 = vadd.f32 %v1045, %v1103
      %v1105 = vpop.f32.mrb[0].mxu0
      %v1106 = vpop.f32.mrb[0].mxu0
      %v1107 = vadd.f32 %v1045, %v1106
      %v1108 = vpop.f32.mrb[0].mxu0
      %1109 = vdwg.mxu0
      %v1110 = vpack.c.bf16 %v947, %v944
      %v1111 = vpack.c.bf16 %v955, %v952
      %v1112 = vpack.c.bf16 %v1023, %v1020
      %v1113 = vpack.c.bf16 %v1031, %v1028
      %vm1114 = vcmask 121856
      %v1116 = vsel %vm1114, %v1110, 0
      %v1119 = vsel %vm1114, %v1111, 0
      %v1122 = vsel %vm1114, %v1112, 0
      %v1125 = vsel %vm1114, %v1113, 0
      %1127 = vmatprep.subr.bf16.mxu0 0
      %1128 = vmatpush1.bf16.xpose.msra.mxu0 %v1122
      %1129 = vmatprep.subr.bf16.mxu0 0
      %1130 = vmatpush1.bf16.xpose.msra.mxu0 %v1125
      %1131 = vmatprep.subr.bf16.mxu0 0
      %1132 = vmatpush1.bf16.xpose.msra.mxu0 0
      %1133 = vmatprep.subr.bf16.mxu0 0
      %1134 = vmatpush1.bf16.xpose.msra.mxu0 0
      %1135 = vmatprep.subr.bf16.mxu0 0
      %1136 = vmatpush1.bf16.xpose.msra.mxu0 0
      %1137 = vmatprep.subr.bf16.mxu0 0
      %1138 = vmatpush1.bf16.xpose.msra.mxu0 0
      %1139 = vmatprep.subr.bf16.mxu0 0
      %1140 = vmatpush1.bf16.xpose.msra.mxu0 0
      %1141 = vmatprep.subr.bf16.mxu0 0
      %1142 = vmatpush1.bf16.xpose.msra.mxu0 0
      %1143 = vmatprep.subr.bf16.mxu0 0
      %1144 = vmatpush1.bf16.xpose.msra.mxu0 0
      %1145 = vmatprep.subr.bf16.mxu0 0
      %1146 = vmatpush1.bf16.xpose.msra.mxu0 0
      %1147 = vmatprep.subr.bf16.mxu0 0
      %1148 = vmatpush1.bf16.xpose.msra.mxu0 0
      %1149 = vmatprep.subr.bf16.mxu0 0
      %1150 = vmatpush1.bf16.xpose.msra.mxu0 0
      %1151 = vmatprep.subr.bf16.mxu0 0
      %1152 = vmatpush1.bf16.xpose.msra.mxu0 0
      %1153 = vmatprep.subr.bf16.mxu0 0
      %1154 = vmatpush1.bf16.xpose.msra.mxu0 0
      %1155 = vmatprep.subr.bf16.mxu0 0
      %1156 = vmatpush1.bf16.xpose.msra.mxu0 0
      %1157 = vmatprep.subr.bf16.mxu0 0
      %1158 = vmatpush1.bf16.xpose.msra.mxu0 0
      %1159 = vmatprep.mubr.bf16.mxu0 0
      %1160 = vmatmul.mubr.bf16.gmra.mrb[0].mxu0 %v1116
      %v1161 = vpop.f32.mrb[0].mxu0
      %v1162 = vadd.f32 0.0, %v1161
      %v1163 = vpop.f32.mrb[0].mxu0
      %v1164 = vpop.f32.mrb[0].mxu0
      %v1165 = vadd.f32 0.0, %v1164
      %v1166 = vpop.f32.mrb[0].mxu0
      %1167 = vmatprep.mubr.bf16.mxu0 0
      %1168 = vmatmul.mubr.bf16.gmra.mrb[0].mxu0 %v1119
      %v1169 = vpop.f32.mrb[0].mxu0
      %v1170 = vadd.f32 0.0, %v1169
      %v1171 = vpop.f32.mrb[0].mxu0
      %v1172 = vpop.f32.mrb[0].mxu0
      %v1173 = vadd.f32 0.0, %v1172
      %v1174 = vpop.f32.mrb[0].mxu0
      %1175 = vdwg.mxu0
      %v1176 = vmul.f32 %v1162, 0.2581989
      %v1177 = vmul.f32 %v1165, 0.2581989
      %v1178 = vmul.f32 %v1170, 0.2581989
      %v1179 = vmul.f32 %v1173, 0.2581989
      %v1180 = vadd.f32 %v1176, %v870
      %v1181 = vadd.f32 %v1177, %v871
      %v1182 = vadd.f32 %v1178, %v872
      %v1183 = vadd.f32 %v1179, %v873
      %vm1184 = vcmask 261120
      %v1185 = vsel %vm1184, %v1180, -inf
      %1186 = vmax.xlane.f32.xlu0 %v1185
      %v1187 = vpop.xlane.xlu0 %1186
      %v1188 = vsel %vm1184, %v1181, -inf
      %1189 = vmax.xlane.f32.xlu0 %v1188
      %v1190 = vpop.xlane.xlu0 %1189
      %v1191 = vsel %vm1184, %v1182, -inf
      %1192 = vmax.xlane.f32.xlu0 %v1191
      %v1193 = vpop.xlane.xlu0 %1192
      %v1194 = vsel %vm1184, %v1183, -inf
      %1195 = vmax.xlane.f32.xlu0 %v1194
      %v1196 = vpop.xlane.xlu0 %1195
      %v1197 = vsub.f32 %v1180, %v1187
      %v1198 = vsub.f32 %v1181, %v1190
      %v1199 = vsub.f32 %v1182, %v1193
      %v1200 = vsub.f32 %v1183, %v1196
      %v1201 = vmul.f32 %v1197, 1.442695
      %v1202 = vpow.pop %v1201
      %v1203 = vmul.f32 %v1198, 1.442695
      %v1204 = vpow.pop %v1203
      %v1205 = vmul.f32 %v1199, 1.442695
      %v1206 = vpow.pop %v1205
      %v1207 = vmul.f32 %v1200, 1.442695
      %v1208 = vpow.pop %v1207
      %v1209 = vsel %vm1184, %v1202, 0.0
      %1210 = vadd.xlane.f32.xlu0 %v1209
      %v1211 = vpop.xlane.xlu0 %1210
      %v1212 = vsel %vm1184, %v1204, 0.0
      %1213 = vadd.xlane.f32.xlu0 %v1212
      %v1214 = vpop.xlane.xlu0 %1213
      %v1215 = vsel %vm1184, %v1206, 0.0
      %1216 = vadd.xlane.f32.xlu0 %v1215
      %v1217 = vpop.xlane.xlu0 %1216
      %v1218 = vsel %vm1184, %v1208, 0.0
      %1219 = vadd.xlane.f32.xlu0 %v1218
      %v1220 = vpop.xlane.xlu0 %1219
      %v1221 = vrcp.pop %v1211
      %v1222 = vrcp.pop %v1214
      %v1223 = vrcp.pop %v1217
      %v1224 = vrcp.pop %v1220
      %v1225 = vmul.f32 %v1202, %v1221
      %v1226 = vmul.f32 %v1204, %v1222
      %v1227 = vmul.f32 %v1206, %v1223
      %v1228 = vmul.f32 %v1208, %v1224
      %v1229 = vpack.c.bf16 %v1226, %v1225
      %v1230 = vpack.c.bf16 %v1228, %v1227
      %v1231 = vpack.c.bf16 %v1099, %v1096
      %v1232 = vpack.c.bf16 %v1107, %v1104
      %v1234 = vsel %vm1184, %v1229, 0
      %v1237 = vsel %vm1184, %v1230, 0
      %1239 = vmatprep.subr.bf16.mxu0 0
      %1240 = vmatpush1.bf16.msra.mxu0 %v1231
      %1241 = vmatprep.subr.bf16.mxu0 0
      %1242 = vmatpush1.bf16.msra.mxu0 %v1232
      %1243 = vmatprep.subr.bf16.mxu0 0
      %1244 = vmatpush1.bf16.msra.mxu0 0
      %1245 = vmatprep.subr.bf16.mxu0 0
      %1246 = vmatpush1.bf16.msra.mxu0 0
      %1247 = vmatprep.subr.bf16.mxu0 0
      %1248 = vmatpush1.bf16.msra.mxu0 0
      %1249 = vmatprep.subr.bf16.mxu0 0
      %1250 = vmatpush1.bf16.msra.mxu0 0
      %1251 = vmatprep.subr.bf16.mxu0 0
      %1252 = vmatpush1.bf16.msra.mxu0 0
      %1253 = vmatprep.subr.bf16.mxu0 0
      %1254 = vmatpush1.bf16.msra.mxu0 0
      %1255 = vmatprep.subr.bf16.mxu0 0
      %1256 = vmatpush1.bf16.msra.mxu0 0
      %1257 = vmatprep.subr.bf16.mxu0 0
      %1258 = vmatpush1.bf16.msra.mxu0 0
      %1259 = vmatprep.subr.bf16.mxu0 0
      %1260 = vmatpush1.bf16.msra.mxu0 0
      %1261 = vmatprep.subr.bf16.mxu0 0
      %1262 = vmatpush1.bf16.msra.mxu0 0
      %1263 = vmatprep.subr.bf16.mxu0 0
      %1264 = vmatpush1.bf16.msra.mxu0 0
      %1265 = vmatprep.subr.bf16.mxu0 0
      %1266 = vmatpush1.bf16.msra.mxu0 0
      %1267 = vmatprep.subr.bf16.mxu0 0
      %1268 = vmatpush1.bf16.msra.mxu0 0
      %1269 = vmatprep.subr.bf16.mxu0 0
      %1270 = vmatpush1.bf16.msra.mxu0 0
      %1271 = vmatprep.mubr.bf16.mxu0 0
      %1272 = vmatmul.mubr.bf16.gmra.mrb[0].mxu0 %v1234
      %v1273 = vpop.f32.mrb[0].mxu0
      %v1274 = vadd.f32 0.0, %v1273
      %v1275 = vpop.f32.mrb[0].mxu0
      %v1276 = vpop.f32.mrb[0].mxu0
      %v1277 = vadd.f32 0.0, %v1276
      %v1278 = vpop.f32.mrb[0].mxu0
      %1279 = vmatprep.mubr.bf16.mxu0 0
      %1280 = vmatmul.mubr.bf16.gmra.mrb[0].mxu0 %v1237
      %v1281 = vpop.f32.mrb[0].mxu0
      %v1282 = vadd.f32 0.0, %v1281
      %v1283 = vpop.f32.mrb[0].mxu0
      %v1284 = vpop.f32.mrb[0].mxu0
      %v1285 = vadd.f32 0.0, %v1284
      %v1286 = vpop.f32.mrb[0].mxu0
      %1287 = vdwg.mxu0
      %v1288 = vpack.c.bf16 %v1277, %v1274
      %v1289 = vpack.c.bf16 %v1285, %v1282
      %v1290 = vld [vmem:[%s5] sm:$0xf]
      %v1291 = vld [vmem:[%s5 + $0x4] sm:$0xf]
      %s1292 = scalar_lea.vmem %s3, 48
      %v1293 = vld [vmem:[%s1292] sm:$0xf]
      %v1294 = vld [vmem:[%s1292 + $0x4] sm:$0xf]
      %v1295 = vld [vmem:[%s1292 + $0x8] sm:$0xf]
      %v1296 = vld [vmem:[%s1292 + $0xc] sm:$0x7]
      %s1297 = scalar_lea.vmem %s4, 3
      %v1298 = vld [vmem:[%s1297] sm:$0x1]
      %v1300 = vlaneseq
      %v1301 = vshrl.u32 %v1300, 7
      %v1302 = vsub.s32 0, %v1301
      %v1303 = vrot.slane %v1298, %v1302
      %v1309 = vunpack.c.l.b16 %v1293
      %v1310 = vunpack.c.l.b16 %v1294
      %v1311 = vunpack.c.l.b16 %v1295
      %v1312 = vunpack.c.l.b16 %v1296
      %v1313 = vpack.c.b16 %v1310, %v1309
      %v1314 = vpack.c.b16 %v1312, %v1311
      %v1317 = vsel %vm905, %v1314, 0
      %1319 = vmatprep.subr.bf16.mxu0 0
      %1320 = vmatpush1.bf16.msra.mxu0 %v1313
      %1321 = vmatprep.subr.bf16.mxu0 0
      %1322 = vmatpush1.bf16.msra.mxu0 %v1317
      %1323 = vmatprep.subr.bf16.mxu0 0
      %1324 = vmatpush1.bf16.msra.mxu0 0
      %1325 = vmatprep.subr.bf16.mxu0 0
      %1326 = vmatpush1.bf16.msra.mxu0 0
      %1327 = vmatprep.subr.bf16.mxu0 0
      %1328 = vmatpush1.bf16.msra.mxu0 0
      %1329 = vmatprep.subr.bf16.mxu0 0
      %1330 = vmatpush1.bf16.msra.mxu0 0
      %1331 = vmatprep.subr.bf16.mxu0 0
      %1332 = vmatpush1.bf16.msra.mxu0 0
      %1333 = vmatprep.subr.bf16.mxu0 0
      %1334 = vmatpush1.bf16.msra.mxu0 0
      %1335 = vmatprep.subr.bf16.mxu0 0
      %1336 = vmatpush1.bf16.msra.mxu0 0
      %1337 = vmatprep.subr.bf16.mxu0 0
      %1338 = vmatpush1.bf16.msra.mxu0 0
      %1339 = vmatprep.subr.bf16.mxu0 0
      %1340 = vmatpush1.bf16.msra.mxu0 0
      %1341 = vmatprep.subr.bf16.mxu0 0
      %1342 = vmatpush1.bf16.msra.mxu0 0
      %1343 = vmatprep.subr.bf16.mxu0 0
      %1344 = vmatpush1.bf16.msra.mxu0 0
      %1345 = vmatprep.subr.bf16.mxu0 0
      %1346 = vmatpush1.bf16.msra.mxu0 0
      %1347 = vmatprep.subr.bf16.mxu0 0
      %1348 = vmatpush1.bf16.msra.mxu0 0
      %1349 = vmatprep.subr.bf16.mxu0 0
      %1350 = vmatpush1.bf16.msra.mxu0 0
      %1351 = vmatprep.mubr.bf16.mxu0 0
      %1352 = vmatmul.mubr.bf16.gmra.mrb[0].mxu0 %v900
      %v1353 = vpop.f32.mrb[0].mxu0
      %v1354 = vadd.f32 %v1303, %v1353
      %v1355 = vpop.f32.mrb[0].mxu0
      %v1356 = vpop.f32.mrb[0].mxu0
      %v1357 = vadd.f32 %v1303, %v1356
      %v1358 = vpop.f32.mrb[0].mxu0
      %1359 = vmatprep.mubr.bf16.mxu0 0
      %1360 = vmatmul.mubr.bf16.gmra.mrb[0].mxu0 %v903
      %v1361 = vpop.f32.mrb[0].mxu0
      %v1362 = vadd.f32 %v1303, %v1361
      %v1363 = vpop.f32.mrb[0].mxu0
      %v1364 = vpop.f32.mrb[0].mxu0
      %v1365 = vadd.f32 %v1303, %v1364
      %v1366 = vpop.f32.mrb[0].mxu0
      %1367 = vdwg.mxu0
      %s1368 = scalar_lea.vmem %s3, 64
      %v1369 = vld [vmem:[%s1368] sm:$0xf]
      %v1370 = vld [vmem:[%s1368 + $0x4] sm:$0xf]
      %v1371 = vld [vmem:[%s1368 + $0x8] sm:$0xf]
      %v1372 = vld [vmem:[%s1368 + $0xc] sm:$0x7]
      %s1373 = scalar_lea.vmem %s4, 4
      %v1374 = vld [vmem:[%s1373] sm:$0x1]
      %v1376 = vlaneseq
      %v1377 = vshrl.u32 %v1376, 7
      %v1378 = vsub.s32 0, %v1377
      %v1379 = vrot.slane %v1374, %v1378
      %v1385 = vunpack.c.l.b16 %v1369
      %v1386 = vunpack.c.l.b16 %v1370
      %v1387 = vunpack.c.l.b16 %v1371
      %v1388 = vunpack.c.l.b16 %v1372
      %v1389 = vpack.c.b16 %v1386, %v1385
      %v1390 = vpack.c.b16 %v1388, %v1387
      %v1393 = vsel %vm905, %v1390, 0
      %1395 = vmatprep.subr.bf16.mxu0 0
      %1396 = vmatpush1.bf16.msra.mxu0 %v1389
      %1397 = vmatprep.subr.bf16.mxu0 0
      %1398 = vmatpush1.bf16.msra.mxu0 %v1393
      %1399 = vmatprep.subr.bf16.mxu0 0
      %1400 = vmatpush1.bf16.msra.mxu0 0
      %1401 = vmatprep.subr.bf16.mxu0 0
      %1402 = vmatpush1.bf16.msra.mxu0 0
      %1403 = vmatprep.subr.bf16.mxu0 0
      %1404 = vmatpush1.bf16.msra.mxu0 0
      %1405 = vmatprep.subr.bf16.mxu0 0
      %1406 = vmatpush1.bf16.msra.mxu0 0
      %1407 = vmatprep.subr.bf16.mxu0 0
      %1408 = vmatpush1.bf16.msra.mxu0 0
      %1409 = vmatprep.subr.bf16.mxu0 0
      %1410 = vmatpush1.bf16.msra.mxu0 0
      %1411 = vmatprep.subr.bf16.mxu0 0
      %1412 = vmatpush1.bf16.msra.mxu0 0
      %1413 = vmatprep.subr.bf16.mxu0 0
      %1414 = vmatpush1.bf16.msra.mxu0 0
      %1415 = vmatprep.subr.bf16.mxu0 0
      %1416 = vmatpush1.bf16.msra.mxu0 0
      %1417 = vmatprep.subr.bf16.mxu0 0
      %1418 = vmatpush1.bf16.msra.mxu0 0
      %1419 = vmatprep.subr.bf16.mxu0 0
      %1420 = vmatpush1.bf16.msra.mxu0 0
      %1421 = vmatprep.subr.bf16.mxu0 0
      %1422 = vmatpush1.bf16.msra.mxu0 0
      %1423 = vmatprep.subr.bf16.mxu0 0
      %1424 = vmatpush1.bf16.msra.mxu0 0
      %1425 = vmatprep.subr.bf16.mxu0 0
      %1426 = vmatpush1.bf16.msra.mxu0 0
      %1427 = vmatprep.mubr.bf16.mxu0 0
      %1428 = vmatmul.mubr.bf16.gmra.mrb[0].mxu0 %v900
      %v1429 = vpop.f32.mrb[0].mxu0
      %v1430 = vadd.f32 %v1379, %v1429
      %v1431 = vpop.f32.mrb[0].mxu0
      %v1432 = vpop.f32.mrb[0].mxu0
      %v1433 = vadd.f32 %v1379, %v1432
      %v1434 = vpop.f32.mrb[0].mxu0
      %1435 = vmatprep.mubr.bf16.mxu0 0
      %1436 = vmatmul.mubr.bf16.gmra.mrb[0].mxu0 %v903
      %v1437 = vpop.f32.mrb[0].mxu0
      %v1438 = vadd.f32 %v1379, %v1437
      %v1439 = vpop.f32.mrb[0].mxu0
      %v1440 = vpop.f32.mrb[0].mxu0
      %v1441 = vadd.f32 %v1379, %v1440
      %v1442 = vpop.f32.mrb[0].mxu0
      %1443 = vdwg.mxu0
      %s1444 = scalar_lea.vmem %s3, 80
      %v1445 = vld [vmem:[%s1444] sm:$0xf]
      %v1446 = vld [vmem:[%s1444 + $0x4] sm:$0xf]
      %v1447 = vld [vmem:[%s1444 + $0x8] sm:$0xf]
      %v1448 = vld [vmem:[%s1444 + $0xc] sm:$0x7]
      %s1449 = scalar_lea.vmem %s4, 5
      %v1450 = vld [vmem:[%s1449] sm:$0x1]
      %v1452 = vlaneseq
      %v1453 = vshrl.u32 %v1452, 7
      %v1454 = vsub.s32 0, %v1453
      %v1455 = vrot.slane %v1450, %v1454
      %v1461 = vunpack.c.l.b16 %v1445
      %v1462 = vunpack.c.l.b16 %v1446
      %v1463 = vunpack.c.l.b16 %v1447
      %v1464 = vunpack.c.l.b16 %v1448
      %v1465 = vpack.c.b16 %v1462, %v1461
      %v1466 = vpack.c.b16 %v1464, %v1463
      %v1469 = vsel %vm905, %v1466, 0
      %1471 = vmatprep.subr.bf16.mxu0 0
      %1472 = vmatpush1.bf16.msra.mxu0 %v1465
      %1473 = vmatprep.subr.bf16.mxu0 0
      %1474 = vmatpush1.bf16.msra.mxu0 %v1469
      %1475 = vmatprep.subr.bf16.mxu0 0
      %1476 = vmatpush1.bf16.msra.mxu0 0
      %1477 = vmatprep.subr.bf16.mxu0 0
      %1478 = vmatpush1.bf16.msra.mxu0 0
      %1479 = vmatprep.subr.bf16.mxu0 0
      %1480 = vmatpush1.bf16.msra.mxu0 0
      %1481 = vmatprep.subr.bf16.mxu0 0
      %1482 = vmatpush1.bf16.msra.mxu0 0
      %1483 = vmatprep.subr.bf16.mxu0 0
      %1484 = vmatpush1.bf16.msra.mxu0 0
      %1485 = vmatprep.subr.bf16.mxu0 0
      %1486 = vmatpush1.bf16.msra.mxu0 0
      %1487 = vmatprep.subr.bf16.mxu0 0
      %1488 = vmatpush1.bf16.msra.mxu0 0
      %1489 = vmatprep.subr.bf16.mxu0 0
      %1490 = vmatpush1.bf16.msra.mxu0 0
      %1491 = vmatprep.subr.bf16.mxu0 0
      %1492 = vmatpush1.bf16.msra.mxu0 0
      %1493 = vmatprep.subr.bf16.mxu0 0
      %1494 = vmatpush1.bf16.msra.mxu0 0
      %1495 = vmatprep.subr.bf16.mxu0 0
      %1496 = vmatpush1.bf16.msra.mxu0 0
      %1497 = vmatprep.subr.bf16.mxu0 0
      %1498 = vmatpush1.bf16.msra.mxu0 0
      %1499 = vmatprep.subr.bf16.mxu0 0
      %1500 = vmatpush1.bf16.msra.mxu0 0
      %1501 = vmatprep.subr.bf16.mxu0 0
      %1502 = vmatpush1.bf16.msra.mxu0 0
      %1503 = vmatprep.mubr.bf16.mxu0 0
      %1504 = vmatmul.mubr.bf16.gmra.mrb[0].mxu0 %v900
      %v1505 = vpop.f32.mrb[0].mxu0
      %v1506 = vadd.f32 %v1455, %v1505
      %v1507 = vpop.f32.mrb[0].mxu0
      %v1508 = vpop.f32.mrb[0].mxu0
      %v1509 = vadd.f32 %v1455, %v1508
      %v1510 = vpop.f32.mrb[0].mxu0
      %1511 = vmatprep.mubr.bf16.mxu0 0
      %1512 = vmatmul.mubr.bf16.gmra.mrb[0].mxu0 %v903
      %v1513 = vpop.f32.mrb[0].mxu0
      %v1514 = vadd.f32 %v1455, %v1513
      %v1515 = vpop.f32.mrb[0].mxu0
      %v1516 = vpop.f32.mrb[0].mxu0
      %v1517 = vadd.f32 %v1455, %v1516
      %v1518 = vpop.f32.mrb[0].mxu0
      %1519 = vdwg.mxu0
      %v1520 = vpack.c.bf16 %v1357, %v1354
      %v1521 = vpack.c.bf16 %v1365, %v1362
      %v1522 = vpack.c.bf16 %v1433, %v1430
      %v1523 = vpack.c.bf16 %v1441, %v1438
      %v1525 = vsel %vm1114, %v1520, 0
      %v1528 = vsel %vm1114, %v1521, 0
      %v1531 = vsel %vm1114, %v1522, 0
      %v1534 = vsel %vm1114, %v1523, 0
      %1536 = vmatprep.subr.bf16.mxu0 0
      %1537 = vmatpush1.bf16.xpose.msra.mxu0 %v1531
      %1538 = vmatprep.subr.bf16.mxu0 0
      %1539 = vmatpush1.bf16.xpose.msra.mxu0 %v1534
      %1540 = vmatprep.subr.bf16.mxu0 0
      %1541 = vmatpush1.bf16.xpose.msra.mxu0 0
      %1542 = vmatprep.subr.bf16.mxu0 0
      %1543 = vmatpush1.bf16.xpose.msra.mxu0 0
      %1544 = vmatprep.subr.bf16.mxu0 0
      %1545 = vmatpush1.bf16.xpose.msra.mxu0 0
      %1546 = vmatprep.subr.bf16.mxu0 0
      %1547 = vmatpush1.bf16.xpose.msra.mxu0 0
      %1548 = vmatprep.subr.bf16.mxu0 0
      %1549 = vmatpush1.bf16.xpose.msra.mxu0 0
      %1550 = vmatprep.subr.bf16.mxu0 0
      %1551 = vmatpush1.bf16.xpose.msra.mxu0 0
      %1552 = vmatprep.subr.bf16.mxu0 0
      %1553 = vmatpush1.bf16.xpose.msra.mxu0 0
      %1554 = vmatprep.subr.bf16.mxu0 0
      %1555 = vmatpush1.bf16.xpose.msra.mxu0 0
      %1556 = vmatprep.subr.bf16.mxu0 0
      %1557 = vmatpush1.bf16.xpose.msra.mxu0 0
      %1558 = vmatprep.subr.bf16.mxu0 0
      %1559 = vmatpush1.bf16.xpose.msra.mxu0 0
      %1560 = vmatprep.subr.bf16.mxu0 0
      %1561 = vmatpush1.bf16.xpose.msra.mxu0 0
      %1562 = vmatprep.subr.bf16.mxu0 0
      %1563 = vmatpush1.bf16.xpose.msra.mxu0 0
      %1564 = vmatprep.subr.bf16.mxu0 0
      %1565 = vmatpush1.bf16.xpose.msra.mxu0 0
      %1566 = vmatprep.subr.bf16.mxu0 0
      %1567 = vmatpush1.bf16.xpose.msra.mxu0 0
      %1568 = vmatprep.mubr.bf16.mxu0 0
      %1569 = vmatmul.mubr.bf16.gmra.mrb[0].mxu0 %v1525
      %v1570 = vpop.f32.mrb[0].mxu0
      %v1571 = vadd.f32 0.0, %v1570
      %v1572 = vpop.f32.mrb[0].mxu0
      %v1573 = vpop.f32.mrb[0].mxu0
      %v1574 = vadd.f32 0.0, %v1573
      %v1575 = vpop.f32.mrb[0].mxu0
      %1576 = vmatprep.mubr.bf16.mxu0 0
      %1577 = vmatmul.mubr.bf16.gmra.mrb[0].mxu0 %v1528
      %v1578 = vpop.f32.mrb[0].mxu0
      %v1579 = vadd.f32 0.0, %v1578
      %v1580 = vpop.f32.mrb[0].mxu0
      %v1581 = vpop.f32.mrb[0].mxu0
      %v1582 = vadd.f32 0.0, %v1581
      %v1583 = vpop.f32.mrb[0].mxu0
      %1584 = vdwg.mxu0
      %v1585 = vmul.f32 %v1571, 0.2581989
      %v1586 = vmul.f32 %v1574, 0.2581989
      %v1587 = vmul.f32 %v1579, 0.2581989
      %v1588 = vmul.f32 %v1582, 0.2581989
      %v1589 = vadd.f32 %v1585, %v870
      %v1590 = vadd.f32 %v1586, %v871
      %v1591 = vadd.f32 %v1587, %v872
      %v1592 = vadd.f32 %v1588, %v873
      %v1593 = vsel %vm1184, %v1589, -inf
      %1594 = vmax.xlane.f32.xlu0 %v1593
      %v1595 = vpop.xlane.xlu0 %1594
      %v1596 = vsel %vm1184, %v1590, -inf
      %1597 = vmax.xlane.f32.xlu0 %v1596
      %v1598 = vpop.xlane.xlu0 %1597
      %v1599 = vsel %vm1184, %v1591, -inf
      %1600 = vmax.xlane.f32.xlu0 %v1599
      %v1601 = vpop.xlane.xlu0 %1600
      %v1602 = vsel %vm1184, %v1592, -inf
      %1603 = vmax.xlane.f32.xlu0 %v1602
      %v1604 = vpop.xlane.xlu0 %1603
      %v1605 = vsub.f32 %v1589, %v1595
      %v1606 = vsub.f32 %v1590, %v1598
      %v1607 = vsub.f32 %v1591, %v1601
      %v1608 = vsub.f32 %v1592, %v1604
      %v1609 = vmul.f32 %v1605, 1.442695
      %v1610 = vpow.pop %v1609
      %v1611 = vmul.f32 %v1606, 1.442695
      %v1612 = vpow.pop %v1611
      %v1613 = vmul.f32 %v1607, 1.442695
      %v1614 = vpow.pop %v1613
      %v1615 = vmul.f32 %v1608, 1.442695
      %v1616 = vpow.pop %v1615
      %v1617 = vsel %vm1184, %v1610, 0.0
      %1618 = vadd.xlane.f32.xlu0 %v1617
      %v1619 = vpop.xlane.xlu0 %1618
      %v1620 = vsel %vm1184, %v1612, 0.0
      %1621 = vadd.xlane.f32.xlu0 %v1620
      %v1622 = vpop.xlane.xlu0 %1621
      %v1623 = vsel %vm1184, %v1614, 0.0
      %1624 = vadd.xlane.f32.xlu0 %v1623
      %v1625 = vpop.xlane.xlu0 %1624
      %v1626 = vsel %vm1184, %v1616, 0.0
      %1627 = vadd.xlane.f32.xlu0 %v1626
      %v1628 = vpop.xlane.xlu0 %1627
      %v1629 = vrcp.pop %v1619
      %v1630 = vrcp.pop %v1622
      %v1631 = vrcp.pop %v1625
      %v1632 = vrcp.pop %v1628
      %v1633 = vmul.f32 %v1610, %v1629
      %v1634 = vmul.f32 %v1612, %v1630
      %v1635 = vmul.f32 %v1614, %v1631
      %v1636 = vmul.f32 %v1616, %v1632
      %v1637 = vpack.c.bf16 %v1634, %v1633
      %v1638 = vpack.c.bf16 %v1636, %v1635
      %v1639 = vpack.c.bf16 %v1509, %v1506
      %v1640 = vpack.c.bf16 %v1517, %v1514
      %v1642 = vsel %vm1184, %v1637, 0
      %v1645 = vsel %vm1184, %v1638, 0
      %1647 = vmatprep.subr.bf16.mxu0 0
      %1648 = vmatpush1.bf16.msra.mxu0 %v1639
      %1649 = vmatprep.subr.bf16.mxu0 0
      %1650 = vmatpush1.bf16.msra.mxu0 %v1640
      %1651 = vmatprep.subr.bf16.mxu0 0
      %1652 = vmatpush1.bf16.msra.mxu0 0
      %1653 = vmatprep.subr.bf16.mxu0 0
      %1654 = vmatpush1.bf16.msra.mxu0 0
      %1655 = vmatprep.subr.bf16.mxu0 0
      %1656 = vmatpush1.bf16.msra.mxu0 0
      %1657 = vmatprep.subr.bf16.mxu0 0
      %1658 = vmatpush1.bf16.msra.mxu0 0
      %1659 = vmatprep.subr.bf16.mxu0 0
      %1660 = vmatpush1.bf16.msra.mxu0 0
      %1661 = vmatprep.subr.bf16.mxu0 0
      %1662 = vmatpush1.bf16.msra.mxu0 0
      %1663 = vmatprep.subr.bf16.mxu0 0
      %1664 = vmatpush1.bf16.msra.mxu0 0
      %1665 = vmatprep.subr.bf16.mxu0 0
      %1666 = vmatpush1.bf16.msra.mxu0 0
      %1667 = vmatprep.subr.bf16.mxu0 0
      %1668 = vmatpush1.bf16.msra.mxu0 0
      %1669 = vmatprep.subr.bf16.mxu0 0
      %1670 = vmatpush1.bf16.msra.mxu0 0
      %1671 = vmatprep.subr.bf16.mxu0 0
      %1672 = vmatpush1.bf16.msra.mxu0 0
      %1673 = vmatprep.subr.bf16.mxu0 0
      %1674 = vmatpush1.bf16.msra.mxu0 0
      %1675 = vmatprep.subr.bf16.mxu0 0
      %1676 = vmatpush1.bf16.msra.mxu0 0
      %1677 = vmatprep.subr.bf16.mxu0 0
      %1678 = vmatpush1.bf16.msra.mxu0 0
      %1679 = vmatprep.mubr.bf16.mxu0 0
      %1680 = vmatmul.mubr.bf16.gmra.mrb[0].mxu0 %v1642
      %v1681 = vpop.f32.mrb[0].mxu0
      %v1682 = vadd.f32 0.0, %v1681
      %v1683 = vpop.f32.mrb[0].mxu0
      %v1684 = vpop.f32.mrb[0].mxu0
      %v1685 = vadd.f32 0.0, %v1684
      %v1686 = vpop.f32.mrb[0].mxu0
      %1687 = vmatprep.mubr.bf16.mxu0 0
      %1688 = vmatmul.mubr.bf16.gmra.mrb[0].mxu0 %v1645
      %v1689 = vpop.f32.mrb[0].mxu0
      %v1690 = vadd.f32 0.0, %v1689
      %v1691 = vpop.f32.mrb[0].mxu0
      %v1692 = vpop.f32.mrb[0].mxu0
      %v1693 = vadd.f32 0.0, %v1692
      %v1694 = vpop.f32.mrb[0].mxu0
      %1695 = vdwg.mxu0
      %v1696 = vpack.c.bf16 %v1685, %v1682
      %v1697 = vpack.c.bf16 %v1693, %v1690
      %s1698 = scalar_lea.vmem %s5, 8
      %v1699 = vld [vmem:[%s1698] sm:$0xf]
      %v1700 = vld [vmem:[%s1698 + $0x4] sm:$0xf]
      %v1703 = vunpack.c.l.b16 %v1699
      %v1704 = vunpack.c.l.b16 %v1700
      %v1705 = vpack.c.b16 %v1704, %v1703
      %v1707 = vsel %vm1114, %v1696, 0
      %v1710 = vsel %vm1114, %v1697, 0
      %vm1712 = vcmask 1047552
      %v1713 = vsel %vm905, 4294967295, 65535
      %v1714 = vsel %vm1712, %v1713, 0
      %v1716 = vand.u32 %v1705, %v1714
      %1718 = vmatprep.subr.bf16.mxu0 0
      %1719 = vmatpush1.bf16.msra.mxu0 %v1716
      %1720 = vmatprep.subr.bf16.mxu0 0
      %1721 = vmatpush1.bf16.msra.mxu0 0
      %1722 = vmatprep.subr.bf16.mxu0 0
      %1723 = vmatpush1.bf16.msra.mxu0 0
      %1724 = vmatprep.subr.bf16.mxu0 0
      %1725 = vmatpush1.bf16.msra.mxu0 0
      %1726 = vmatprep.subr.bf16.mxu0 0
      %1727 = vmatpush1.bf16.msra.mxu0 0
      %1728 = vmatprep.subr.bf16.mxu0 0
      %1729 = vmatpush1.bf16.msra.mxu0 0
      %1730 = vmatprep.subr.bf16.mxu0 0
      %1731 = vmatpush1.bf16.msra.mxu0 0
      %1732 = vmatprep.subr.bf16.mxu0 0
      %1733 = vmatpush1.bf16.msra.mxu0 0
      %1734 = vmatprep.subr.bf16.mxu0 0
      %1735 = vmatpush1.bf16.msra.mxu0 0
      %1736 = vmatprep.subr.bf16.mxu0 0
      %1737 = vmatpush1.bf16.msra.mxu0 0
      %1738 = vmatprep.subr.bf16.mxu0 0
      %1739 = vmatpush1.bf16.msra.mxu0 0
      %1740 = vmatprep.subr.bf16.mxu0 0
      %1741 = vmatpush1.bf16.msra.mxu0 0
      %1742 = vmatprep.subr.bf16.mxu0 0
      %1743 = vmatpush1.bf16.msra.mxu0 0
      %1744 = vmatprep.subr.bf16.mxu0 0
      %1745 = vmatpush1.bf16.msra.mxu0 0
      %1746 = vmatprep.subr.bf16.mxu0 0
      %1747 = vmatpush1.bf16.msra.mxu0 0
      %1748 = vmatprep.subr.bf16.mxu0 0
      %1749 = vmatpush1.bf16.msra.mxu0 0
      %1750 = vmatprep.mubr.bf16.mxu0 0
      %1751 = vmatmul.mubr.bf16.gmra.mrb[0].mxu0 %v1707
      %v1752 = vpop.f32.mrb[0].mxu0
      %v1753 = vadd.f32 0.0, %v1752
      %v1754 = vpop.f32.mrb[0].mxu0
      %v1755 = vpop.f32.mrb[0].mxu0
      %v1756 = vadd.f32 0.0, %v1755
      %v1757 = vpop.f32.mrb[0].mxu0
      %1758 = vmatprep.mubr.bf16.mxu0 0
      %1759 = vmatmul.mubr.bf16.gmra.mrb[0].mxu0 %v1710
      %v1760 = vpop.f32.mrb[0].mxu0
      %v1761 = vadd.f32 0.0, %v1760
      %v1762 = vpop.f32.mrb[0].mxu0
      %v1763 = vpop.f32.mrb[0].mxu0
      %v1764 = vadd.f32 0.0, %v1763
      %v1765 = vpop.f32.mrb[0].mxu0
      %1766 = vdwg.mxu0
      %v1769 = vunpack.c.l.b16 %v1290
      %v1770 = vunpack.c.l.b16 %v1291
      %v1771 = vpack.c.b16 %v1770, %v1769
      %v1773 = vsel %vm1114, %v1288, 0
      %v1776 = vsel %vm1114, %v1289, 0
      %v1779 = vand.u32 %v1771, %v1714
      %1781 = vmatprep.subr.bf16.mxu0 0
      %1782 = vmatpush1.bf16.msra.mxu0 %v1779
      %1783 = vmatprep.subr.bf16.mxu0 0
      %1784 = vmatpush1.bf16.msra.mxu0 0
      %1785 = vmatprep.subr.bf16.mxu0 0
      %1786 = vmatpush1.bf16.msra.mxu0 0
      %1787 = vmatprep.subr.bf16.mxu0 0
      %1788 = vmatpush1.bf16.msra.mxu0 0
      %1789 = vmatprep.subr.bf16.mxu0 0
      %1790 = vmatpush1.bf16.msra.mxu0 0
      %1791 = vmatprep.subr.bf16.mxu0 0
      %1792 = vmatpush1.bf16.msra.mxu0 0
      %1793 = vmatprep.subr.bf16.mxu0 0
      %1794 = vmatpush1.bf16.msra.mxu0 0
      %1795 = vmatprep.subr.bf16.mxu0 0
      %1796 = vmatpush1.bf16.msra.mxu0 0
      %1797 = vmatprep.subr.bf16.mxu0 0
      %1798 = vmatpush1.bf16.msra.mxu0 0
      %1799 = vmatprep.subr.bf16.mxu0 0
      %1800 = vmatpush1.bf16.msra.mxu0 0
      %1801 = vmatprep.subr.bf16.mxu0 0
      %1802 = vmatpush1.bf16.msra.mxu0 0
      %1803 = vmatprep.subr.bf16.mxu0 0
      %1804 = vmatpush1.bf16.msra.mxu0 0
      %1805 = vmatprep.subr.bf16.mxu0 0
      %1806 = vmatpush1.bf16.msra.mxu0 0
      %1807 = vmatprep.subr.bf16.mxu0 0
      %1808 = vmatpush1.bf16.msra.mxu0 0
      %1809 = vmatprep.subr.bf16.mxu0 0
      %1810 = vmatpush1.bf16.msra.mxu0 0
      %1811 = vmatprep.subr.bf16.mxu0 0
      %1812 = vmatpush1.bf16.msra.mxu0 0
      %1813 = vmatprep.mubr.bf16.mxu0 0
      %1814 = vmatmul.mubr.bf16.gmra.mrb[0].mxu0 %v1773
      %v1815 = vpop.f32.mrb[0].mxu0
      %v1816 = vadd.f32 %v1753, %v1815
      %v1817 = vpop.f32.mrb[0].mxu0
      %v1818 = vpop.f32.mrb[0].mxu0
      %v1819 = vadd.f32 %v1756, %v1818
      %v1820 = vpop.f32.mrb[0].mxu0
      %1821 = vmatprep.mubr.bf16.mxu0 0
      %1822 = vmatmul.mubr.bf16.gmra.mrb[0].mxu0 %v1776
      %v1823 = vpop.f32.mrb[0].mxu0
      %v1824 = vadd.f32 %v1761, %v1823
      %v1825 = vpop.f32.mrb[0].mxu0
      %v1826 = vpop.f32.mrb[0].mxu0
      %v1827 = vadd.f32 %v1764, %v1826
      %v1828 = vpop.f32.mrb[0].mxu0
      %1829 = vdwg.mxu0
      %v1830 = vld [vmem:[%s8] sm:$0x1]
      %v1832 = vlaneseq
      %v1833 = vshrl.u32 %v1832, 7
      %v1834 = vsub.s32 0, %v1833
      %v1835 = vrot.slane %v1830, %v1834
      %v1837 = vadd.f32 %v1816, %v1835
      %v1838 = vadd.f32 %v1819, %v1835
      %v1839 = vadd.f32 %v1824, %v1835
      %v1840 = vadd.f32 %v1827, %v1835
      %v1841 = vadd.f32 %v856, %v1837
      %v1842 = vadd.f32 %v859, %v1838
      %v1843 = vadd.f32 %v864, %v1839
      %v1844 = vadd.f32 %v867, %v1840
      %s1845 = scalar_lea.vmem %s8, 1
      %v1846 = vld [vmem:[%s1845] sm:$0x1]
      %s1847 = scalar_lea.vmem %s8, 2
      %v1848 = vld [vmem:[%s1847] sm:$0x1]
      %v1849 = vsel %vm898, %v1841, 0.0
      %1850 = vadd.xlane.f32.xlu0 %v1849
      %v1851 = vpop.xlane.xlu0 %1850
      %v1852 = vsel %vm898, %v1842, 0.0
      %1853 = vadd.xlane.f32.xlu0 %v1852
      %v1854 = vpop.xlane.xlu0 %1853
      %v1855 = vsel %vm898, %v1843, 0.0
      %1856 = vadd.xlane.f32.xlu0 %v1855
      %v1857 = vpop.xlane.xlu0 %1856
      %v1858 = vsel %vm898, %v1844, 0.0
      %1859 = vadd.xlane.f32.xlu0 %v1858
      %v1860 = vpop.xlane.xlu0 %1859
      %v1861 = vrcp.pop 30.0
      %v1862 = vmul.f32 %v1851, %v1861
      %v1863 = vmul.f32 %v1854, %v1861
      %v1864 = vmul.f32 %v1857, %v1861
      %v1865 = vmul.f32 %v1860, %v1861
      %v1866 = vsub.f32 %v1841, %v1862
      %v1867 = vsub.f32 %v1842, %v1863
      %v1868 = vsub.f32 %v1843, %v1864
      %v1869 = vsub.f32 %v1844, %v1865
      %v1870 = vmul.f32 %v1866, %v1866
      %v1871 = vmul.f32 %v1867, %v1867
      %v1872 = vmul.f32 %v1868, %v1868
      %v1873 = vmul.f32 %v1869, %v1869
      %v1874 = vsel %vm898, %v1870, 0.0
      %1875 = vadd.xlane.f32.xlu0 %v1874
      %v1876 = vpop.xlane.xlu0 %1875
      %v1877 = vsel %vm898, %v1871, 0.0
      %1878 = vadd.xlane.f32.xlu0 %v1877
      %v1879 = vpop.xlane.xlu0 %1878
      %v1880 = vsel %vm898, %v1872, 0.0
      %1881 = vadd.xlane.f32.xlu0 %v1880
      %v1882 = vpop.xlane.xlu0 %1881
      %v1883 = vsel %vm898, %v1873, 0.0
      %1884 = vadd.xlane.f32.xlu0 %v1883
      %v1885 = vpop.xlane.xlu0 %1884
      %v1886 = vmul.f32 %v1876, %v1861
      %v1887 = vmul.f32 %v1879, %v1861
      %v1888 = vmul.f32 %v1882, %v1861
      %v1889 = vmul.f32 %v1885, %v1861
      %v1890 = vadd.f32 %v1886, 1e-05
      %v1891 = vadd.f32 %v1887, 1e-05
      %v1892 = vadd.f32 %v1888, 1e-05
      %v1893 = vadd.f32 %v1889, 1e-05
      %v1894 = vrsqrt.pop %v1890
      %v1895 = vrsqrt.pop %v1891
      %v1896 = vrsqrt.pop %v1892
      %v1897 = vrsqrt.pop %v1893
      %v1898 = vmul.f32 %v1866, %v1894
      %v1899 = vmul.f32 %v1867, %v1895
      %v1900 = vmul.f32 %v1868, %v1896
      %v1901 = vmul.f32 %v1869, %v1897
      %v1903 = vlaneseq
      %v1904 = vshrl.u32 %v1903, 7
      %v1905 = vsub.s32 0, %v1904
      %v1906 = vrot.slane %v1846, %v1905
      %v1908 = vmul.f32 %v1898, %v1906
      %v1909 = vmul.f32 %v1899, %v1906
      %v1910 = vmul.f32 %v1900, %v1906
      %v1911 = vmul.f32 %v1901, %v1906
      %v1913 = vlaneseq
      %v1914 = vshrl.u32 %v1913, 7
      %v1915 = vsub.s32 0, %v1914
      %v1916 = vrot.slane %v1848, %v1915
      %v1918 = vadd.f32 %v1908, %v1916
      %v1919 = vadd.f32 %v1909, %v1916
      %v1920 = vadd.f32 %v1910, %v1916
      %v1921 = vadd.f32 %v1911, %v1916
      %v1922 = vpack.c.bf16 %v1919, %v1918
      %v1923 = vpack.c.bf16 %v1921, %v1920
      %v1924 = vld [vmem:[%s6] sm:$0xf]
      %v1925 = vld [vmem:[%s6 + $0x4] sm:$0xf]
      %v1926 = vld [vmem:[%s6 + $0x8] sm:$0xf]
      %v1927 = vld [vmem:[%s6 + $0xc] sm:$0x7]
      %v1928 = vld [vmem:[%s9] sm:$0x1]
      %v1930 = vlaneseq
      %v1931 = vshrl.u32 %v1930, 7
      %v1932 = vsub.s32 0, %v1931
      %v1933 = vrot.slane %v1928, %v1932
      %v1939 = vunpack.c.l.b16 %v1924
      %v1940 = vunpack.c.l.b16 %v1925
      %v1941 = vunpack.c.l.b16 %v1926
      %v1942 = vunpack.c.l.b16 %v1927
      %v1943 = vpack.c.b16 %v1940, %v1939
      %v1944 = vpack.c.b16 %v1942, %v1941
      %v1947 = vsel %vm898, %v1922, 0
      %v1950 = vsel %vm898, %v1923, 0
      %v1953 = vsel %vm905, %v1944, 0
      %1955 = vmatprep.subr.bf16.mxu0 0
      %1956 = vmatpush1.bf16.msra.mxu0 %v1943
      %1957 = vmatprep.subr.bf16.mxu0 0
      %1958 = vmatpush1.bf16.msra.mxu0 %v1953
      %1959 = vmatprep.subr.bf16.mxu0 0
      %1960 = vmatpush1.bf16.msra.mxu0 0
      %1961 = vmatprep.subr.bf16.mxu0 0
      %1962 = vmatpush1.bf16.msra.mxu0 0
      %1963 = vmatprep.subr.bf16.mxu0 0
      %1964 = vmatpush1.bf16.msra.mxu0 0
      %1965 = vmatprep.subr.bf16.mxu0 0
      %1966 = vmatpush1.bf16.msra.mxu0 0
      %1967 = vmatprep.subr.bf16.mxu0 0
      %1968 = vmatpush1.bf16.msra.mxu0 0
      %1969 = vmatprep.subr.bf16.mxu0 0
      %1970 = vmatpush1.bf16.msra.mxu0 0
      %1971 = vmatprep.subr.bf16.mxu0 0
      %1972 = vmatpush1.bf16.msra.mxu0 0
      %1973 = vmatprep.subr.bf16.mxu0 0
      %1974 = vmatpush1.bf16.msra.mxu0 0
      %1975 = vmatprep.subr.bf16.mxu0 0
      %1976 = vmatpush1.bf16.msra.mxu0 0
      %1977 = vmatprep.subr.bf16.mxu0 0
      %1978 = vmatpush1.bf16.msra.mxu0 0
      %1979 = vmatprep.subr.bf16.mxu0 0
      %1980 = vmatpush1.bf16.msra.mxu0 0
      %1981 = vmatprep.subr.bf16.mxu0 0
      %1982 = vmatpush1.bf16.msra.mxu0 0
      %1983 = vmatprep.subr.bf16.mxu0 0
      %1984 = vmatpush1.bf16.msra.mxu0 0
      %1985 = vmatprep.subr.bf16.mxu0 0
      %1986 = vmatpush1.bf16.msra.mxu0 0
      %1987 = vmatprep.mubr.bf16.mxu0 0
      %1988 = vmatmul.mubr.bf16.gmra.mrb[0].mxu0 %v1947
      %v1989 = vpop.f32.mrb[0].mxu0
      %v1990 = vadd.f32 %v1933, %v1989
      %v1991 = vpop.f32.mrb[0].mxu0
      %v1992 = vpop.f32.mrb[0].mxu0
      %v1993 = vadd.f32 %v1933, %v1992
      %v1994 = vpop.f32.mrb[0].mxu0
      %1995 = vmatprep.mubr.bf16.mxu0 0
      %1996 = vmatmul.mubr.bf16.gmra.mrb[0].mxu0 %v1950
      %v1997 = vpop.f32.mrb[0].mxu0
      %v1998 = vadd.f32 %v1933, %v1997
      %v1999 = vpop.f32.mrb[0].mxu0
      %v2000 = vpop.f32.mrb[0].mxu0
      %v2001 = vadd.f32 %v1933, %v2000
      %v2002 = vpop.f32.mrb[0].mxu0
      %2003 = vdwg.mxu0
      %v2004 = vmax.f32 %v1990, 0.0
      %v2005 = vmax.f32 %v1993, 0.0
      %v2006 = vmax.f32 %v1998, 0.0
      %v2007 = vmax.f32 %v2001, 0.0
      %v2008 = vpack.c.bf16 %v2005, %v2004
      %v2009 = vpack.c.bf16 %v2007, %v2006
      %v2010 = vld [vmem:[%s7] sm:$0xf]
      %v2011 = vld [vmem:[%s7 + $0x4] sm:$0xf]
      %v2012 = vld [vmem:[%s7 + $0x8] sm:$0xf]
      %v2013 = vld [vmem:[%s7 + $0xc] sm:$0xf]
      %v2014 = vld [vmem:[%s7 + $0x10] sm:$0xf]
      %v2015 = vld [vmem:[%s7 + $0x14] sm:$0xf]
      %v2016 = vld [vmem:[%s7 + $0x18] sm:$0xf]
      %v2017 = vld [vmem:[%s7 + $0x1c] sm:$0xf]
      %s2018 = scalar_lea.vmem %s8, 5
      %v2019 = vld [vmem:[%s2018] sm:$0x1]
      %v2021 = vlaneseq
      %v2022 = vshrl.u32 %v2021, 7
      %v2023 = vsub.s32 0, %v2022
      %v2024 = vrot.slane %v2019, %v2023
      %v2034 = vunpack.c.l.b16 %v2010
      %v2035 = vunpack.c.l.b16 %v2011
      %v2036 = vunpack.c.l.b16 %v2012
      %v2037 = vunpack.c.l.b16 %v2013
      %v2038 = vunpack.c.l.b16 %v2014
      %v2039 = vunpack.c.l.b16 %v2015
      %v2040 = vunpack.c.l.b16 %v2016
      %v2041 = vunpack.c.l.b16 %v2017
      %v2042 = vpack.c.b16 %v2035, %v2034
      %v2043 = vpack.c.b16 %v2037, %v2036
      %v2044 = vpack.c.b16 %v2039, %v2038
      %v2045 = vpack.c.b16 %v2041, %v2040
      %vm2050 = vcmask 523264
      %v2052 = vsel %vm2050, %v2008, 0
      %v2055 = vsel %vm2050, %v2009, 0
      %2057 = vmatprep.subr.bf16.mxu0 0
      %2058 = vmatpush1.bf16.msra.mxu0 %v2042
      %2059 = vmatprep.subr.bf16.mxu0 0
      %2060 = vmatpush1.bf16.msra.mxu0 %v2043
      %2061 = vmatprep.subr.bf16.mxu0 0
      %2062 = vmatpush1.bf16.msra.mxu0 %v2044
      %2063 = vmatprep.subr.bf16.mxu0 0
      %2064 = vmatpush1.bf16.msra.mxu0 %v2045
      %2065 = vmatprep.subr.bf16.mxu0 0
      %2066 = vmatpush1.bf16.msra.mxu0 0
      %2067 = vmatprep.subr.bf16.mxu0 0
      %2068 = vmatpush1.bf16.msra.mxu0 0
      %2069 = vmatprep.subr.bf16.mxu0 0
      %2070 = vmatpush1.bf16.msra.mxu0 0
      %2071 = vmatprep.subr.bf16.mxu0 0
      %2072 = vmatpush1.bf16.msra.mxu0 0
      %2073 = vmatprep.subr.bf16.mxu0 0
      %2074 = vmatpush1.bf16.msra.mxu0 0
      %2075 = vmatprep.subr.bf16.mxu0 0
      %2076 = vmatpush1.bf16.msra.mxu0 0
      %2077 = vmatprep.subr.bf16.mxu0 0
      %2078 = vmatpush1.bf16.msra.mxu0 0
      %2079 = vmatprep.subr.bf16.mxu0 0
      %2080 = vmatpush1.bf16.msra.mxu0 0
      %2081 = vmatprep.subr.bf16.mxu0 0
      %2082 = vmatpush1.bf16.msra.mxu0 0
      %2083 = vmatprep.subr.bf16.mxu0 0
      %2084 = vmatpush1.bf16.msra.mxu0 0
      %2085 = vmatprep.subr.bf16.mxu0 0
      %2086 = vmatpush1.bf16.msra.mxu0 0
      %2087 = vmatprep.subr.bf16.mxu0 0
      %2088 = vmatpush1.bf16.msra.mxu0 0
      %2089 = vmatprep.mubr.bf16.mxu0 0
      %2090 = vmatmul.mubr.bf16.gmra.mrb[0].mxu0 %v2052
      %v2091 = vpop.f32.mrb[0].mxu0
      %v2092 = vadd.f32 %v2024, %v2091
      %v2093 = vpop.f32.mrb[0].mxu0
      %v2094 = vpop.f32.mrb[0].mxu0
      %v2095 = vadd.f32 %v2024, %v2094
      %v2096 = vpop.f32.mrb[0].mxu0
      %2097 = vmatprep.mubr.bf16.mxu0 0
      %2098 = vmatmul.mubr.bf16.gmra.mrb[0].mxu0 %v2055
      %v2099 = vpop.f32.mrb[0].mxu0
      %v2100 = vadd.f32 %v2024, %v2099
      %v2101 = vpop.f32.mrb[0].mxu0
      %v2102 = vpop.f32.mrb[0].mxu0
      %v2103 = vadd.f32 %v2024, %v2102
      %v2104 = vpop.f32.mrb[0].mxu0
      %2105 = vdwg.mxu0
      %v2106 = vadd.f32 %v1918, %v2092
      %v2107 = vadd.f32 %v1919, %v2095
      %v2108 = vadd.f32 %v1920, %v2100
      %v2109 = vadd.f32 %v1921, %v2103
      %s2110 = scalar_lea.vmem %s8, 3
      %v2111 = vld [vmem:[%s2110] sm:$0x1]
      %s2112 = scalar_lea.vmem %s8, 4
      %v2113 = vld [vmem:[%s2112] sm:$0x1]
      %v2114 = vsel %vm898, %v2106, 0.0
      %2115 = vadd.xlane.f32.xlu0 %v2114
      %v2116 = vpop.xlane.xlu0 %2115
      %v2117 = vsel %vm898, %v2107, 0.0
      %2118 = vadd.xlane.f32.xlu0 %v2117
      %v2119 = vpop.xlane.xlu0 %2118
      %v2120 = vsel %vm898, %v2108, 0.0
      %2121 = vadd.xlane.f32.xlu0 %v2120
      %v2122 = vpop.xlane.xlu0 %2121
      %v2123 = vsel %vm898, %v2109, 0.0
      %2124 = vadd.xlane.f32.xlu0 %v2123
      %v2125 = vpop.xlane.xlu0 %2124
      %v2126 = vmul.f32 %v2116, %v1861
      %v2127 = vmul.f32 %v2119, %v1861
      %v2128 = vmul.f32 %v2122, %v1861
      %v2129 = vmul.f32 %v2125, %v1861
      %v2130 = vsub.f32 %v2106, %v2126
      %v2131 = vsub.f32 %v2107, %v2127
      %v2132 = vsub.f32 %v2108, %v2128
      %v2133 = vsub.f32 %v2109, %v2129
      %v2134 = vmul.f32 %v2130, %v2130
      %v2135 = vmul.f32 %v2131, %v2131
      %v2136 = vmul.f32 %v2132, %v2132
      %v2137 = vmul.f32 %v2133, %v2133
      %v2138 = vsel %vm898, %v2134, 0.0
      %2139 = vadd.xlane.f32.xlu0 %v2138
      %v2140 = vpop.xlane.xlu0 %2139
      %v2141 = vsel %vm898, %v2135, 0.0
      %2142 = vadd.xlane.f32.xlu0 %v2141
      %v2143 = vpop.xlane.xlu0 %2142
      %v2144 = vsel %vm898, %v2136, 0.0
      %2145 = vadd.xlane.f32.xlu0 %v2144
      %v2146 = vpop.xlane.xlu0 %2145
      %v2147 = vsel %vm898, %v2137, 0.0
      %2148 = vadd.xlane.f32.xlu0 %v2147
      %v2149 = vpop.xlane.xlu0 %2148
      %v2150 = vmul.f32 %v2140, %v1861
      %v2151 = vmul.f32 %v2143, %v1861
      %v2152 = vmul.f32 %v2146, %v1861
      %v2153 = vmul.f32 %v2149, %v1861
      %v2154 = vadd.f32 %v2150, 1e-05
      %v2155 = vadd.f32 %v2151, 1e-05
      %v2156 = vadd.f32 %v2152, 1e-05
      %v2157 = vadd.f32 %v2153, 1e-05
      %v2158 = vrsqrt.pop %v2154
      %v2159 = vrsqrt.pop %v2155
      %v2160 = vrsqrt.pop %v2156
      %v2161 = vrsqrt.pop %v2157
      %v2162 = vmul.f32 %v2130, %v2158
      %v2163 = vmul.f32 %v2131, %v2159
      %v2164 = vmul.f32 %v2132, %v2160
      %v2165 = vmul.f32 %v2133, %v2161
      %v2167 = vlaneseq
      %v2168 = vshrl.u32 %v2167, 7
      %v2169 = vsub.s32 0, %v2168
      %v2170 = vrot.slane %v2111, %v2169
      %v2172 = vmul.f32 %v2162, %v2170
      %v2173 = vmul.f32 %v2163, %v2170
      %v2174 = vmul.f32 %v2164, %v2170
      %v2175 = vmul.f32 %v2165, %v2170
      %v2177 = vlaneseq
      %v2178 = vshrl.u32 %v2177, 7
      %v2179 = vsub.s32 0, %v2178
      %v2180 = vrot.slane %v2113, %v2179
      %v2182 = vadd.f32 %v2172, %v2180
      %v2183 = vadd.f32 %v2173, %v2180
      %v2184 = vadd.f32 %v2174, %v2180
      %v2185 = vadd.f32 %v2175, %v2180
      %v2186 = vpack.c.bf16 %v2183, %v2182
      %v2187 = vpack.c.bf16 %v2185, %v2184
      %s2188 = scalar_lea.vmem %s3, 96
      %v2189 = vld [vmem:[%s2188] sm:$0xf]
      %v2190 = vld [vmem:[%s2188 + $0x4] sm:$0xf]
      %v2191 = vld [vmem:[%s2188 + $0x8] sm:$0xf]
      %v2192 = vld [vmem:[%s2188 + $0xc] sm:$0x7]
      %s2193 = scalar_lea.vmem %s4, 6
      %v2194 = vld [vmem:[%s2193] sm:$0x1]
      %v2196 = vlaneseq
      %v2197 = vshrl.u32 %v2196, 7
      %v2198 = vsub.s32 0, %v2197
      %v2199 = vrot.slane %v2194, %v2198
      %v2205 = vunpack.c.l.b16 %v2189
      %v2206 = vunpack.c.l.b16 %v2190
      %v2207 = vunpack.c.l.b16 %v2191
      %v2208 = vunpack.c.l.b16 %v2192
      %v2209 = vpack.c.b16 %v2206, %v2205
      %v2210 = vpack.c.b16 %v2208, %v2207
      %v2213 = vsel %vm898, %v2186, 0
      %v2216 = vsel %vm898, %v2187, 0
      %v2219 = vsel %vm905, %v2210, 0
      %2221 = vmatprep.subr.bf16.mxu0 0
      %2222 = vmatpush1.bf16.msra.mxu0 %v2209
      %2223 = vmatprep.subr.bf16.mxu0 0
      %2224 = vmatpush1.bf16.msra.mxu0 %v2219
      %2225 = vmatprep.subr.bf16.mxu0 0
      %2226 = vmatpush1.bf16.msra.mxu0 0
      %2227 = vmatprep.subr.bf16.mxu0 0
      %2228 = vmatpush1.bf16.msra.mxu0 0
      %2229 = vmatprep.subr.bf16.mxu0 0
      %2230 = vmatpush1.bf16.msra.mxu0 0
      %2231 = vmatprep.subr.bf16.mxu0 0
      %2232 = vmatpush1.bf16.msra.mxu0 0
      %2233 = vmatprep.subr.bf16.mxu0 0
      %2234 = vmatpush1.bf16.msra.mxu0 0
      %2235 = vmatprep.subr.bf16.mxu0 0
      %2236 = vmatpush1.bf16.msra.mxu0 0
      %2237 = vmatprep.subr.bf16.mxu0 0
      %2238 = vmatpush1.bf16.msra.mxu0 0
      %2239 = vmatprep.subr.bf16.mxu0 0
      %2240 = vmatpush1.bf16.msra.mxu0 0
      %2241 = vmatprep.subr.bf16.mxu0 0
      %2242 = vmatpush1.bf16.msra.mxu0 0
      %2243 = vmatprep.subr.bf16.mxu0 0
      %2244 = vmatpush1.bf16.msra.mxu0 0
      %2245 = vmatprep.subr.bf16.mxu0 0
      %2246 = vmatpush1.bf16.msra.mxu0 0
      %2247 = vmatprep.subr.bf16.mxu0 0
      %2248 = vmatpush1.bf16.msra.mxu0 0
      %2249 = vmatprep.subr.bf16.mxu0 0
      %2250 = vmatpush1.bf16.msra.mxu0 0
      %2251 = vmatprep.subr.bf16.mxu0 0
      %2252 = vmatpush1.bf16.msra.mxu0 0
      %2253 = vmatprep.mubr.bf16.mxu0 0
      %2254 = vmatmul.mubr.bf16.gmra.mrb[0].mxu0 %v2213
      %v2255 = vpop.f32.mrb[0].mxu0
      %v2256 = vadd.f32 %v2199, %v2255
      %v2257 = vpop.f32.mrb[0].mxu0
      %v2258 = vpop.f32.mrb[0].mxu0
      %v2259 = vadd.f32 %v2199, %v2258
      %v2260 = vpop.f32.mrb[0].mxu0
      %2261 = vmatprep.mubr.bf16.mxu0 0
      %2262 = vmatmul.mubr.bf16.gmra.mrb[0].mxu0 %v2216
      %v2263 = vpop.f32.mrb[0].mxu0
      %v2264 = vadd.f32 %v2199, %v2263
      %v2265 = vpop.f32.mrb[0].mxu0
      %v2266 = vpop.f32.mrb[0].mxu0
      %v2267 = vadd.f32 %v2199, %v2266
      %v2268 = vpop.f32.mrb[0].mxu0
      %2269 = vdwg.mxu0
      %s2270 = scalar_lea.vmem %s3, 112
      %v2271 = vld [vmem:[%s2270] sm:$0xf]
      %v2272 = vld [vmem:[%s2270 + $0x4] sm:$0xf]
      %v2273 = vld [vmem:[%s2270 + $0x8] sm:$0xf]
      %v2274 = vld [vmem:[%s2270 + $0xc] sm:$0x7]
      %s2275 = scalar_lea.vmem %s4, 7
      %v2276 = vld [vmem:[%s2275] sm:$0x1]
      %v2278 = vlaneseq
      %v2279 = vshrl.u32 %v2278, 7
      %v2280 = vsub.s32 0, %v2279
      %v2281 = vrot.slane %v2276, %v2280
      %v2287 = vunpack.c.l.b16 %v2271
      %v2288 = vunpack.c.l.b16 %v2272
      %v2289 = vunpack.c.l.b16 %v2273
      %v2290 = vunpack.c.l.b16 %v2274
      %v2291 = vpack.c.b16 %v2288, %v2287
      %v2292 = vpack.c.b16 %v2290, %v2289
      %v2295 = vsel %vm905, %v2292, 0
      %2297 = vmatprep.subr.bf16.mxu0 0
      %2298 = vmatpush1.bf16.msra.mxu0 %v2291
      %2299 = vmatprep.subr.bf16.mxu0 0
      %2300 = vmatpush1.bf16.msra.mxu0 %v2295
      %2301 = vmatprep.subr.bf16.mxu0 0
      %2302 = vmatpush1.bf16.msra.mxu0 0
      %2303 = vmatprep.subr.bf16.mxu0 0
      %2304 = vmatpush1.bf16.msra.mxu0 0
      %2305 = vmatprep.subr.bf16.mxu0 0
      %2306 = vmatpush1.bf16.msra.mxu0 0
      %2307 = vmatprep.subr.bf16.mxu0 0
      %2308 = vmatpush1.bf16.msra.mxu0 0
      %2309 = vmatprep.subr.bf16.mxu0 0
      %2310 = vmatpush1.bf16.msra.mxu0 0
      %2311 = vmatprep.subr.bf16.mxu0 0
      %2312 = vmatpush1.bf16.msra.mxu0 0
      %2313 = vmatprep.subr.bf16.mxu0 0
      %2314 = vmatpush1.bf16.msra.mxu0 0
      %2315 = vmatprep.subr.bf16.mxu0 0
      %2316 = vmatpush1.bf16.msra.mxu0 0
      %2317 = vmatprep.subr.bf16.mxu0 0
      %2318 = vmatpush1.bf16.msra.mxu0 0
      %2319 = vmatprep.subr.bf16.mxu0 0
      %2320 = vmatpush1.bf16.msra.mxu0 0
      %2321 = vmatprep.subr.bf16.mxu0 0
      %2322 = vmatpush1.bf16.msra.mxu0 0
      %2323 = vmatprep.subr.bf16.mxu0 0
      %2324 = vmatpush1.bf16.msra.mxu0 0
      %2325 = vmatprep.subr.bf16.mxu0 0
      %2326 = vmatpush1.bf16.msra.mxu0 0
      %2327 = vmatprep.subr.bf16.mxu0 0
      %2328 = vmatpush1.bf16.msra.mxu0 0
      %2329 = vmatprep.mubr.bf16.mxu0 0
      %2330 = vmatmul.mubr.bf16.gmra.mrb[0].mxu0 %v2213
      %v2331 = vpop.f32.mrb[0].mxu0
      %v2332 = vadd.f32 %v2281, %v2331
      %v2333 = vpop.f32.mrb[0].mxu0
      %v2334 = vpop.f32.mrb[0].mxu0
      %v2335 = vadd.f32 %v2281, %v2334
      %v2336 = vpop.f32.mrb[0].mxu0
      %2337 = vmatprep.mubr.bf16.mxu0 0
      %2338 = vmatmul.mubr.bf16.gmra.mrb[0].mxu0 %v2216
      %v2339 = vpop.f32.mrb[0].mxu0
      %v2340 = vadd.f32 %v2281, %v2339
      %v2341 = vpop.f32.mrb[0].mxu0
      %v2342 = vpop.f32.mrb[0].mxu0
      %v2343 = vadd.f32 %v2281, %v2342
      %v2344 = vpop.f32.mrb[0].mxu0
      %2345 = vdwg.mxu0
      %s2346 = scalar_lea.vmem %s3, 128
      %v2347 = vld [vmem:[%s2346] sm:$0xf]
      %v2348 = vld [vmem:[%s2346 + $0x4] sm:$0xf]
      %v2349 = vld [vmem:[%s2346 + $0x8] sm:$0xf]
      %v2350 = vld [vmem:[%s2346 + $0xc] sm:$0x7]
      %s2351 = scalar_lea.vmem %s4, 8
      %v2352 = vld [vmem:[%s2351] sm:$0x1]
      %v2354 = vlaneseq
      %v2355 = vshrl.u32 %v2354, 7
      %v2356 = vsub.s32 0, %v2355
      %v2357 = vrot.slane %v2352, %v2356
      %v2363 = vunpack.c.l.b16 %v2347
      %v2364 = vunpack.c.l.b16 %v2348
      %v2365 = vunpack.c.l.b16 %v2349
      %v2366 = vunpack.c.l.b16 %v2350
      %v2367 = vpack.c.b16 %v2364, %v2363
      %v2368 = vpack.c.b16 %v2366, %v2365
      %v2371 = vsel %vm905, %v2368, 0
      %2373 = vmatprep.subr.bf16.mxu0 0
      %2374 = vmatpush1.bf16.msra.mxu0 %v2367
      %2375 = vmatprep.subr.bf16.mxu0 0
      %2376 = vmatpush1.bf16.msra.mxu0 %v2371
      %2377 = vmatprep.subr.bf16.mxu0 0
      %2378 = vmatpush1.bf16.msra.mxu0 0
      %2379 = vmatprep.subr.bf16.mxu0 0
      %2380 = vmatpush1.bf16.msra.mxu0 0
      %2381 = vmatprep.subr.bf16.mxu0 0
      %2382 = vmatpush1.bf16.msra.mxu0 0
      %2383 = vmatprep.subr.bf16.mxu0 0
      %2384 = vmatpush1.bf16.msra.mxu0 0
      %2385 = vmatprep.subr.bf16.mxu0 0
      %2386 = vmatpush1.bf16.msra.mxu0 0
      %2387 = vmatprep.subr.bf16.mxu0 0
      %2388 = vmatpush1.bf16.msra.mxu0 0
      %2389 = vmatprep.subr.bf16.mxu0 0
      %2390 = vmatpush1.bf16.msra.mxu0 0
      %2391 = vmatprep.subr.bf16.mxu0 0
      %2392 = vmatpush1.bf16.msra.mxu0 0
      %2393 = vmatprep.subr.bf16.mxu0 0
      %2394 = vmatpush1.bf16.msra.mxu0 0
      %2395 = vmatprep.subr.bf16.mxu0 0
      %2396 = vmatpush1.bf16.msra.mxu0 0
      %2397 = vmatprep.subr.bf16.mxu0 0
      %2398 = vmatpush1.bf16.msra.mxu0 0
      %2399 = vmatprep.subr.bf16.mxu0 0
      %2400 = vmatpush1.bf16.msra.mxu0 0
      %2401 = vmatprep.subr.bf16.mxu0 0
      %2402 = vmatpush1.bf16.msra.mxu0 0
      %2403 = vmatprep.subr.bf16.mxu0 0
      %2404 = vmatpush1.bf16.msra.mxu0 0
      %2405 = vmatprep.mubr.bf16.mxu0 0
      %2406 = vmatmul.mubr.bf16.gmra.mrb[0].mxu0 %v2213
      %v2407 = vpop.f32.mrb[0].mxu0
      %v2408 = vadd.f32 %v2357, %v2407
      %v2409 = vpop.f32.mrb[0].mxu0
      %v2410 = vpop.f32.mrb[0].mxu0
      %v2411 = vadd.f32 %v2357, %v2410
      %v2412 = vpop.f32.mrb[0].mxu0
      %2413 = vmatprep.mubr.bf16.mxu0 0
      %2414 = vmatmul.mubr.bf16.gmra.mrb[0].mxu0 %v2216
      %v2415 = vpop.f32.mrb[0].mxu0
      %v2416 = vadd.f32 %v2357, %v2415
      %v2417 = vpop.f32.mrb[0].mxu0
      %v2418 = vpop.f32.mrb[0].mxu0
      %v2419 = vadd.f32 %v2357, %v2418
      %v2420 = vpop.f32.mrb[0].mxu0
      %2421 = vdwg.mxu0
      %v2422 = vpack.c.bf16 %v2259, %v2256
      %v2423 = vpack.c.bf16 %v2267, %v2264
      %v2424 = vpack.c.bf16 %v2335, %v2332
      %v2425 = vpack.c.bf16 %v2343, %v2340
      %v2427 = vsel %vm1114, %v2422, 0
      %v2430 = vsel %vm1114, %v2423, 0
      %v2433 = vsel %vm1114, %v2424, 0
      %v2436 = vsel %vm1114, %v2425, 0
      %2438 = vmatprep.subr.bf16.mxu0 0
      %2439 = vmatpush1.bf16.xpose.msra.mxu0 %v2433
      %2440 = vmatprep.subr.bf16.mxu0 0
      %2441 = vmatpush1.bf16.xpose.msra.mxu0 %v2436
      %2442 = vmatprep.subr.bf16.mxu0 0
      %2443 = vmatpush1.bf16.xpose.msra.mxu0 0
      %2444 = vmatprep.subr.bf16.mxu0 0
      %2445 = vmatpush1.bf16.xpose.msra.mxu0 0
      %2446 = vmatprep.subr.bf16.mxu0 0
      %2447 = vmatpush1.bf16.xpose.msra.mxu0 0
      %2448 = vmatprep.subr.bf16.mxu0 0
      %2449 = vmatpush1.bf16.xpose.msra.mxu0 0
      %2450 = vmatprep.subr.bf16.mxu0 0
      %2451 = vmatpush1.bf16.xpose.msra.mxu0 0
      %2452 = vmatprep.subr.bf16.mxu0 0
      %2453 = vmatpush1.bf16.xpose.msra.mxu0 0
      %2454 = vmatprep.subr.bf16.mxu0 0
      %2455 = vmatpush1.bf16.xpose.msra.mxu0 0
      %2456 = vmatprep.subr.bf16.mxu0 0
      %2457 = vmatpush1.bf16.xpose.msra.mxu0 0
      %2458 = vmatprep.subr.bf16.mxu0 0
      %2459 = vmatpush1.bf16.xpose.msra.mxu0 0
      %2460 = vmatprep.subr.bf16.mxu0 0
      %2461 = vmatpush1.bf16.xpose.msra.mxu0 0
      %2462 = vmatprep.subr.bf16.mxu0 0
      %2463 = vmatpush1.bf16.xpose.msra.mxu0 0
      %2464 = vmatprep.subr.bf16.mxu0 0
      %2465 = vmatpush1.bf16.xpose.msra.mxu0 0
      %2466 = vmatprep.subr.bf16.mxu0 0
      %2467 = vmatpush1.bf16.xpose.msra.mxu0 0
      %2468 = vmatprep.subr.bf16.mxu0 0
      %2469 = vmatpush1.bf16.xpose.msra.mxu0 0
      %2470 = vmatprep.mubr.bf16.mxu0 0
      %2471 = vmatmul.mubr.bf16.gmra.mrb[0].mxu0 %v2427
      %v2472 = vpop.f32.mrb[0].mxu0
      %v2473 = vadd.f32 0.0, %v2472
      %v2474 = vpop.f32.mrb[0].mxu0
      %v2475 = vpop.f32.mrb[0].mxu0
      %v2476 = vadd.f32 0.0, %v2475
      %v2477 = vpop.f32.mrb[0].mxu0
      %2478 = vmatprep.mubr.bf16.mxu0 0
      %2479 = vmatmul.mubr.bf16.gmra.mrb[0].mxu0 %v2430
      %v2480 = vpop.f32.mrb[0].mxu0
      %v2481 = vadd.f32 0.0, %v2480
      %v2482 = vpop.f32.mrb[0].mxu0
      %v2483 = vpop.f32.mrb[0].mxu0
      %v2484 = vadd.f32 0.0, %v2483
      %v2485 = vpop.f32.mrb[0].mxu0
      %2486 = vdwg.mxu0
      %v2487 = vmul.f32 %v2473, 0.2581989
      %v2488 = vmul.f32 %v2476, 0.2581989
      %v2489 = vmul.f32 %v2481, 0.2581989
      %v2490 = vmul.f32 %v2484, 0.2581989
      %v2491 = vadd.f32 %v2487, %v870
      %v2492 = vadd.f32 %v2488, %v871
      %v2493 = vadd.f32 %v2489, %v872
      %v2494 = vadd.f32 %v2490, %v873
      %v2495 = vsel %vm1184, %v2491, -inf
      %2496 = vmax.xlane.f32.xlu0 %v2495
      %v2497 = vpop.xlane.xlu0 %2496
      %v2498 = vsel %vm1184, %v2492, -inf
      %2499 = vmax.xlane.f32.xlu0 %v2498
      %v2500 = vpop.xlane.xlu0 %2499
      %v2501 = vsel %vm1184, %v2493, -inf
      %2502 = vmax.xlane.f32.xlu0 %v2501
      %v2503 = vpop.xlane.xlu0 %2502
      %v2504 = vsel %vm1184, %v2494, -inf
      %2505 = vmax.xlane.f32.xlu0 %v2504
      %v2506 = vpop.xlane.xlu0 %2505
      %v2507 = vsub.f32 %v2491, %v2497
      %v2508 = vsub.f32 %v2492, %v2500
      %v2509 = vsub.f32 %v2493, %v2503
      %v2510 = vsub.f32 %v2494, %v2506
      %v2511 = vmul.f32 %v2507, 1.442695
      %v2512 = vpow.pop %v2511
      %v2513 = vmul.f32 %v2508, 1.442695
      %v2514 = vpow.pop %v2513
      %v2515 = vmul.f32 %v2509, 1.442695
      %v2516 = vpow.pop %v2515
      %v2517 = vmul.f32 %v2510, 1.442695
      %v2518 = vpow.pop %v2517
      %v2519 = vsel %vm1184, %v2512, 0.0
      %2520 = vadd.xlane.f32.xlu0 %v2519
      %v2521 = vpop.xlane.xlu0 %2520
      %v2522 = vsel %vm1184, %v2514, 0.0
      %2523 = vadd.xlane.f32.xlu0 %v2522
      %v2524 = vpop.xlane.xlu0 %2523
      %v2525 = vsel %vm1184, %v2516, 0.0
      %2526 = vadd.xlane.f32.xlu0 %v2525
      %v2527 = vpop.xlane.xlu0 %2526
      %v2528 = vsel %vm1184, %v2518, 0.0
      %2529 = vadd.xlane.f32.xlu0 %v2528
      %v2530 = vpop.xlane.xlu0 %2529
      %v2531 = vrcp.pop %v2521
      %v2532 = vrcp.pop %v2524
      %v2533 = vrcp.pop %v2527
      %v2534 = vrcp.pop %v2530
      %v2535 = vmul.f32 %v2512, %v2531
      %v2536 = vmul.f32 %v2514, %v2532
      %v2537 = vmul.f32 %v2516, %v2533
      %v2538 = vmul.f32 %v2518, %v2534
      %v2539 = vpack.c.bf16 %v2536, %v2535
      %v2540 = vpack.c.bf16 %v2538, %v2537
      %v2541 = vpack.c.bf16 %v2411, %v2408
      %v2542 = vpack.c.bf16 %v2419, %v2416
      %v2544 = vsel %vm1184, %v2539, 0
      %v2547 = vsel %vm1184, %v2540, 0
      %2549 = vmatprep.subr.bf16.mxu0 0
      %2550 = vmatpush1.bf16.msra.mxu0 %v2541
      %2551 = vmatprep.subr.bf16.mxu0 0
      %2552 = vmatpush1.bf16.msra.mxu0 %v2542
      %2553 = vmatprep.subr.bf16.mxu0 0
      %2554 = vmatpush1.bf16.msra.mxu0 0
      %2555 = vmatprep.subr.bf16.mxu0 0
      %2556 = vmatpush1.bf16.msra.mxu0 0
      %2557 = vmatprep.subr.bf16.mxu0 0
      %2558 = vmatpush1.bf16.msra.mxu0 0
      %2559 = vmatprep.subr.bf16.mxu0 0
      %2560 = vmatpush1.bf16.msra.mxu0 0
      %2561 = vmatprep.subr.bf16.mxu0 0
      %2562 = vmatpush1.bf16.msra.mxu0 0
      %2563 = vmatprep.subr.bf16.mxu0 0
      %2564 = vmatpush1.bf16.msra.mxu0 0
      %2565 = vmatprep.subr.bf16.mxu0 0
      %2566 = vmatpush1.bf16.msra.mxu0 0
      %2567 = vmatprep.subr.bf16.mxu0 0
      %2568 = vmatpush1.bf16.msra.mxu0 0
      %2569 = vmatprep.subr.bf16.mxu0 0
      %2570 = vmatpush1.bf16.msra.mxu0 0
      %2571 = vmatprep.subr.bf16.mxu0 0
      %2572 = vmatpush1.bf16.msra.mxu0 0
      %2573 = vmatprep.subr.bf16.mxu0 0
      %2574 = vmatpush1.bf16.msra.mxu0 0
      %2575 = vmatprep.subr.bf16.mxu0 0
      %2576 = vmatpush1.bf16.msra.mxu0 0
      %2577 = vmatprep.subr.bf16.mxu0 0
      %2578 = vmatpush1.bf16.msra.mxu0 0
      %2579 = vmatprep.subr.bf16.mxu0 0
      %2580 = vmatpush1.bf16.msra.mxu0 0
      %2581 = vmatprep.mubr.bf16.mxu0 0
      %2582 = vmatmul.mubr.bf16.gmra.mrb[0].mxu0 %v2544
      %v2583 = vpop.f32.mrb[0].mxu0
      %v2584 = vadd.f32 0.0, %v2583
      %v2585 = vpop.f32.mrb[0].mxu0
      %v2586 = vpop.f32.mrb[0].mxu0
      %v2587 = vadd.f32 0.0, %v2586
      %v2588 = vpop.f32.mrb[0].mxu0
      %2589 = vmatprep.mubr.bf16.mxu0 0
      %2590 = vmatmul.mubr.bf16.gmra.mrb[0].mxu0 %v2547
      %v2591 = vpop.f32.mrb[0].mxu0
      %v2592 = vadd.f32 0.0, %v2591
      %v2593 = vpop.f32.mrb[0].mxu0
      %v2594 = vpop.f32.mrb[0].mxu0
      %v2595 = vadd.f32 0.0, %v2594
      %v2596 = vpop.f32.mrb[0].mxu0
      %2597 = vdwg.mxu0
      %v2598 = vpack.c.bf16 %v2587, %v2584
      %v2599 = vpack.c.bf16 %v2595, %v2592
      %s2600 = scalar_lea.vmem %s5, 16
      %v2601 = vld [vmem:[%s2600] sm:$0xf]
      %v2602 = vld [vmem:[%s2600 + $0x4] sm:$0xf]
      %s2603 = scalar_lea.vmem %s3, 144
      %v2604 = vld [vmem:[%s2603] sm:$0xf]
      %v2605 = vld [vmem:[%s2603 + $0x4] sm:$0xf]
      %v2606 = vld [vmem:[%s2603 + $0x8] sm:$0xf]
      %v2607 = vld [vmem:[%s2603 + $0xc] sm:$0x7]
      %s2608 = scalar_lea.vmem %s4, 9
      %v2609 = vld [vmem:[%s2608] sm:$0x1]
      %v2611 = vlaneseq
      %v2612 = vshrl.u32 %v2611, 7
      %v2613 = vsub.s32 0, %v2612
      %v2614 = vrot.slane %v2609, %v2613
      %v2620 = vunpack.c.l.b16 %v2604
      %v2621 = vunpack.c.l.b16 %v2605
      %v2622 = vunpack.c.l.b16 %v2606
      %v2623 = vunpack.c.l.b16 %v2607
      %v2624 = vpack.c.b16 %v2621, %v2620
      %v2625 = vpack.c.b16 %v2623, %v2622
      %v2628 = vsel %vm905, %v2625, 0
      %2630 = vmatprep.subr.bf16.mxu0 0
      %2631 = vmatpush1.bf16.msra.mxu0 %v2624
      %2632 = vmatprep.subr.bf16.mxu0 0
      %2633 = vmatpush1.bf16.msra.mxu0 %v2628
      %2634 = vmatprep.subr.bf16.mxu0 0
      %2635 = vmatpush1.bf16.msra.mxu0 0
      %2636 = vmatprep.subr.bf16.mxu0 0
      %2637 = vmatpush1.bf16.msra.mxu0 0
      %2638 = vmatprep.subr.bf16.mxu0 0
      %2639 = vmatpush1.bf16.msra.mxu0 0
      %2640 = vmatprep.subr.bf16.mxu0 0
      %2641 = vmatpush1.bf16.msra.mxu0 0
      %2642 = vmatprep.subr.bf16.mxu0 0
      %2643 = vmatpush1.bf16.msra.mxu0 0
      %2644 = vmatprep.subr.bf16.mxu0 0
      %2645 = vmatpush1.bf16.msra.mxu0 0
      %2646 = vmatprep.subr.bf16.mxu0 0
      %2647 = vmatpush1.bf16.msra.mxu0 0
      %2648 = vmatprep.subr.bf16.mxu0 0
      %2649 = vmatpush1.bf16.msra.mxu0 0
      %2650 = vmatprep.subr.bf16.mxu0 0
      %2651 = vmatpush1.bf16.msra.mxu0 0
      %2652 = vmatprep.subr.bf16.mxu0 0
      %2653 = vmatpush1.bf16.msra.mxu0 0
      %2654 = vmatprep.subr.bf16.mxu0 0
      %2655 = vmatpush1.bf16.msra.mxu0 0
      %2656 = vmatprep.subr.bf16.mxu0 0
      %2657 = vmatpush1.bf16.msra.mxu0 0
      %2658 = vmatprep.subr.bf16.mxu0 0
      %2659 = vmatpush1.bf16.msra.mxu0 0
      %2660 = vmatprep.subr.bf16.mxu0 0
      %2661 = vmatpush1.bf16.msra.mxu0 0
      %2662 = vmatprep.mubr.bf16.mxu0 0
      %2663 = vmatmul.mubr.bf16.gmra.mrb[0].mxu0 %v2213
      %v2664 = vpop.f32.mrb[0].mxu0
      %v2665 = vadd.f32 %v2614, %v2664
      %v2666 = vpop.f32.mrb[0].mxu0
      %v2667 = vpop.f32.mrb[0].mxu0
      %v2668 = vadd.f32 %v2614, %v2667
      %v2669 = vpop.f32.mrb[0].mxu0
      %2670 = vmatprep.mubr.bf16.mxu0 0
      %2671 = vmatmul.mubr.bf16.gmra.mrb[0].mxu0 %v2216
      %v2672 = vpop.f32.mrb[0].mxu0
      %v2673 = vadd.f32 %v2614, %v2672
      %v2674 = vpop.f32.mrb[0].mxu0
      %v2675 = vpop.f32.mrb[0].mxu0
      %v2676 = vadd.f32 %v2614, %v2675
      %v2677 = vpop.f32.mrb[0].mxu0
      %2678 = vdwg.mxu0
      %s2679 = scalar_lea.vmem %s3, 160
      %v2680 = vld [vmem:[%s2679] sm:$0xf]
      %v2681 = vld [vmem:[%s2679 + $0x4] sm:$0xf]
      %v2682 = vld [vmem:[%s2679 + $0x8] sm:$0xf]
      %v2683 = vld [vmem:[%s2679 + $0xc] sm:$0x7]
      %s2684 = scalar_lea.vmem %s4, 10
      %v2685 = vld [vmem:[%s2684] sm:$0x1]
      %v2687 = vlaneseq
      %v2688 = vshrl.u32 %v2687, 7
      %v2689 = vsub.s32 0, %v2688
      %v2690 = vrot.slane %v2685, %v2689
      %v2696 = vunpack.c.l.b16 %v2680
      %v2697 = vunpack.c.l.b16 %v2681
      %v2698 = vunpack.c.l.b16 %v2682
      %v2699 = vunpack.c.l.b16 %v2683
      %v2700 = vpack.c.b16 %v2697, %v2696
      %v2701 = vpack.c.b16 %v2699, %v2698
      %v2704 = vsel %vm905, %v2701, 0
      %2706 = vmatprep.subr.bf16.mxu0 0
      %2707 = vmatpush1.bf16.msra.mxu0 %v2700
      %2708 = vmatprep.subr.bf16.mxu0 0
      %2709 = vmatpush1.bf16.msra.mxu0 %v2704
      %2710 = vmatprep.subr.bf16.mxu0 0
      %2711 = vmatpush1.bf16.msra.mxu0 0
      %2712 = vmatprep.subr.bf16.mxu0 0
      %2713 = vmatpush1.bf16.msra.mxu0 0
      %2714 = vmatprep.subr.bf16.mxu0 0
      %2715 = vmatpush1.bf16.msra.mxu0 0
      %2716 = vmatprep.subr.bf16.mxu0 0
      %2717 = vmatpush1.bf16.msra.mxu0 0
      %2718 = vmatprep.subr.bf16.mxu0 0
      %2719 = vmatpush1.bf16.msra.mxu0 0
      %2720 = vmatprep.subr.bf16.mxu0 0
      %2721 = vmatpush1.bf16.msra.mxu0 0
      %2722 = vmatprep.subr.bf16.mxu0 0
      %2723 = vmatpush1.bf16.msra.mxu0 0
      %2724 = vmatprep.subr.bf16.mxu0 0
      %2725 = vmatpush1.bf16.msra.mxu0 0
      %2726 = vmatprep.subr.bf16.mxu0 0
      %2727 = vmatpush1.bf16.msra.mxu0 0
      %2728 = vmatprep.subr.bf16.mxu0 0
      %2729 = vmatpush1.bf16.msra.mxu0 0
      %2730 = vmatprep.subr.bf16.mxu0 0
      %2731 = vmatpush1.bf16.msra.mxu0 0
      %2732 = vmatprep.subr.bf16.mxu0 0
      %2733 = vmatpush1.bf16.msra.mxu0 0
      %2734 = vmatprep.subr.bf16.mxu0 0
      %2735 = vmatpush1.bf16.msra.mxu0 0
      %2736 = vmatprep.subr.bf16.mxu0 0
      %2737 = vmatpush1.bf16.msra.mxu0 0
      %2738 = vmatprep.mubr.bf16.mxu0 0
      %2739 = vmatmul.mubr.bf16.gmra.mrb[0].mxu0 %v2213
      %v2740 = vpop.f32.mrb[0].mxu0
      %v2741 = vadd.f32 %v2690, %v2740
      %v2742 = vpop.f32.mrb[0].mxu0
      %v2743 = vpop.f32.mrb[0].mxu0
      %v2744 = vadd.f32 %v2690, %v2743
      %v2745 = vpop.f32.mrb[0].mxu0
      %2746 = vmatprep.mubr.bf16.mxu0 0
      %2747 = vmatmul.mubr.bf16.gmra.mrb[0].mxu0 %v2216
      %v2748 = vpop.f32.mrb[0].mxu0
      %v2749 = vadd.f32 %v2690, %v2748
      %v2750 = vpop.f32.mrb[0].mxu0
      %v2751 = vpop.f32.mrb[0].mxu0
      %v2752 = vadd.f32 %v2690, %v2751
      %v2753 = vpop.f32.mrb[0].mxu0
      %2754 = vdwg.mxu0
      %s2755 = scalar_lea.vmem %s3, 176
      %v2756 = vld [vmem:[%s2755] sm:$0xf]
      %v2757 = vld [vmem:[%s2755 + $0x4] sm:$0xf]
      %v2758 = vld [vmem:[%s2755 + $0x8] sm:$0xf]
      %v2759 = vld [vmem:[%s2755 + $0xc] sm:$0x7]
      %s2760 = scalar_lea.vmem %s4, 11
      %v2761 = vld [vmem:[%s2760] sm:$0x1]
      %v2763 = vlaneseq
      %v2764 = vshrl.u32 %v2763, 7
      %v2765 = vsub.s32 0, %v2764
      %v2766 = vrot.slane %v2761, %v2765
      %v2772 = vunpack.c.l.b16 %v2756
      %v2773 = vunpack.c.l.b16 %v2757
      %v2774 = vunpack.c.l.b16 %v2758
      %v2775 = vunpack.c.l.b16 %v2759
      %v2776 = vpack.c.b16 %v2773, %v2772
      %v2777 = vpack.c.b16 %v2775, %v2774
      %v2780 = vsel %vm905, %v2777, 0
      %2782 = vmatprep.subr.bf16.mxu0 0
      %2783 = vmatpush1.bf16.msra.mxu0 %v2776
      %2784 = vmatprep.subr.bf16.mxu0 0
      %2785 = vmatpush1.bf16.msra.mxu0 %v2780
      %2786 = vmatprep.subr.bf16.mxu0 0
      %2787 = vmatpush1.bf16.msra.mxu0 0
      %2788 = vmatprep.subr.bf16.mxu0 0
      %2789 = vmatpush1.bf16.msra.mxu0 0
      %2790 = vmatprep.subr.bf16.mxu0 0
      %2791 = vmatpush1.bf16.msra.mxu0 0
      %2792 = vmatprep.subr.bf16.mxu0 0
      %2793 = vmatpush1.bf16.msra.mxu0 0
      %2794 = vmatprep.subr.bf16.mxu0 0
      %2795 = vmatpush1.bf16.msra.mxu0 0
      %2796 = vmatprep.subr.bf16.mxu0 0
      %2797 = vmatpush1.bf16.msra.mxu0 0
      %2798 = vmatprep.subr.bf16.mxu0 0
      %2799 = vmatpush1.bf16.msra.mxu0 0
      %2800 = vmatprep.subr.bf16.mxu0 0
      %2801 = vmatpush1.bf16.msra.mxu0 0
      %2802 = vmatprep.subr.bf16.mxu0 0
      %2803 = vmatpush1.bf16.msra.mxu0 0
      %2804 = vmatprep.subr.bf16.mxu0 0
      %2805 = vmatpush1.bf16.msra.mxu0 0
      %2806 = vmatprep.subr.bf16.mxu0 0
      %2807 = vmatpush1.bf16.msra.mxu0 0
      %2808 = vmatprep.subr.bf16.mxu0 0
      %2809 = vmatpush1.bf16.msra.mxu0 0
      %2810 = vmatprep.subr.bf16.mxu0 0
      %2811 = vmatpush1.bf16.msra.mxu0 0
      %2812 = vmatprep.subr.bf16.mxu0 0
      %2813 = vmatpush1.bf16.msra.mxu0 0
      %2814 = vmatprep.mubr.bf16.mxu0 0
      %2815 = vmatmul.mubr.bf16.gmra.mrb[0].mxu0 %v2213
      %v2816 = vpop.f32.mrb[0].mxu0
      %v2817 = vadd.f32 %v2766, %v2816
      %v2818 = vpop.f32.mrb[0].mxu0
      %v2819 = vpop.f32.mrb[0].mxu0
      %v2820 = vadd.f32 %v2766, %v2819
      %v2821 = vpop.f32.mrb[0].mxu0
      %2822 = vmatprep.mubr.bf16.mxu0 0
      %2823 = vmatmul.mubr.bf16.gmra.mrb[0].mxu0 %v2216
      %v2824 = vpop.f32.mrb[0].mxu0
      %v2825 = vadd.f32 %v2766, %v2824
      %v2826 = vpop.f32.mrb[0].mxu0
      %v2827 = vpop.f32.mrb[0].mxu0
      %v2828 = vadd.f32 %v2766, %v2827
      %v2829 = vpop.f32.mrb[0].mxu0
      %2830 = vdwg.mxu0
      %v2831 = vpack.c.bf16 %v2668, %v2665
      %v2832 = vpack.c.bf16 %v2676, %v2673
      %v2833 = vpack.c.bf16 %v2744, %v2741
      %v2834 = vpack.c.bf16 %v2752, %v2749
      %v2836 = vsel %vm1114, %v2831, 0
      %v2839 = vsel %vm1114, %v2832, 0
      %v2842 = vsel %vm1114, %v2833, 0
      %v2845 = vsel %vm1114, %v2834, 0
      %2847 = vmatprep.subr.bf16.mxu0 0
      %2848 = vmatpush1.bf16.xpose.msra.mxu0 %v2842
      %2849 = vmatprep.subr.bf16.mxu0 0
      %2850 = vmatpush1.bf16.xpose.msra.mxu0 %v2845
      %2851 = vmatprep.subr.bf16.mxu0 0
      %2852 = vmatpush1.bf16.xpose.msra.mxu0 0
      %2853 = vmatprep.subr.bf16.mxu0 0
      %2854 = vmatpush1.bf16.xpose.msra.mxu0 0
      %2855 = vmatprep.subr.bf16.mxu0 0
      %2856 = vmatpush1.bf16.xpose.msra.mxu0 0
      %2857 = vmatprep.subr.bf16.mxu0 0
      %2858 = vmatpush1.bf16.xpose.msra.mxu0 0
      %2859 = vmatprep.subr.bf16.mxu0 0
      %2860 = vmatpush1.bf16.xpose.msra.mxu0 0
      %2861 = vmatprep.subr.bf16.mxu0 0
      %2862 = vmatpush1.bf16.xpose.msra.mxu0 0
      %2863 = vmatprep.subr.bf16.mxu0 0
      %2864 = vmatpush1.bf16.xpose.msra.mxu0 0
      %2865 = vmatprep.subr.bf16.mxu0 0
      %2866 = vmatpush1.bf16.xpose.msra.mxu0 0
      %2867 = vmatprep.subr.bf16.mxu0 0
      %2868 = vmatpush1.bf16.xpose.msra.mxu0 0
      %2869 = vmatprep.subr.bf16.mxu0 0
      %2870 = vmatpush1.bf16.xpose.msra.mxu0 0
      %2871 = vmatprep.subr.bf16.mxu0 0
      %2872 = vmatpush1.bf16.xpose.msra.mxu0 0
      %2873 = vmatprep.subr.bf16.mxu0 0
      %2874 = vmatpush1.bf16.xpose.msra.mxu0 0
      %2875 = vmatprep.subr.bf16.mxu0 0
      %2876 = vmatpush1.bf16.xpose.msra.mxu0 0
      %2877 = vmatprep.subr.bf16.mxu0 0
      %2878 = vmatpush1.bf16.xpose.msra.mxu0 0
      %2879 = vmatprep.mubr.bf16.mxu0 0
      %2880 = vmatmul.mubr.bf16.gmra.mrb[0].mxu0 %v2836
      %v2881 = vpop.f32.mrb[0].mxu0
      %v2882 = vadd.f32 0.0, %v2881
      %v2883 = vpop.f32.mrb[0].mxu0
      %v2884 = vpop.f32.mrb[0].mxu0
      %v2885 = vadd.f32 0.0, %v2884
      %v2886 = vpop.f32.mrb[0].mxu0
      %2887 = vmatprep.mubr.bf16.mxu0 0
      %2888 = vmatmul.mubr.bf16.gmra.mrb[0].mxu0 %v2839
      %v2889 = vpop.f32.mrb[0].mxu0
      %v2890 = vadd.f32 0.0, %v2889
      %v2891 = vpop.f32.mrb[0].mxu0
      %v2892 = vpop.f32.mrb[0].mxu0
      %v2893 = vadd.f32 0.0, %v2892
      %v2894 = vpop.f32.mrb[0].mxu0
      %2895 = vdwg.mxu0
      %v2896 = vmul.f32 %v2882, 0.2581989
      %v2897 = vmul.f32 %v2885, 0.2581989
      %v2898 = vmul.f32 %v2890, 0.2581989
      %v2899 = vmul.f32 %v2893, 0.2581989
      %v2900 = vadd.f32 %v2896, %v870
      %v2901 = vadd.f32 %v2897, %v871
      %v2902 = vadd.f32 %v2898, %v872
      %v2903 = vadd.f32 %v2899, %v873
      %v2904 = vsel %vm1184, %v2900, -inf
      %2905 = vmax.xlane.f32.xlu0 %v2904
      %v2906 = vpop.xlane.xlu0 %2905
      %v2907 = vsel %vm1184, %v2901, -inf
      %2908 = vmax.xlane.f32.xlu0 %v2907
      %v2909 = vpop.xlane.xlu0 %2908
      %v2910 = vsel %vm1184, %v2902, -inf
      %2911 = vmax.xlane.f32.xlu0 %v2910
      %v2912 = vpop.xlane.xlu0 %2911
      %v2913 = vsel %vm1184, %v2903, -inf
      %2914 = vmax.xlane.f32.xlu0 %v2913
      %v2915 = vpop.xlane.xlu0 %2914
      %v2916 = vsub.f32 %v2900, %v2906
      %v2917 = vsub.f32 %v2901, %v2909
      %v2918 = vsub.f32 %v2902, %v2912
      %v2919 = vsub.f32 %v2903, %v2915
      %v2920 = vmul.f32 %v2916, 1.442695
      %v2921 = vpow.pop %v2920
      %v2922 = vmul.f32 %v2917, 1.442695
      %v2923 = vpow.pop %v2922
      %v2924 = vmul.f32 %v2918, 1.442695
      %v2925 = vpow.pop %v2924
      %v2926 = vmul.f32 %v2919, 1.442695
      %v2927 = vpow.pop %v2926
      %v2928 = vsel %vm1184, %v2921, 0.0
      %2929 = vadd.xlane.f32.xlu0 %v2928
      %v2930 = vpop.xlane.xlu0 %2929
      %v2931 = vsel %vm1184, %v2923, 0.0
      %2932 = vadd.xlane.f32.xlu0 %v2931
      %v2933 = vpop.xlane.xlu0 %2932
      %v2934 = vsel %vm1184, %v2925, 0.0
      %2935 = vadd.xlane.f32.xlu0 %v2934
      %v2936 = vpop.xlane.xlu0 %2935
      %v2937 = vsel %vm1184, %v2927, 0.0
      %2938 = vadd.xlane.f32.xlu0 %v2937
      %v2939 = vpop.xlane.xlu0 %2938
      %v2940 = vrcp.pop %v2930
      %v2941 = vrcp.pop %v2933
      %v2942 = vrcp.pop %v2936
      %v2943 = vrcp.pop %v2939
      %v2944 = vmul.f32 %v2921, %v2940
      %v2945 = vmul.f32 %v2923, %v2941
      %v2946 = vmul.f32 %v2925, %v2942
      %v2947 = vmul.f32 %v2927, %v2943
      %v2948 = vpack.c.bf16 %v2945, %v2944
      %v2949 = vpack.c.bf16 %v2947, %v2946
      %v2950 = vpack.c.bf16 %v2820, %v2817
      %v2951 = vpack.c.bf16 %v2828, %v2825
      %v2953 = vsel %vm1184, %v2948, 0
      %v2956 = vsel %vm1184, %v2949, 0
      %2958 = vmatprep.subr.bf16.mxu0 0
      %2959 = vmatpush1.bf16.msra.mxu0 %v2950
      %2960 = vmatprep.subr.bf16.mxu0 0
      %2961 = vmatpush1.bf16.msra.mxu0 %v2951
      %2962 = vmatprep.subr.bf16.mxu0 0
      %2963 = vmatpush1.bf16.msra.mxu0 0
      %2964 = vmatprep.subr.bf16.mxu0 0
      %2965 = vmatpush1.bf16.msra.mxu0 0
      %2966 = vmatprep.subr.bf16.mxu0 0
      %2967 = vmatpush1.bf16.msra.mxu0 0
      %2968 = vmatprep.subr.bf16.mxu0 0
      %2969 = vmatpush1.bf16.msra.mxu0 0
      %2970 = vmatprep.subr.bf16.mxu0 0
      %2971 = vmatpush1.bf16.msra.mxu0 0
      %2972 = vmatprep.subr.bf16.mxu0 0
      %2973 = vmatpush1.bf16.msra.mxu0 0
      %2974 = vmatprep.subr.bf16.mxu0 0
      %2975 = vmatpush1.bf16.msra.mxu0 0
      %2976 = vmatprep.subr.bf16.mxu0 0
      %2977 = vmatpush1.bf16.msra.mxu0 0
      %2978 = vmatprep.subr.bf16.mxu0 0
      %2979 = vmatpush1.bf16.msra.mxu0 0
      %2980 = vmatprep.subr.bf16.mxu0 0
      %2981 = vmatpush1.bf16.msra.mxu0 0
      %2982 = vmatprep.subr.bf16.mxu0 0
      %2983 = vmatpush1.bf16.msra.mxu0 0
      %2984 = vmatprep.subr.bf16.mxu0 0
      %2985 = vmatpush1.bf16.msra.mxu0 0
      %2986 = vmatprep.subr.bf16.mxu0 0
      %2987 = vmatpush1.bf16.msra.mxu0 0
      %2988 = vmatprep.subr.bf16.mxu0 0
      %2989 = vmatpush1.bf16.msra.mxu0 0
      %2990 = vmatprep.mubr.bf16.mxu0 0
      %2991 = vmatmul.mubr.bf16.gmra.mrb[0].mxu0 %v2953
      %v2992 = vpop.f32.mrb[0].mxu0
      %v2993 = vadd.f32 0.0, %v2992
      %v2994 = vpop.f32.mrb[0].mxu0
      %v2995 = vpop.f32.mrb[0].mxu0
      %v2996 = vadd.f32 0.0, %v2995
      %v2997 = vpop.f32.mrb[0].mxu0
      %2998 = vmatprep.mubr.bf16.mxu0 0
      %2999 = vmatmul.mubr.bf16.gmra.mrb[0].mxu0 %v2956
      %v3000 = vpop.f32.mrb[0].mxu0
      %v3001 = vadd.f32 0.0, %v3000
      %v3002 = vpop.f32.mrb[0].mxu0
      %v3003 = vpop.f32.mrb[0].mxu0
      %v3004 = vadd.f32 0.0, %v3003
      %v3005 = vpop.f32.mrb[0].mxu0
      %3006 = vdwg.mxu0
      %v3007 = vpack.c.bf16 %v2996, %v2993
      %v3008 = vpack.c.bf16 %v3004, %v3001
      %s3009 = scalar_lea.vmem %s5, 24
      %v3010 = vld [vmem:[%s3009] sm:$0xf]
      %v3011 = vld [vmem:[%s3009 + $0x4] sm:$0xf]
      %v3014 = vunpack.c.l.b16 %v3010
      %v3015 = vunpack.c.l.b16 %v3011
      %v3016 = vpack.c.b16 %v3015, %v3014
      %v3018 = vsel %vm1114, %v3007, 0
      %v3021 = vsel %vm1114, %v3008, 0
      %v3024 = vand.u32 %v3016, %v1714
      %3026 = vmatprep.subr.bf16.mxu0 0
      %3027 = vmatpush1.bf16.msra.mxu0 %v3024
      %3028 = vmatprep.subr.bf16.mxu0 0
      %3029 = vmatpush1.bf16.msra.mxu0 0
      %3030 = vmatprep.subr.bf16.mxu0 0
      %3031 = vmatpush1.bf16.msra.mxu0 0
      %3032 = vmatprep.subr.bf16.mxu0 0
      %3033 = vmatpush1.bf16.msra.mxu0 0
      %3034 = vmatprep.subr.bf16.mxu0 0
      %3035 = vmatpush1.bf16.msra.mxu0 0
      %3036 = vmatprep.subr.bf16.mxu0 0
      %3037 = vmatpush1.bf16.msra.mxu0 0
      %3038 = vmatprep.subr.bf16.mxu0 0
      %3039 = vmatpush1.bf16.msra.mxu0 0
      %3040 = vmatprep.subr.bf16.mxu0 0
      %3041 = vmatpush1.bf16.msra.mxu0 0
      %3042 = vmatprep.subr.bf16.mxu0 0
      %3043 = vmatpush1.bf16.msra.mxu0 0
      %3044 = vmatprep.subr.bf16.mxu0 0
      %3045 = vmatpush1.bf16.msra.mxu0 0
      %3046 = vmatprep.subr.bf16.mxu0 0
      %3047 = vmatpush1.bf16.msra.mxu0 0
      %3048 = vmatprep.subr.bf16.mxu0 0
      %3049 = vmatpush1.bf16.msra.mxu0 0
      %3050 = vmatprep.subr.bf16.mxu0 0
      %3051 = vmatpush1.bf16.msra.mxu0 0
      %3052 = vmatprep.subr.bf16.mxu0 0
      %3053 = vmatpush1.bf16.msra.mxu0 0
      %3054 = vmatprep.subr.bf16.mxu0 0
      %3055 = vmatpush1.bf16.msra.mxu0 0
      %3056 = vmatprep.subr.bf16.mxu0 0
      %3057 = vmatpush1.bf16.msra.mxu0 0
      %3058 = vmatprep.mubr.bf16.mxu0 0
      %3059 = vmatmul.mubr.bf16.gmra.mrb[0].mxu0 %v3018
      %v3060 = vpop.f32.mrb[0].mxu0
      %v3061 = vadd.f32 0.0, %v3060
      %v3062 = vpop.f32.mrb[0].mxu0
      %v3063 = vpop.f32.mrb[0].mxu0
      %v3064 = vadd.f32 0.0, %v3063
      %v3065 = vpop.f32.mrb[0].mxu0
      %3066 = vmatprep.mubr.bf16.mxu0 0
      %3067 = vmatmul.mubr.bf16.gmra.mrb[0].mxu0 %v3021
      %v3068 = vpop.f32.mrb[0].mxu0
      %v3069 = vadd.f32 0.0, %v3068
      %v3070 = vpop.f32.mrb[0].mxu0
      %v3071 = vpop.f32.mrb[0].mxu0
      %v3072 = vadd.f32 0.0, %v3071
      %v3073 = vpop.f32.mrb[0].mxu0
      %3074 = vdwg.mxu0
      %v3077 = vunpack.c.l.b16 %v2601
      %v3078 = vunpack.c.l.b16 %v2602
      %v3079 = vpack.c.b16 %v3078, %v3077
      %v3081 = vsel %vm1114, %v2598, 0
      %v3084 = vsel %vm1114, %v2599, 0
      %v3087 = vand.u32 %v3079, %v1714
      %3089 = vmatprep.subr.bf16.mxu0 0
      %3090 = vmatpush1.bf16.msra.mxu0 %v3087
      %3091 = vmatprep.subr.bf16.mxu0 0
      %3092 = vmatpush1.bf16.msra.mxu0 0
      %3093 = vmatprep.subr.bf16.mxu0 0
      %3094 = vmatpush1.bf16.msra.mxu0 0
      %3095 = vmatprep.subr.bf16.mxu0 0
      %3096 = vmatpush1.bf16.msra.mxu0 0
      %3097 = vmatprep.subr.bf16.mxu0 0
      %3098 = vmatpush1.bf16.msra.mxu0 0
      %3099 = vmatprep.subr.bf16.mxu0 0
      %3100 = vmatpush1.bf16.msra.mxu0 0
      %3101 = vmatprep.subr.bf16.mxu0 0
      %3102 = vmatpush1.bf16.msra.mxu0 0
      %3103 = vmatprep.subr.bf16.mxu0 0
      %3104 = vmatpush1.bf16.msra.mxu0 0
      %3105 = vmatprep.subr.bf16.mxu0 0
      %3106 = vmatpush1.bf16.msra.mxu0 0
      %3107 = vmatprep.subr.bf16.mxu0 0
      %3108 = vmatpush1.bf16.msra.mxu0 0
      %3109 = vmatprep.subr.bf16.mxu0 0
      %3110 = vmatpush1.bf16.msra.mxu0 0
      %3111 = vmatprep.subr.bf16.mxu0 0
      %3112 = vmatpush1.bf16.msra.mxu0 0
      %3113 = vmatprep.subr.bf16.mxu0 0
      %3114 = vmatpush1.bf16.msra.mxu0 0
      %3115 = vmatprep.subr.bf16.mxu0 0
      %3116 = vmatpush1.bf16.msra.mxu0 0
      %3117 = vmatprep.subr.bf16.mxu0 0
      %3118 = vmatpush1.bf16.msra.mxu0 0
      %3119 = vmatprep.subr.bf16.mxu0 0
      %3120 = vmatpush1.bf16.msra.mxu0 0
      %3121 = vmatprep.mubr.bf16.mxu0 0
      %3122 = vmatmul.mubr.bf16.gmra.mrb[0].mxu0 %v3081
      %v3123 = vpop.f32.mrb[0].mxu0
      %v3124 = vadd.f32 %v3061, %v3123
      %v3125 = vpop.f32.mrb[0].mxu0
      %v3126 = vpop.f32.mrb[0].mxu0
      %v3127 = vadd.f32 %v3064, %v3126
      %v3128 = vpop.f32.mrb[0].mxu0
      %3129 = vmatprep.mubr.bf16.mxu0 0
      %3130 = vmatmul.mubr.bf16.gmra.mrb[0].mxu0 %v3084
      %v3131 = vpop.f32.mrb[0].mxu0
      %v3132 = vadd.f32 %v3069, %v3131
      %v3133 = vpop.f32.mrb[0].mxu0
      %v3134 = vpop.f32.mrb[0].mxu0
      %v3135 = vadd.f32 %v3072, %v3134
      %v3136 = vpop.f32.mrb[0].mxu0
      %3137 = vdwg.mxu0
      %s3138 = scalar_lea.vmem %s8, 6
      %v3139 = vld [vmem:[%s3138] sm:$0x1]
      %v3141 = vlaneseq
      %v3142 = vshrl.u32 %v3141, 7
      %v3143 = vsub.s32 0, %v3142
      %v3144 = vrot.slane %v3139, %v3143
      %v3146 = vadd.f32 %v3124, %v3144
      %v3147 = vadd.f32 %v3127, %v3144
      %v3148 = vadd.f32 %v3132, %v3144
      %v3149 = vadd.f32 %v3135, %v3144
      %v3150 = vadd.f32 %v2182, %v3146
      %v3151 = vadd.f32 %v2183, %v3147
      %v3152 = vadd.f32 %v2184, %v3148
      %v3153 = vadd.f32 %v2185, %v3149
      %s3154 = scalar_lea.vmem %s8, 7
      %v3155 = vld [vmem:[%s3154] sm:$0x1]
      %s3156 = scalar_lea.vmem %s8, 8
      %v3157 = vld [vmem:[%s3156] sm:$0x1]
      %v3158 = vsel %vm898, %v3150, 0.0
      %3159 = vadd.xlane.f32.xlu0 %v3158
      %v3160 = vpop.xlane.xlu0 %3159
      %v3161 = vsel %vm898, %v3151, 0.0
      %3162 = vadd.xlane.f32.xlu0 %v3161
      %v3163 = vpop.xlane.xlu0 %3162
      %v3164 = vsel %vm898, %v3152, 0.0
      %3165 = vadd.xlane.f32.xlu0 %v3164
      %v3166 = vpop.xlane.xlu0 %3165
      %v3167 = vsel %vm898, %v3153, 0.0
      %3168 = vadd.xlane.f32.xlu0 %v3167
      %v3169 = vpop.xlane.xlu0 %3168
      %v3170 = vmul.f32 %v3160, %v1861
      %v3171 = vmul.f32 %v3163, %v1861
      %v3172 = vmul.f32 %v3166, %v1861
      %v3173 = vmul.f32 %v3169, %v1861
      %v3174 = vsub.f32 %v3150, %v3170
      %v3175 = vsub.f32 %v3151, %v3171
      %v3176 = vsub.f32 %v3152, %v3172
      %v3177 = vsub.f32 %v3153, %v3173
      %v3178 = vmul.f32 %v3174, %v3174
      %v3179 = vmul.f32 %v3175, %v3175
      %v3180 = vmul.f32 %v3176, %v3176
      %v3181 = vmul.f32 %v3177, %v3177
      %v3182 = vsel %vm898, %v3178, 0.0
      %3183 = vadd.xlane.f32.xlu0 %v3182
      %v3184 = vpop.xlane.xlu0 %3183
      %v3185 = vsel %vm898, %v3179, 0.0
      %3186 = vadd.xlane.f32.xlu0 %v3185
      %v3187 = vpop.xlane.xlu0 %3186
      %v3188 = vsel %vm898, %v3180, 0.0
      %3189 = vadd.xlane.f32.xlu0 %v3188
      %v3190 = vpop.xlane.xlu0 %3189
      %v3191 = vsel %vm898, %v3181, 0.0
      %3192 = vadd.xlane.f32.xlu0 %v3191
      %v3193 = vpop.xlane.xlu0 %3192
      %v3194 = vmul.f32 %v3184, %v1861
      %v3195 = vmul.f32 %v3187, %v1861
      %v3196 = vmul.f32 %v3190, %v1861
      %v3197 = vmul.f32 %v3193, %v1861
      %v3198 = vadd.f32 %v3194, 1e-05
      %v3199 = vadd.f32 %v3195, 1e-05
      %v3200 = vadd.f32 %v3196, 1e-05
      %v3201 = vadd.f32 %v3197, 1e-05
      %v3202 = vrsqrt.pop %v3198
      %v3203 = vrsqrt.pop %v3199
      %v3204 = vrsqrt.pop %v3200
      %v3205 = vrsqrt.pop %v3201
      %v3206 = vmul.f32 %v3174, %v3202
      %v3207 = vmul.f32 %v3175, %v3203
      %v3208 = vmul.f32 %v3176, %v3204
      %v3209 = vmul.f32 %v3177, %v3205
      %v3211 = vlaneseq
      %v3212 = vshrl.u32 %v3211, 7
      %v3213 = vsub.s32 0, %v3212
      %v3214 = vrot.slane %v3155, %v3213
      %v3216 = vmul.f32 %v3206, %v3214
      %v3217 = vmul.f32 %v3207, %v3214
      %v3218 = vmul.f32 %v3208, %v3214
      %v3219 = vmul.f32 %v3209, %v3214
      %v3221 = vlaneseq
      %v3222 = vshrl.u32 %v3221, 7
      %v3223 = vsub.s32 0, %v3222
      %v3224 = vrot.slane %v3157, %v3223
      %v3226 = vadd.f32 %v3216, %v3224
      %v3227 = vadd.f32 %v3217, %v3224
      %v3228 = vadd.f32 %v3218, %v3224
      %v3229 = vadd.f32 %v3219, %v3224
      %v3230 = vpack.c.bf16 %v3227, %v3226
      %v3231 = vpack.c.bf16 %v3229, %v3228
      %s3232 = scalar_lea.vmem %s6, 16
      %v3233 = vld [vmem:[%s3232] sm:$0xf]
      %v3234 = vld [vmem:[%s3232 + $0x4] sm:$0xf]
      %v3235 = vld [vmem:[%s3232 + $0x8] sm:$0xf]
      %v3236 = vld [vmem:[%s3232 + $0xc] sm:$0x7]
      %s3237 = scalar_lea.vmem %s9, 1
      %v3238 = vld [vmem:[%s3237] sm:$0x1]
      %v3240 = vlaneseq
      %v3241 = vshrl.u32 %v3240, 7
      %v3242 = vsub.s32 0, %v3241
      %v3243 = vrot.slane %v3238, %v3242
      %v3249 = vunpack.c.l.b16 %v3233
      %v3250 = vunpack.c.l.b16 %v3234
      %v3251 = vunpack.c.l.b16 %v3235
      %v3252 = vunpack.c.l.b16 %v3236
      %v3253 = vpack.c.b16 %v3250, %v3249
      %v3254 = vpack.c.b16 %v3252, %v3251
      %v3257 = vsel %vm898, %v3230, 0
      %v3260 = vsel %vm898, %v3231, 0
      %v3263 = vsel %vm905, %v3254, 0
      %3265 = vmatprep.subr.bf16.mxu0 0
      %3266 = vmatpush1.bf16.msra.mxu0 %v3253
      %3267 = vmatprep.subr.bf16.mxu0 0
      %3268 = vmatpush1.bf16.msra.mxu0 %v3263
      %3269 = vmatprep.subr.bf16.mxu0 0
      %3270 = vmatpush1.bf16.msra.mxu0 0
      %3271 = vmatprep.subr.bf16.mxu0 0
      %3272 = vmatpush1.bf16.msra.mxu0 0
      %3273 = vmatprep.subr.bf16.mxu0 0
      %3274 = vmatpush1.bf16.msra.mxu0 0
      %3275 = vmatprep.subr.bf16.mxu0 0
      %3276 = vmatpush1.bf16.msra.mxu0 0
      %3277 = vmatprep.subr.bf16.mxu0 0
      %3278 = vmatpush1.bf16.msra.mxu0 0
      %3279 = vmatprep.subr.bf16.mxu0 0
      %3280 = vmatpush1.bf16.msra.mxu0 0
      %3281 = vmatprep.subr.bf16.mxu0 0
      %3282 = vmatpush1.bf16.msra.mxu0 0
      %3283 = vmatprep.subr.bf16.mxu0 0
      %3284 = vmatpush1.bf16.msra.mxu0 0
      %3285 = vmatprep.subr.bf16.mxu0 0
      %3286 = vmatpush1.bf16.msra.mxu0 0
      %3287 = vmatprep.subr.bf16.mxu0 0
      %3288 = vmatpush1.bf16.msra.mxu0 0
      %3289 = vmatprep.subr.bf16.mxu0 0
      %3290 = vmatpush1.bf16.msra.mxu0 0
      %3291 = vmatprep.subr.bf16.mxu0 0
      %3292 = vmatpush1.bf16.msra.mxu0 0
      %3293 = vmatprep.subr.bf16.mxu0 0
      %3294 = vmatpush1.bf16.msra.mxu0 0
      %3295 = vmatprep.subr.bf16.mxu0 0
      %3296 = vmatpush1.bf16.msra.mxu0 0
      %3297 = vmatprep.mubr.bf16.mxu0 0
      %3298 = vmatmul.mubr.bf16.gmra.mrb[0].mxu0 %v3257
      %v3299 = vpop.f32.mrb[0].mxu0
      %v3300 = vadd.f32 %v3243, %v3299
      %v3301 = vpop.f32.mrb[0].mxu0
      %v3302 = vpop.f32.mrb[0].mxu0
      %v3303 = vadd.f32 %v3243, %v3302
      %v3304 = vpop.f32.mrb[0].mxu0
      %3305 = vmatprep.mubr.bf16.mxu0 0
      %3306 = vmatmul.mubr.bf16.gmra.mrb[0].mxu0 %v3260
      %v3307 = vpop.f32.mrb[0].mxu0
      %v3308 = vadd.f32 %v3243, %v3307
      %v3309 = vpop.f32.mrb[0].mxu0
      %v3310 = vpop.f32.mrb[0].mxu0
      %v3311 = vadd.f32 %v3243, %v3310
      %v3312 = vpop.f32.mrb[0].mxu0
      %3313 = vdwg.mxu0
      %v3314 = vmax.f32 %v3300, 0.0
      %v3315 = vmax.f32 %v3303, 0.0
      %v3316 = vmax.f32 %v3308, 0.0
      %v3317 = vmax.f32 %v3311, 0.0
      %v3318 = vpack.c.bf16 %v3315, %v3314
      %v3319 = vpack.c.bf16 %v3317, %v3316
      %s3320 = scalar_lea.vmem %s7, 32
      %v3321 = vld [vmem:[%s3320] sm:$0xf]
      %v3322 = vld [vmem:[%s3320 + $0x4] sm:$0xf]
      %v3323 = vld [vmem:[%s3320 + $0x8] sm:$0xf]
      %v3324 = vld [vmem:[%s3320 + $0xc] sm:$0xf]
      %v3325 = vld [vmem:[%s3320 + $0x10] sm:$0xf]
      %v3326 = vld [vmem:[%s3320 + $0x14] sm:$0xf]
      %v3327 = vld [vmem:[%s3320 + $0x18] sm:$0xf]
      %v3328 = vld [vmem:[%s3320 + $0x1c] sm:$0xf]
      %s3329 = scalar_lea.vmem %s8, 11
      %v3330 = vld [vmem:[%s3329] sm:$0x1]
      %v3332 = vlaneseq
      %v3333 = vshrl.u32 %v3332, 7
      %v3334 = vsub.s32 0, %v3333
      %v3335 = vrot.slane %v3330, %v3334
      %v3345 = vunpack.c.l.b16 %v3321
      %v3346 = vunpack.c.l.b16 %v3322
      %v3347 = vunpack.c.l.b16 %v3323
      %v3348 = vunpack.c.l.b16 %v3324
      %v3349 = vunpack.c.l.b16 %v3325
      %v3350 = vunpack.c.l.b16 %v3326
      %v3351 = vunpack.c.l.b16 %v3327
      %v3352 = vunpack.c.l.b16 %v3328
      %v3353 = vpack.c.b16 %v3346, %v3345
      %v3354 = vpack.c.b16 %v3348, %v3347
      %v3355 = vpack.c.b16 %v3350, %v3349
      %v3356 = vpack.c.b16 %v3352, %v3351
      %v3362 = vsel %vm2050, %v3318, 0
      %v3365 = vsel %vm2050, %v3319, 0
      %3367 = vmatprep.subr.bf16.mxu0 0
      %3368 = vmatpush1.bf16.msra.mxu0 %v3353
      %3369 = vmatprep.subr.bf16.mxu0 0
      %3370 = vmatpush1.bf16.msra.mxu0 %v3354
      %3371 = vmatprep.subr.bf16.mxu0 0
      %3372 = vmatpush1.bf16.msra.mxu0 %v3355
      %3373 = vmatprep.subr.bf16.mxu0 0
      %3374 = vmatpush1.bf16.msra.mxu0 %v3356
      %3375 = vmatprep.subr.bf16.mxu0 0
      %3376 = vmatpush1.bf16.msra.mxu0 0
      %3377 = vmatprep.subr.bf16.mxu0 0
      %3378 = vmatpush1.bf16.msra.mxu0 0
      %3379 = vmatprep.subr.bf16.mxu0 0
      %3380 = vmatpush1.bf16.msra.mxu0 0
      %3381 = vmatprep.subr.bf16.mxu0 0
      %3382 = vmatpush1.bf16.msra.mxu0 0
      %3383 = vmatprep.subr.bf16.mxu0 0
      %3384 = vmatpush1.bf16.msra.mxu0 0
      %3385 = vmatprep.subr.bf16.mxu0 0
      %3386 = vmatpush1.bf16.msra.mxu0 0
      %3387 = vmatprep.subr.bf16.mxu0 0
      %3388 = vmatpush1.bf16.msra.mxu0 0
      %3389 = vmatprep.subr.bf16.mxu0 0
      %3390 = vmatpush1.bf16.msra.mxu0 0
      %3391 = vmatprep.subr.bf16.mxu0 0
      %3392 = vmatpush1.bf16.msra.mxu0 0
      %3393 = vmatprep.subr.bf16.mxu0 0
      %3394 = vmatpush1.bf16.msra.mxu0 0
      %3395 = vmatprep.subr.bf16.mxu0 0
      %3396 = vmatpush1.bf16.msra.mxu0 0
      %3397 = vmatprep.subr.bf16.mxu0 0
      %3398 = vmatpush1.bf16.msra.mxu0 0
      %3399 = vmatprep.mubr.bf16.mxu0 0
      %3400 = vmatmul.mubr.bf16.gmra.mrb[0].mxu0 %v3362
      %v3401 = vpop.f32.mrb[0].mxu0
      %v3402 = vadd.f32 %v3335, %v3401
      %v3403 = vpop.f32.mrb[0].mxu0
      %v3404 = vpop.f32.mrb[0].mxu0
      %v3405 = vadd.f32 %v3335, %v3404
      %v3406 = vpop.f32.mrb[0].mxu0
      %3407 = vmatprep.mubr.bf16.mxu0 0
      %3408 = vmatmul.mubr.bf16.gmra.mrb[0].mxu0 %v3365
      %v3409 = vpop.f32.mrb[0].mxu0
      %v3410 = vadd.f32 %v3335, %v3409
      %v3411 = vpop.f32.mrb[0].mxu0
      %v3412 = vpop.f32.mrb[0].mxu0
      %v3413 = vadd.f32 %v3335, %v3412
      %v3414 = vpop.f32.mrb[0].mxu0
      %3415 = vdwg.mxu0
      %v3416 = vadd.f32 %v3226, %v3402
      %v3417 = vadd.f32 %v3227, %v3405
      %v3418 = vadd.f32 %v3228, %v3410
      %v3419 = vadd.f32 %v3229, %v3413
      %s3420 = scalar_lea.vmem %s8, 9
      %v3421 = vld [vmem:[%s3420] sm:$0x1]
      %s3422 = scalar_lea.vmem %s8, 10
      %v3423 = vld [vmem:[%s3422] sm:$0x1]
      %v3424 = vsel %vm898, %v3416, 0.0
      %3425 = vadd.xlane.f32.xlu0 %v3424
      %v3426 = vpop.xlane.xlu0 %3425
      %v3427 = vsel %vm898, %v3417, 0.0
      %3428 = vadd.xlane.f32.xlu0 %v3427
      %v3429 = vpop.xlane.xlu0 %3428
      %v3430 = vsel %vm898, %v3418, 0.0
      %3431 = vadd.xlane.f32.xlu0 %v3430
      %v3432 = vpop.xlane.xlu0 %3431
      %v3433 = vsel %vm898, %v3419, 0.0
      %3434 = vadd.xlane.f32.xlu0 %v3433
      %v3435 = vpop.xlane.xlu0 %3434
      %v3436 = vmul.f32 %v3426, %v1861
      %v3437 = vmul.f32 %v3429, %v1861
      %v3438 = vmul.f32 %v3432, %v1861
      %v3439 = vmul.f32 %v3435, %v1861
      %v3440 = vsub.f32 %v3416, %v3436
      %v3441 = vsub.f32 %v3417, %v3437
      %v3442 = vsub.f32 %v3418, %v3438
      %v3443 = vsub.f32 %v3419, %v3439
      %v3444 = vmul.f32 %v3440, %v3440
      %v3445 = vmul.f32 %v3441, %v3441
      %v3446 = vmul.f32 %v3442, %v3442
      %v3447 = vmul.f32 %v3443, %v3443
      %v3448 = vsel %vm898, %v3444, 0.0
      %3449 = vadd.xlane.f32.xlu0 %v3448
      %v3450 = vpop.xlane.xlu0 %3449
      %v3451 = vsel %vm898, %v3445, 0.0
      %3452 = vadd.xlane.f32.xlu0 %v3451
      %v3453 = vpop.xlane.xlu0 %3452
      %v3454 = vsel %vm898, %v3446, 0.0
      %3455 = vadd.xlane.f32.xlu0 %v3454
      %v3456 = vpop.xlane.xlu0 %3455
      %v3457 = vsel %vm898, %v3447, 0.0
      %3458 = vadd.xlane.f32.xlu0 %v3457
      %v3459 = vpop.xlane.xlu0 %3458
      %v3460 = vmul.f32 %v3450, %v1861
      %v3461 = vmul.f32 %v3453, %v1861
      %v3462 = vmul.f32 %v3456, %v1861
      %v3463 = vmul.f32 %v3459, %v1861
      %v3464 = vadd.f32 %v3460, 1e-05
      %v3465 = vadd.f32 %v3461, 1e-05
      %v3466 = vadd.f32 %v3462, 1e-05
      %v3467 = vadd.f32 %v3463, 1e-05
      %v3468 = vrsqrt.pop %v3464
      %v3469 = vrsqrt.pop %v3465
      %v3470 = vrsqrt.pop %v3466
      %v3471 = vrsqrt.pop %v3467
      %v3472 = vmul.f32 %v3440, %v3468
      %v3473 = vmul.f32 %v3441, %v3469
      %v3474 = vmul.f32 %v3442, %v3470
      %v3475 = vmul.f32 %v3443, %v3471
      %v3477 = vlaneseq
      %v3478 = vshrl.u32 %v3477, 7
      %v3479 = vsub.s32 0, %v3478
      %v3480 = vrot.slane %v3421, %v3479
      %v3482 = vmul.f32 %v3472, %v3480
      %v3483 = vmul.f32 %v3473, %v3480
      %v3484 = vmul.f32 %v3474, %v3480
      %v3485 = vmul.f32 %v3475, %v3480
      %v3487 = vlaneseq
      %v3488 = vshrl.u32 %v3487, 7
      %v3489 = vsub.s32 0, %v3488
      %v3490 = vrot.slane %v3423, %v3489
      %v3492 = vadd.f32 %v3482, %v3490
      %v3493 = vadd.f32 %v3483, %v3490
      %v3494 = vadd.f32 %v3484, %v3490
      %v3495 = vadd.f32 %v3485, %v3490
      %v3496 = vpack.c.bf16 %v3493, %v3492
      %v3497 = vpack.c.bf16 %v3495, %v3494
      %v3498 = vld [vmem:[%s11] sm:$0xf]
      %v3499 = vld [vmem:[%s11 + $0x4] sm:$0xf]
      %v3500 = vld [vmem:[%s11 + $0x8] sm:$0xf]
      %v3501 = vld [vmem:[%s11 + $0xc] sm:$0x7]
      %v3506 = vunpack.c.l.b16 %v3498
      %v3507 = vunpack.c.l.b16 %v3499
      %v3508 = vunpack.c.l.b16 %v3500
      %v3509 = vunpack.c.l.b16 %v3501
      %v3510 = vpack.c.b16 %v3507, %v3506
      %v3511 = vpack.c.b16 %v3509, %v3508
      %v3514 = vsel %vm898, %v3496, 0
      %v3517 = vsel %vm898, %v3497, 0
      %v3520 = vsel %vm905, %v3511, 0
      %3522 = vmatprep.subr.bf16.mxu0 0
      %3523 = vmatpush1.bf16.msra.mxu0 %v3510
      %3524 = vmatprep.subr.bf16.mxu0 0
      %3525 = vmatpush1.bf16.msra.mxu0 %v3520
      %3526 = vmatprep.subr.bf16.mxu0 0
      %3527 = vmatpush1.bf16.msra.mxu0 0
      %3528 = vmatprep.subr.bf16.mxu0 0
      %3529 = vmatpush1.bf16.msra.mxu0 0
      %3530 = vmatprep.subr.bf16.mxu0 0
      %3531 = vmatpush1.bf16.msra.mxu0 0
      %3532 = vmatprep.subr.bf16.mxu0 0
      %3533 = vmatpush1.bf16.msra.mxu0 0
      %3534 = vmatprep.subr.bf16.mxu0 0
      %3535 = vmatpush1.bf16.msra.mxu0 0
      %3536 = vmatprep.subr.bf16.mxu0 0
      %3537 = vmatpush1.bf16.msra.mxu0 0
      %3538 = vmatprep.subr.bf16.mxu0 0
      %3539 = vmatpush1.bf16.msra.mxu0 0
      %3540 = vmatprep.subr.bf16.mxu0 0
      %3541 = vmatpush1.bf16.msra.mxu0 0
      %3542 = vmatprep.subr.bf16.mxu0 0
      %3543 = vmatpush1.bf16.msra.mxu0 0
      %3544 = vmatprep.subr.bf16.mxu0 0
      %3545 = vmatpush1.bf16.msra.mxu0 0
      %3546 = vmatprep.subr.bf16.mxu0 0
      %3547 = vmatpush1.bf16.msra.mxu0 0
      %3548 = vmatprep.subr.bf16.mxu0 0
      %3549 = vmatpush1.bf16.msra.mxu0 0
      %3550 = vmatprep.subr.bf16.mxu0 0
      %3551 = vmatpush1.bf16.msra.mxu0 0
      %3552 = vmatprep.subr.bf16.mxu0 0
      %3553 = vmatpush1.bf16.msra.mxu0 0
      %3554 = vmatprep.mubr.bf16.mxu0 0
      %3555 = vmatmul.mubr.bf16.gmra.mrb[0].mxu0 %v3514
      %v3556 = vpop.f32.mrb[0].mxu0
      %v3557 = vadd.f32 0.0, %v3556
      %v3558 = vpop.f32.mrb[0].mxu0
      %v3559 = vpop.f32.mrb[0].mxu0
      %v3560 = vadd.f32 0.0, %v3559
      %v3561 = vpop.f32.mrb[0].mxu0
      %3562 = vmatprep.mubr.bf16.mxu0 0
      %3563 = vmatmul.mubr.bf16.gmra.mrb[0].mxu0 %v3517
      %v3564 = vpop.f32.mrb[0].mxu0
      %v3565 = vadd.f32 0.0, %v3564
      %v3566 = vpop.f32.mrb[0].mxu0
      %v3567 = vpop.f32.mrb[0].mxu0
      %v3568 = vadd.f32 0.0, %v3567
      %v3569 = vpop.f32.mrb[0].mxu0
      %3570 = vdwg.mxu0
      %v3571 = vld [vmem:[%s12] sm:$0xff]
      %v3572 = vld [vmem:[%s12 + $0x8] sm:$0xff]
      %v3573 = vld [vmem:[%s12 + $0x10] sm:$0xff]
      %v3574 = vld [vmem:[%s12 + $0x18] sm:$0xff]
      %v3575 = vmul.f32 %v3557, %v3571
      %v3576 = vmul.f32 %v3560, %v3572
      %v3577 = vmul.f32 %v3565, %v3573
      %v3578 = vmul.f32 %v3568, %v3574
      %v3579 = vpack.c.bf16 %v3576, %v3575
      %v3580 = vpack.c.bf16 %v3578, %v3577
      %v3581 = vld [vmem:[%s13] sm:$0xf]
      %v3582 = vld [vmem:[%s13 + $0x4] sm:$0xf]
      %v3583 = vld [vmem:[%s13 + $0x8] sm:$0xf]
      %v3587 = vunpack.c.l.b16 %v3581
      %v3588 = vunpack.c.l.b16 %v3582
      %v3589 = vunpack.c.l.b16 %v3583
      %v3590 = vpack.c.b16 %v3588, %v3587
      %v3591 = vpack.c.b16 %v3589, %v3589
      %vm3593 = vcmask 195584
      %v3595 = vsel %vm3593, %v3579, 0
      %v3598 = vsel %vm3593, %v3580, 0
      %v3601 = vsel %vm737, %v3591, 0
      %3603 = vmatprep.subr.bf16.mxu0 0
      %3604 = vmatpush1.bf16.msra.mxu0 %v3590
      %3605 = vmatprep.subr.bf16.mxu0 0
      %3606 = vmatpush1.bf16.msra.mxu0 %v3601
      %3607 = vmatprep.subr.bf16.mxu0 0
      %3608 = vmatpush1.bf16.msra.mxu0 0
      %3609 = vmatprep.subr.bf16.mxu0 0
      %3610 = vmatpush1.bf16.msra.mxu0 0
      %3611 = vmatprep.subr.bf16.mxu0 0
      %3612 = vmatpush1.bf16.msra.mxu0 0
      %3613 = vmatprep.subr.bf16.mxu0 0
      %3614 = vmatpush1.bf16.msra.mxu0 0
      %3615 = vmatprep.subr.bf16.mxu0 0
      %3616 = vmatpush1.bf16.msra.mxu0 0
      %3617 = vmatprep.subr.bf16.mxu0 0
      %3618 = vmatpush1.bf16.msra.mxu0 0
      %3619 = vmatprep.subr.bf16.mxu0 0
      %3620 = vmatpush1.bf16.msra.mxu0 0
      %3621 = vmatprep.subr.bf16.mxu0 0
      %3622 = vmatpush1.bf16.msra.mxu0 0
      %3623 = vmatprep.subr.bf16.mxu0 0
      %3624 = vmatpush1.bf16.msra.mxu0 0
      %3625 = vmatprep.subr.bf16.mxu0 0
      %3626 = vmatpush1.bf16.msra.mxu0 0
      %3627 = vmatprep.subr.bf16.mxu0 0
      %3628 = vmatpush1.bf16.msra.mxu0 0
      %3629 = vmatprep.subr.bf16.mxu0 0
      %3630 = vmatpush1.bf16.msra.mxu0 0
      %3631 = vmatprep.subr.bf16.mxu0 0
      %3632 = vmatpush1.bf16.msra.mxu0 0
      %3633 = vmatprep.subr.bf16.mxu0 0
      %3634 = vmatpush1.bf16.msra.mxu0 0
      %3635 = vmatprep.mubr.bf16.mxu0 0
      %3636 = vmatmul.mubr.bf16.gmra.mrb[0].mxu0 %v3595
      %v3637 = vpop.f32.mrb[0].mxu0
      %v3638 = vadd.f32 0.0, %v3637
      %v3639 = vpop.f32.mrb[0].mxu0
      %v3640 = vpop.f32.mrb[0].mxu0
      %v3641 = vadd.f32 0.0, %v3640
      %v3642 = vpop.f32.mrb[0].mxu0
      %3643 = vmatprep.mubr.bf16.mxu0 0
      %3644 = vmatmul.mubr.bf16.gmra.mrb[0].mxu0 %v3598
      %v3645 = vpop.f32.mrb[0].mxu0
      %v3646 = vadd.f32 0.0, %v3645
      %v3647 = vpop.f32.mrb[0].mxu0
      %v3648 = vpop.f32.mrb[0].mxu0
      %v3649 = vadd.f32 0.0, %v3648
      %v3650 = vpop.f32.mrb[0].mxu0
      %3651 = vdwg.mxu0
      %v3652 = vld [vmem:[%s14] sm:$0x3]
      %v3653 = vpack.c.bf16 %v3641, %v3638
      %v3654 = vpack.c.bf16 %v3649, %v3646
      %v3655 = vld [vmem:[%s15] sm:$0x1]
      %v3657 = vlaneseq
      %v3658 = vshrl.u32 %v3657, 7
      %v3659 = vsub.s32 0, %v3658
      %v3660 = vrot.slane %v3655, %v3659
      %v3663 = vsel %vm1184, %v3652, 0
      %3665 = vmatprep.subr.bf16.mxu0 0
      %3666 = vmatpush1.bf16.msra.mxu0 %v3653
      %3667 = vmatprep.subr.bf16.mxu0 0
      %3668 = vmatpush1.bf16.msra.mxu0 %v3654
      %3669 = vmatprep.subr.bf16.mxu0 0
      %3670 = vmatpush1.bf16.msra.mxu0 0
      %3671 = vmatprep.subr.bf16.mxu0 0
      %3672 = vmatpush1.bf16.msra.mxu0 0
      %3673 = vmatprep.subr.bf16.mxu0 0
      %3674 = vmatpush1.bf16.msra.mxu0 0
      %3675 = vmatprep.subr.bf16.mxu0 0
      %3676 = vmatpush1.bf16.msra.mxu0 0
      %3677 = vmatprep.subr.bf16.mxu0 0
      %3678 = vmatpush1.bf16.msra.mxu0 0
      %3679 = vmatprep.subr.bf16.mxu0 0
      %3680 = vmatpush1.bf16.msra.mxu0 0
      %3681 = vmatprep.subr.bf16.mxu0 0
      %3682 = vmatpush1.bf16.msra.mxu0 0
      %3683 = vmatprep.subr.bf16.mxu0 0
      %3684 = vmatpush1.bf16.msra.mxu0 0
      %3685 = vmatprep.subr.bf16.mxu0 0
      %3686 = vmatpush1.bf16.msra.mxu0 0
      %3687 = vmatprep.subr.bf16.mxu0 0
      %3688 = vmatpush1.bf16.msra.mxu0 0
      %3689 = vmatprep.subr.bf16.mxu0 0
      %3690 = vmatpush1.bf16.msra.mxu0 0
      %3691 = vmatprep.subr.bf16.mxu0 0
      %3692 = vmatpush1.bf16.msra.mxu0 0
      %3693 = vmatprep.subr.bf16.mxu0 0
      %3694 = vmatpush1.bf16.msra.mxu0 0
      %3695 = vmatprep.subr.bf16.mxu0 0
      %3696 = vmatpush1.bf16.msra.mxu0 0
      %3697 = vmatprep.mubr.bf16.mxu0 0
      %3698 = vmatmul.mubr.bf16.gmra.mrb[0].mxu0 %v3663
      %v3699 = vpop.f32.mrb[0].mxu0
      %v3700 = vadd.f32 %v3660, %v3699
      %v3701 = vpop.f32.mrb[0].mxu0
      %v3702 = vpop.f32.mrb[0].mxu0
      %v3703 = vpop.f32.mrb[0].mxu0
      %3704 = vdwg.mxu0
      %vm3705 = vcmask 19456
      %3706 = vst.msk [vmem:[%s519] sm:$0xf] %vm3705, %v3700
      %p3707 = scmp.lt.s32.totalorder %s27, 1
      %s3708 = scalar_select %p3707, %s27, 1
      %s3709 = smul.addr %s3708, 4
      %s3710 = scalar_lea.vmem %s16, %s3709
      // Predicated region
      $region85: #{_lambda_.1} parent=83 // pred_check
        %p3711 = pneg %p386
      $region86: #{_lambda_.1} parent=83 // pred_check_branch
        %3713 = sbr.rel (%p3711) target = $region88
      $region87: #{_lambda_.1} parent=83 // pred_region
        _
      $region88: #{_lambda_.1} parent=83 // pred_fallthru
        _
    $region84: #{_lambda_.1} parent=5 // pred_fallthru
      _
    %p3714 = scmp.le.s32.totalorder 2, %s22
    // Predicated region
    $region89: #{_lambda_.1} parent=5 // pred_check
      %p3715 = pneg %p3714
    $region90: #{_lambda_.1} parent=5 // pred_check_branch
      %3717 = sbr.rel (%p3715) target = $region92
    $region91: #{_lambda_.1} parent=5 // pred_region
      %s3718 = ssub.s32 %s22, 2
      // Predicated region
      $region93: #{_lambda_.1} parent=91 // pred_check
        %p3719 = pneg %p392
      $region94: #{_lambda_.1} parent=91 // pred_check_branch
        %3721 = sbr.rel (%p3719) target = $region96
      $region95: #{_lambda_.1} parent=91 // pred_region
        %p3722 = scmp.lt.s32.totalorder %s28, 1
        %s3723 = scalar_select %p3722, %s28, 1
        %s3724 = smul.addr %s3723, 4
        %s3725 = scalar_lea.vmem %s16, %s3724
      $region96: #{_lambda_.1} parent=91 // pred_fallthru
        _
    $region92: #{_lambda_.1} parent=5 // pred_fallthru
      _
  $region6: #{_lambda_.1} parent=0 // loop_footer
    %s26 = sadd.s32 1, %s22
  $region7: #{_lambda_.1} parent=0 // loop_footer_branch
    %21 = sbr.rel target = $region3
  $region8: #{_lambda_.1} parent=0 // loop_exit
    _

</llo_original>
